<compile_context>
chip_gen: v5e
topology: v5e:2x2
jax: 0.10.0
libtpu: 0.0.40
codegen_flags: <defaults>
</compile_context>

<pallas_src>
import math
from functools import partial

import jax
import jax.numpy as jnp
from jax.experimental import pallas as pl
from jax.experimental.pallas import tpu as pltpu

EPS = 1e-6
_HALF_LOG_2PI = 0.5 * math.log(2.0 * math.pi)

# bf16 operands for the large MXU matmuls (input projection + readout),
# accumulated in f32.  Set to jnp.float32 for bit-faithful f32 math.
MXU_DTYPE = jnp.bfloat16


def _pick_chunk(T):
    """Time-chunk per grid step.  chunk==T always satisfies the BlockSpec
    divisibility rule; otherwise the chunk must be a multiple of 8 dividing T."""
    for c in (32, 16, 8):
        if T % c == 0:
            return c
    return T


# ----------------------------------------------------------------------------
# Bidirectional GRU kernel.  Grid iterates over time chunks; forward direction
# reads chunk c, backward direction reads chunk (nc-1-c).  Hidden states live
# in VMEM scratch and persist across grid steps (grid axis is "arbitrary",
# i.e. a sequential loop on one TensorCore).
# ----------------------------------------------------------------------------
def _bigru_kernel(chunk, dh, mxu_dtype,
                  xf_ref, xb_ref,
                  wif_ref, whf_ref, bif_ref, bhnf_ref,
                  wib_ref, whb_ref, bib_ref, bhnb_ref,
                  hf_out_ref, hb_out_ref,
                  hf_st, hb_st):
    c = pl.program_id(0)

    @pl.when(c == 0)
    def _init():
        hf_st[...] = jnp.zeros_like(hf_st)
        hb_st[...] = jnp.zeros_like(hb_st)

    B = hf_st.shape[0]
    dy = xf_ref.shape[-1]

    # Hoisted input projection: one fused matmul per direction per chunk.
    # bif/bib already contain (b_ir + b_hr | b_iz + b_hz | b_in).
    xf2 = xf_ref[...].reshape(B * chunk, dy).astype(mxu_dtype)
    xb2 = xb_ref[...].reshape(B * chunk, dy).astype(mxu_dtype)
    gif = (jnp.dot(xf2, wif_ref[...],
                   preferred_element_type=jnp.float32)
           + bif_ref[...]).reshape(B, chunk, 3 * dh)
    gib = (jnp.dot(xb2, wib_ref[...],
                   preferred_element_type=jnp.float32)
           + bib_ref[...]).reshape(B, chunk, 3 * dh)

    whf = whf_ref[...]
    whb = whb_ref[...]
    bhnf = bhnf_ref[...]
    bhnb = bhnb_ref[...]

    hf = hf_st[...]
    hb = hb_st[...]

    def cell(gi, h, wh, bhn):
        # Single fused hidden matmul (r|z|n columns), f32 for recurrence
        # stability.  PyTorch gate order r, z, n.
        gh = jnp.dot(h, wh, preferred_element_type=jnp.float32)
        r = jax.nn.sigmoid(gi[:, :dh] + gh[:, :dh])
        z = jax.nn.sigmoid(gi[:, dh:2 * dh] + gh[:, dh:2 * dh])
        n = jnp.tanh(gi[:, 2 * dh:] + r * (gh[:, 2 * dh:] + bhn))
        return (1.0 - z) * n + z * h

    # Statically unrolled time loop inside the chunk; both directions per step
    # (independent dependency chains -> LLO can interleave them).
    for i in range(chunk):
        j = chunk - 1 - i
        hf = cell(gif[:, i, :], hf, whf, bhnf)
        hb = cell(gib[:, j, :], hb, whb, bhnb)
        hf_out_ref[:, i, :] = hf
        hb_out_ref[:, j, :] = hb

    hf_st[...] = hf
    hb_st[...] = hb


def bigru(x, params, chunk):
    """x: (B, T, dy) -> (h_fwd, h_bwd), each (B, T, dh)."""
    B, T, dy = x.shape
    dh = params["wh_f"].shape[0]
    nc = T // chunk

    hf, hb = pl.pallas_call(
        partial(_bigru_kernel, chunk, dh, MXU_DTYPE),
        out_shape=(jax.ShapeDtypeStruct((B, T, dh), jnp.float32),
                   jax.ShapeDtypeStruct((B, T, dh), jnp.float32)),
        grid=(nc,),
        in_specs=[
            pl.BlockSpec((B, chunk, dy), lambda c: (0, c, 0)),
            pl.BlockSpec((B, chunk, dy), lambda c: (0, nc - 1 - c, 0)),
            pl.BlockSpec((dy, 3 * dh), lambda c: (0, 0)),
            pl.BlockSpec((dh, 3 * dh), lambda c: (0, 0)),
            pl.BlockSpec((1, 3 * dh), lambda c: (0, 0)),
            pl.BlockSpec((1, dh), lambda c: (0, 0)),
            pl.BlockSpec((dy, 3 * dh), lambda c: (0, 0)),
            pl.BlockSpec((dh, 3 * dh), lambda c: (0, 0)),
            pl.BlockSpec((1, 3 * dh), lambda c: (0, 0)),
            pl.BlockSpec((1, dh), lambda c: (0, 0)),
        ],
        out_specs=(pl.BlockSpec((B, chunk, dh), lambda c: (0, c, 0)),
                   pl.BlockSpec((B, chunk, dh), lambda c: (0, nc - 1 - c, 0))),
        scratch_shapes=[pltpu.VMEM((B, dh), jnp.float32),
                        pltpu.VMEM((B, dh), jnp.float32)],
        compiler_params=pltpu.CompilerParams(
            dimension_semantics=("arbitrary",)),
    )(x, x,
      params["wi_f"], params["wh_f"], params["bi_f"], params["bhn_f"],
      params["wi_b"], params["wh_b"], params["bi_b"], params["bhn_b"])
    return hf, hb


# ----------------------------------------------------------------------------
# Head kernel: fused readout (mu | pre-softplus) on hf/hb (no concat), softplus
# + eps, reparameterized sample, Normal log-prob accumulated per batch element
# across time chunks (output block resident in VMEM across the grid).
# ----------------------------------------------------------------------------
def _head_kernel(chunk, dx, mxu_dtype,
                 hf_ref, hb_ref, wf_ref, wb_ref, b_ref, noise_ref,
                 samp_ref, mu_ref, var_ref, lp_ref):
    c = pl.program_id(0)
    B = hf_ref.shape[0]
    dh = hf_ref.shape[-1]

    hf2 = hf_ref[...].reshape(B * chunk, dh).astype(mxu_dtype)
    hb2 = hb_ref[...].reshape(B * chunk, dh).astype(mxu_dtype)
    out = (jnp.dot(hf2, wf_ref[...], preferred_element_type=jnp.float32)
           + jnp.dot(hb2, wb_ref[...], preferred_element_type=jnp.float32)
           + b_ref[...])                                   # (B*chunk, 2*dx)

    mu = out[:, :dx]
    pre = out[:, dx:]
    # torch.nn.Softplus (beta=1, threshold=20), then + eps
    sp = jnp.where(pre > 20.0, pre,
                   jnp.log1p(jnp.exp(jnp.minimum(pre, 20.0))))
    var = sp + EPS
    std = jnp.sqrt(var)
    noise = noise_ref[...].reshape(B * chunk, dx)
    samples = mu + std * noise
    # Normal(mu, std).log_prob(samples) with (samples-mu)/std == noise.
    logp = -0.5 * noise * noise - 0.5 * jnp.log(var) - _HALF_LOG_2PI

    samp_ref[...] = samples.reshape(B, chunk, dx)
    mu_ref[...] = mu.reshape(B, chunk, dx)
    var_ref[...] = var.reshape(B, chunk, dx)

    @pl.when(c == 0)
    def _init():
        lp_ref[...] = jnp.zeros_like(lp_ref)

    lp_ref[...] += jnp.sum(logp.reshape(B, chunk, dx), axis=(1, 2)).reshape(1, B)


def head(hf, hb, params, noise, chunk):
    B, T, dh = hf.shape
    dx = params["w_ro_f"].shape[-1] // 2
    nc = T // chunk

    samples, mu, var, lp = pl.pallas_call(
        partial(_head_kernel, chunk, dx, MXU_DTYPE),
        out_shape=(jax.ShapeDtypeStruct((B, T, dx), jnp.float32),
                   jax.ShapeDtypeStruct((B, T, dx), jnp.float32),
                   jax.ShapeDtypeStruct((B, T, dx), jnp.float32),
                   jax.ShapeDtypeStruct((1, B), jnp.float32)),
        grid=(nc,),
        in_specs=[
            pl.BlockSpec((B, chunk, dh), lambda c: (0, c, 0)),
            pl.BlockSpec((B, chunk, dh), lambda c: (0, c, 0)),
            pl.BlockSpec((dh, 2 * dx), lambda c: (0, 0)),
            pl.BlockSpec((dh, 2 * dx), lambda c: (0, 0)),
            pl.BlockSpec((1, 2 * dx), lambda c: (0, 0)),
            pl.BlockSpec((B, chunk, dx), lambda c: (0, c, 0)),
        ],
        out_specs=(pl.BlockSpec((B, chunk, dx), lambda c: (0, c, 0)),
                   pl.BlockSpec((B, chunk, dx), lambda c: (0, c, 0)),
                   pl.BlockSpec((B, chunk, dx), lambda c: (0, c, 0)),
                   pl.BlockSpec((1, B), lambda c: (0, 0))),
        compiler_params=pltpu.CompilerParams(
            dimension_semantics=("arbitrary",)),
    )(hf, hb, params["w_ro_f"], params["w_ro_b"], params["b_ro"], noise)
    return samples, mu, var, lp[0]


# ----------------------------------------------------------------------------
# Encoder forward (n_samples = 1, squeezed, matching the PyTorch module)
# ----------------------------------------------------------------------------
def encoder_forward(params, x, noise_key, chunk=None):
    B, T, dy = x.shape
    dx = params["w_ro_f"].shape[-1] // 2
    if chunk is None:
        chunk = _pick_chunk(T)
    hf, hb = bigru(x.astype(jnp.float32), params, chunk)
    # TODO(synk): could use pltpu.prng_seed + stateful_normal in-kernel; host
    # noise kept for a single, well-defined RNG stream.
    noise = jax.random.normal(noise_key, (B, T, dx), jnp.float32)
    samples, mu, var, log_prob = head(hf, hb, params, noise, chunk)
    return samples, mu, var, log_prob            # (B,T,dx) x3, (B,)


def init_params(key, dy, dx, dh):
    """PyTorch-style init, repacked into fused (r|z|n) / (mu|logvar) layouts."""
    ks = jax.random.split(key, 10)

    def u(k, shape, scale):
        return jax.random.uniform(k, shape, jnp.float32, -scale, scale)

    s = 1.0 / math.sqrt(dh)
    s2 = 1.0 / math.sqrt(2 * dh)

    def gru_dir(kw_i, kw_h, kb_i, kb_h):
        wi = u(kw_i, (dy, 3 * dh), s)            # columns: r | z | n
        wh = u(kw_h, (dh, 3 * dh), s)
        b_ih = u(kb_i, (3 * dh,), s)
        b_hh = u(kb_h, (3 * dh,), s)
        # pre-sum r/z biases; keep n input bias; b_hn separate (gated by r)
        bi = jnp.concatenate([b_ih[:2 * dh] + b_hh[:2 * dh],
                              b_ih[2 * dh:]]).reshape(1, 3 * dh)
        bhn = b_hh[2 * dh:].reshape(1, dh)
        # input-projection weights go through the MXU in bf16: store them in
        # MXU_DTYPE once (halves HBM traffic, no per-step in-kernel cast);
        # recurrent weights stay f32.
        return wi.astype(MXU_DTYPE), wh, bi, bhn

    wi_f, wh_f, bi_f, bhn_f = gru_dir(ks[0], ks[1], ks[2], ks[3])
    wi_b, wh_b, bi_b, bhn_b = gru_dir(ks[4], ks[5], ks[6], ks[7])

    # readout Linear(2*dh -> 2*dx): fused (mu | logvar) columns, split by
    # forward/backward hidden halves so no concatenated hidden is needed.
    w_ro = u(ks[8], (2 * dh, 2 * dx), s2)
    b_ro = u(ks[9], (1, 2 * dx), s2)

    return dict(
        wi_f=wi_f, wh_f=wh_f, bi_f=bi_f, bhn_f=bhn_f,
        wi_b=wi_b, wh_b=wh_b, bi_b=bi_b, bhn_b=bhn_b,
        w_ro_f=w_ro[:dh].astype(MXU_DTYPE),
        w_ro_b=w_ro[dh:].astype(MXU_DTYPE),
        b_ro=b_ro,
    )


if __name__ == "__main__":
    B, T, dy, dx, dh = 2, 8, 6, 4, 16
    key = jax.random.PRNGKey(0)
    k_param, k_x, k_noise = jax.random.split(key, 3)

    params = init_params(k_param, dy, dx, dh)
    x = jax.random.normal(k_x, (B, T, dy), jnp.float32)

    samples, mu, var, log_prob = encoder_forward(params, x, k_noise)
    jax.block_until_ready((samples, mu, var, log_prob))

    assert samples.shape == (B, T, dx)
    assert mu.shape == (B, T, dx)
    assert var.shape == (B, T, dx)
    assert log_prob.shape == (B,)
    assert bool(jnp.all(var > 0.0))
    assert bool(jnp.all(jnp.isfinite(samples)))
    assert bool(jnp.all(jnp.isfinite(log_prob)))
    print("KERNEL_OK")
</pallas_src>

<mosaic_0001>
module attributes {stable_mosaic.version = 11 : i64} {
  func.func @_bigru_kernel(%arg0: i32, %arg1: memref<2x8x6xf32, #tpu.memory_space<vmem>>, %arg2: memref<2x8x6xf32, #tpu.memory_space<vmem>>, %arg3: memref<6x48xbf16, #tpu.memory_space<vmem>>, %arg4: memref<16x48xf32, #tpu.memory_space<vmem>>, %arg5: memref<1x48xf32, #tpu.memory_space<vmem>>, %arg6: memref<1x16xf32, #tpu.memory_space<vmem>>, %arg7: memref<6x48xbf16, #tpu.memory_space<vmem>>, %arg8: memref<16x48xf32, #tpu.memory_space<vmem>>, %arg9: memref<1x48xf32, #tpu.memory_space<vmem>>, %arg10: memref<1x16xf32, #tpu.memory_space<vmem>>, %arg11: memref<2x8x16xf32, #tpu.memory_space<vmem>>, %arg12: memref<2x8x16xf32, #tpu.memory_space<vmem>>, %arg13: memref<2x16xf32, #tpu.memory_space<vmem>>, %arg14: memref<2x16xf32, #tpu.memory_space<vmem>>) attributes {dimension_semantics = [#tpu.dimension_semantics<arbitrary>], iteration_bounds = array<i64: 1>, scalar_prefetch = 0 : i64, scratch_operands = 2 : i64, tpu.core_type = #tpu.core_type<tc>, window_params = [{transform_indices = @transform_0, window_bounds = array<i64: 2, 8, 6>}, {transform_indices = @transform_1, window_bounds = array<i64: 2, 8, 6>}, {pipeline_mode = #tpu.pipeline_mode<synchronous>, transform_indices = @transform_2, window_bounds = array<i64: 6, 48>}, {pipeline_mode = #tpu.pipeline_mode<synchronous>, transform_indices = @transform_3, window_bounds = array<i64: 16, 48>}, {pipeline_mode = #tpu.pipeline_mode<synchronous>, transform_indices = @transform_4, window_bounds = array<i64: 1, 48>}, {pipeline_mode = #tpu.pipeline_mode<synchronous>, transform_indices = @transform_5, window_bounds = array<i64: 1, 16>}, {pipeline_mode = #tpu.pipeline_mode<synchronous>, transform_indices = @transform_6, window_bounds = array<i64: 6, 48>}, {pipeline_mode = #tpu.pipeline_mode<synchronous>, transform_indices = @transform_7, window_bounds = array<i64: 16, 48>}, {pipeline_mode = #tpu.pipeline_mode<synchronous>, transform_indices = @transform_8, window_bounds = array<i64: 1, 48>}, {pipeline_mode = #tpu.pipeline_mode<synchronous>, transform_indices = @transform_9, window_bounds = array<i64: 1, 16>}, {transform_indices = @transform_10, window_bounds = array<i64: 2, 8, 16>}, {transform_indices = @transform_11, window_bounds = array<i64: 2, 8, 16>}]} {
    %c0_i32 = arith.constant 0 : i32
    %0 = arith.cmpi eq, %arg0, %c0_i32 : i32
    %1 = arith.extui %0 : i1 to i32
    %c0_i32_0 = arith.constant 0 : i32
    %2 = arith.cmpi ne, %1, %c0_i32_0 : i32
    scf.if %2 {
      %cst_136 = arith.constant 0.000000e+00 : f32
      %573 = vector.broadcast %cst_136 : f32 to vector<2x16xf32>
      %c0_137 = arith.constant 0 : index
      %c0_138 = arith.constant 0 : index
      %574 = vector.load %arg13[%c0_137, %c0_138] : memref<2x16xf32, #tpu.memory_space<vmem>>, vector<2x16xf32>
      tpu.vector_store %arg13[%c0_137, %c0_138], %573 {strides = array<i32>} : memref<2x16xf32, #tpu.memory_space<vmem>>, vector<2x16xf32>,
      %cst_139 = arith.constant 0.000000e+00 : f32
      %575 = vector.broadcast %cst_139 : f32 to vector<2x16xf32>
      %c0_140 = arith.constant 0 : index
      %c0_141 = arith.constant 0 : index
      %576 = vector.load %arg14[%c0_140, %c0_141] : memref<2x16xf32, #tpu.memory_space<vmem>>, vector<2x16xf32>
      tpu.vector_store %arg14[%c0_140, %c0_141], %575 {strides = array<i32>} : memref<2x16xf32, #tpu.memory_space<vmem>>, vector<2x16xf32>,
    } else {
    }
    %c0 = arith.constant 0 : index
    %c0_1 = arith.constant 0 : index
    %c0_2 = arith.constant 0 : index
    %3 = vector.load %arg1[%c0, %c0_1, %c0_2] : memref<2x8x6xf32, #tpu.memory_space<vmem>>, vector<2x8x6xf32>
    %4 = vector.shape_cast %3 : vector<2x8x6xf32> to vector<16x6xf32>
    %5 = arith.truncf %4 : vector<16x6xf32> to vector<16x6xbf16>
    %c0_3 = arith.constant 0 : index
    %c0_4 = arith.constant 0 : index
    %c0_5 = arith.constant 0 : index
    %6 = vector.load %arg2[%c0_3, %c0_4, %c0_5] : memref<2x8x6xf32, #tpu.memory_space<vmem>>, vector<2x8x6xf32>
    %7 = vector.shape_cast %6 : vector<2x8x6xf32> to vector<16x6xf32>
    %8 = arith.truncf %7 : vector<16x6xf32> to vector<16x6xbf16>
    %c0_6 = arith.constant 0 : index
    %c0_7 = arith.constant 0 : index
    %9 = vector.load %arg3[%c0_6, %c0_7] : memref<6x48xbf16, #tpu.memory_space<vmem>>, vector<6x48xbf16>
    %cst = arith.constant dense<0.000000e+00> : vector<16x48xf32>
    %10 = tpu.matmul %5, %9, %cst {dimension_numbers = #tpu.dot_dimension_numbers<[1], [0], [0], [1], [0, 0, 1, 1], [], []>} : vector<16x6xbf16>, vector<6x48xbf16>, vector<16x48xf32> -> vector<16x48xf32>
    %c0_8 = arith.constant 0 : index
    %c0_9 = arith.constant 0 : index
    %11 = vector.load %arg5[%c0_8, %c0_9] : memref<1x48xf32, #tpu.memory_space<vmem>>, vector<1x48xf32>
    %12 = vector.broadcast %11 : vector<1x48xf32> to vector<16x48xf32>
    %13 = arith.addf %10, %12 : vector<16x48xf32>
    %14 = vector.shape_cast %13 : vector<16x48xf32> to vector<2x8x48xf32>
    %c0_10 = arith.constant 0 : index
    %c0_11 = arith.constant 0 : index
    %15 = vector.load %arg7[%c0_10, %c0_11] : memref<6x48xbf16, #tpu.memory_space<vmem>>, vector<6x48xbf16>
    %cst_12 = arith.constant dense<0.000000e+00> : vector<16x48xf32>
    %16 = tpu.matmul %8, %15, %cst_12 {dimension_numbers = #tpu.dot_dimension_numbers<[1], [0], [0], [1], [0, 0, 1, 1], [], []>} : vector<16x6xbf16>, vector<6x48xbf16>, vector<16x48xf32> -> vector<16x48xf32>
    %c0_13 = arith.constant 0 : index
    %c0_14 = arith.constant 0 : index
    %17 = vector.load %arg9[%c0_13, %c0_14] : memref<1x48xf32, #tpu.memory_space<vmem>>, vector<1x48xf32>
    %18 = vector.broadcast %17 : vector<1x48xf32> to vector<16x48xf32>
    %19 = arith.addf %16, %18 : vector<16x48xf32>
    %20 = vector.shape_cast %19 : vector<16x48xf32> to vector<2x8x48xf32>
    %c0_15 = arith.constant 0 : index
    %c0_16 = arith.constant 0 : index
    %21 = vector.load %arg4[%c0_15, %c0_16] : memref<16x48xf32, #tpu.memory_space<vmem>>, vector<16x48xf32>
    %c0_17 = arith.constant 0 : index
    %c0_18 = arith.constant 0 : index
    %22 = vector.load %arg8[%c0_17, %c0_18] : memref<16x48xf32, #tpu.memory_space<vmem>>, vector<16x48xf32>
    %c0_19 = arith.constant 0 : index
    %c0_20 = arith.constant 0 : index
    %23 = vector.load %arg6[%c0_19, %c0_20] : memref<1x16xf32, #tpu.memory_space<vmem>>, vector<1x16xf32>
    %c0_21 = arith.constant 0 : index
    %c0_22 = arith.constant 0 : index
    %24 = vector.load %arg10[%c0_21, %c0_22] : memref<1x16xf32, #tpu.memory_space<vmem>>, vector<1x16xf32>
    %c0_23 = arith.constant 0 : index
    %c0_24 = arith.constant 0 : index
    %25 = vector.load %arg13[%c0_23, %c0_24] : memref<2x16xf32, #tpu.memory_space<vmem>>, vector<2x16xf32>
    %c0_25 = arith.constant 0 : index
    %c0_26 = arith.constant 0 : index
    %26 = vector.load %arg14[%c0_25, %c0_26] : memref<2x16xf32, #tpu.memory_space<vmem>>, vector<2x16xf32>
    %27 = vector.extract_strided_slice %14 {offsets = [0, 0, 0], sizes = [2, 1, 48], strides = [1, 1, 1]} : vector<2x8x48xf32> to vector<2x1x48xf32>
    %28 = vector.shape_cast %27 : vector<2x1x48xf32> to vector<2x48xf32>
    %cst_27 = arith.constant dense<0.000000e+00> : vector<2x48xf32>
    %29 = tpu.matmul %25, %21, %cst_27 {dimension_numbers = #tpu.dot_dimension_numbers<[1], [0], [0], [1], [0, 0, 1, 1], [], []>} : vector<2x16xf32>, vector<16x48xf32>, vector<2x48xf32> -> vector<2x48xf32>
    %30 = vector.extract_strided_slice %28 {offsets = [0, 0], sizes = [2, 16], strides = [1, 1]} : vector<2x48xf32> to vector<2x16xf32>
    %31 = vector.extract_strided_slice %29 {offsets = [0, 0], sizes = [2, 16], strides = [1, 1]} : vector<2x48xf32> to vector<2x16xf32>
    %32 = arith.addf %30, %31 : vector<2x16xf32>
    %33 = arith.negf %32 : vector<2x16xf32>
    %34 = math.exp %33 : vector<2x16xf32>
    %cst_28 = arith.constant 1.000000e+00 : f32
    %35 = vector.broadcast %cst_28 : f32 to vector<2x16xf32>
    %36 = arith.addf %35, %34 : vector<2x16xf32>
    %37 = arith.divf %35, %36 : vector<2x16xf32>
    %38 = vector.extract_strided_slice %28 {offsets = [0, 16], sizes = [2, 16], strides = [1, 1]} : vector<2x48xf32> to vector<2x16xf32>
    %39 = vector.extract_strided_slice %29 {offsets = [0, 16], sizes = [2, 16], strides = [1, 1]} : vector<2x48xf32> to vector<2x16xf32>
    %40 = arith.addf %38, %39 : vector<2x16xf32>
    %41 = arith.negf %40 : vector<2x16xf32>
    %42 = math.exp %41 : vector<2x16xf32>
    %cst_29 = arith.constant 1.000000e+00 : f32
    %43 = vector.broadcast %cst_29 : f32 to vector<2x16xf32>
    %44 = arith.addf %43, %42 : vector<2x16xf32>
    %45 = arith.divf %43, %44 : vector<2x16xf32>
    %46 = vector.extract_strided_slice %28 {offsets = [0, 32], sizes = [2, 16], strides = [1, 1]} : vector<2x48xf32> to vector<2x16xf32>
    %47 = vector.extract_strided_slice %29 {offsets = [0, 32], sizes = [2, 16], strides = [1, 1]} : vector<2x48xf32> to vector<2x16xf32>
    %48 = vector.broadcast %23 : vector<1x16xf32> to vector<2x16xf32>
    %49 = arith.addf %47, %48 : vector<2x16xf32>
    %50 = arith.mulf %37, %49 : vector<2x16xf32>
    %51 = arith.addf %46, %50 : vector<2x16xf32>
    %52 = math.tanh %51 : vector<2x16xf32>
    %cst_30 = arith.constant 1.000000e+00 : f32
    %53 = vector.broadcast %cst_30 : f32 to vector<2x16xf32>
    %54 = arith.subf %53, %45 : vector<2x16xf32>
    %55 = arith.mulf %54, %52 : vector<2x16xf32>
    %56 = arith.mulf %45, %25 : vector<2x16xf32>
    %57 = arith.addf %55, %56 : vector<2x16xf32>
    %58 = vector.extract_strided_slice %20 {offsets = [0, 7, 0], sizes = [2, 1, 48], strides = [1, 1, 1]} : vector<2x8x48xf32> to vector<2x1x48xf32>
    %59 = vector.shape_cast %58 : vector<2x1x48xf32> to vector<2x48xf32>
    %cst_31 = arith.constant dense<0.000000e+00> : vector<2x48xf32>
    %60 = tpu.matmul %26, %22, %cst_31 {dimension_numbers = #tpu.dot_dimension_numbers<[1], [0], [0], [1], [0, 0, 1, 1], [], []>} : vector<2x16xf32>, vector<16x48xf32>, vector<2x48xf32> -> vector<2x48xf32>
    %61 = vector.extract_strided_slice %59 {offsets = [0, 0], sizes = [2, 16], strides = [1, 1]} : vector<2x48xf32> to vector<2x16xf32>
    %62 = vector.extract_strided_slice %60 {offsets = [0, 0], sizes = [2, 16], strides = [1, 1]} : vector<2x48xf32> to vector<2x16xf32>
    %63 = arith.addf %61, %62 : vector<2x16xf32>
    %64 = arith.negf %63 : vector<2x16xf32>
    %65 = math.exp %64 : vector<2x16xf32>
    %cst_32 = arith.constant 1.000000e+00 : f32
    %66 = vector.broadcast %cst_32 : f32 to vector<2x16xf32>
    %67 = arith.addf %66, %65 : vector<2x16xf32>
    %68 = arith.divf %66, %67 : vector<2x16xf32>
    %69 = vector.extract_strided_slice %59 {offsets = [0, 16], sizes = [2, 16], strides = [1, 1]} : vector<2x48xf32> to vector<2x16xf32>
    %70 = vector.extract_strided_slice %60 {offsets = [0, 16], sizes = [2, 16], strides = [1, 1]} : vector<2x48xf32> to vector<2x16xf32>
    %71 = arith.addf %69, %70 : vector<2x16xf32>
    %72 = arith.negf %71 : vector<2x16xf32>
    %73 = math.exp %72 : vector<2x16xf32>
    %cst_33 = arith.constant 1.000000e+00 : f32
    %74 = vector.broadcast %cst_33 : f32 to vector<2x16xf32>
    %75 = arith.addf %74, %73 : vector<2x16xf32>
    %76 = arith.divf %74, %75 : vector<2x16xf32>
    %77 = vector.extract_strided_slice %59 {offsets = [0, 32], sizes = [2, 16], strides = [1, 1]} : vector<2x48xf32> to vector<2x16xf32>
    %78 = vector.extract_strided_slice %60 {offsets = [0, 32], sizes = [2, 16], strides = [1, 1]} : vector<2x48xf32> to vector<2x16xf32>
    %79 = vector.broadcast %24 : vector<1x16xf32> to vector<2x16xf32>
    %80 = arith.addf %78, %79 : vector<2x16xf32>
    %81 = arith.mulf %68, %80 : vector<2x16xf32>
    %82 = arith.addf %77, %81 : vector<2x16xf32>
    %83 = math.tanh %82 : vector<2x16xf32>
    %cst_34 = arith.constant 1.000000e+00 : f32
    %84 = vector.broadcast %cst_34 : f32 to vector<2x16xf32>
    %85 = arith.subf %84, %76 : vector<2x16xf32>
    %86 = arith.mulf %85, %83 : vector<2x16xf32>
    %87 = arith.mulf %76, %26 : vector<2x16xf32>
    %88 = arith.addf %86, %87 : vector<2x16xf32>
    %c0_35 = arith.constant 0 : index
    %c0_36 = arith.constant 0 : index
    %c0_37 = arith.constant 0 : index
    %89 = vector.load %arg11[%c0_35, %c0_36, %c0_37] : memref<2x8x16xf32, #tpu.memory_space<vmem>>, vector<2x1x16xf32>
    %90 = vector.shape_cast %89 : vector<2x1x16xf32> to vector<2x16xf32>
    %91 = vector.shape_cast %57 : vector<2x16xf32> to vector<2x1x16xf32>
    tpu.vector_store %arg11[%c0_35, %c0_36, %c0_37], %91 {strides = array<i32>} : memref<2x8x16xf32, #tpu.memory_space<vmem>>, vector<2x1x16xf32>,
    %c0_38 = arith.constant 0 : index
    %c7 = arith.constant 7 : index
    %c0_39 = arith.constant 0 : index
    %92 = vector.load %arg12[%c0_38, %c7, %c0_39] : memref<2x8x16xf32, #tpu.memory_space<vmem>>, vector<2x1x16xf32>
    %93 = vector.shape_cast %92 : vector<2x1x16xf32> to vector<2x16xf32>
    %94 = vector.shape_cast %88 : vector<2x16xf32> to vector<2x1x16xf32>
    tpu.vector_store %arg12[%c0_38, %c7, %c0_39], %94 {strides = array<i32>} : memref<2x8x16xf32, #tpu.memory_space<vmem>>, vector<2x1x16xf32>,
    %95 = vector.extract_strided_slice %14 {offsets = [0, 1, 0], sizes = [2, 1, 48], strides = [1, 1, 1]} : vector<2x8x48xf32> to vector<2x1x48xf32>
    %96 = vector.shape_cast %95 : vector<2x1x48xf32> to vector<2x48xf32>
    %cst_40 = arith.constant dense<0.000000e+00> : vector<2x48xf32>
    %97 = tpu.matmul %57, %21, %cst_40 {dimension_numbers = #tpu.dot_dimension_numbers<[1], [0], [0], [1], [0, 0, 1, 1], [], []>} : vector<2x16xf32>, vector<16x48xf32>, vector<2x48xf32> -> vector<2x48xf32>
    %98 = vector.extract_strided_slice %96 {offsets = [0, 0], sizes = [2, 16], strides = [1, 1]} : vector<2x48xf32> to vector<2x16xf32>
    %99 = vector.extract_strided_slice %97 {offsets = [0, 0], sizes = [2, 16], strides = [1, 1]} : vector<2x48xf32> to vector<2x16xf32>
    %100 = arith.addf %98, %99 : vector<2x16xf32>
    %101 = arith.negf %100 : vector<2x16xf32>
    %102 = math.exp %101 : vector<2x16xf32>
    %cst_41 = arith.constant 1.000000e+00 : f32
    %103 = vector.broadcast %cst_41 : f32 to vector<2x16xf32>
    %104 = arith.addf %103, %102 : vector<2x16xf32>
    %105 = arith.divf %103, %104 : vector<2x16xf32>
    %106 = vector.extract_strided_slice %96 {offsets = [0, 16], sizes = [2, 16], strides = [1, 1]} : vector<2x48xf32> to vector<2x16xf32>
    %107 = vector.extract_strided_slice %97 {offsets = [0, 16], sizes = [2, 16], strides = [1, 1]} : vector<2x48xf32> to vector<2x16xf32>
    %108 = arith.addf %106, %107 : vector<2x16xf32>
    %109 = arith.negf %108 : vector<2x16xf32>
    %110 = math.exp %109 : vector<2x16xf32>
    %cst_42 = arith.constant 1.000000e+00 : f32
    %111 = vector.broadcast %cst_42 : f32 to vector<2x16xf32>
    %112 = arith.addf %111, %110 : vector<2x16xf32>
    %113 = arith.divf %111, %112 : vector<2x16xf32>
    %114 = vector.extract_strided_slice %96 {offsets = [0, 32], sizes = [2, 16], strides = [1, 1]} : vector<2x48xf32> to vector<2x16xf32>
    %115 = vector.extract_strided_slice %97 {offsets = [0, 32], sizes = [2, 16], strides = [1, 1]} : vector<2x48xf32> to vector<2x16xf32>
    %116 = vector.broadcast %23 : vector<1x16xf32> to vector<2x16xf32>
    %117 = arith.addf %115, %116 : vector<2x16xf32>
    %118 = arith.mulf %105, %117 : vector<2x16xf32>
    %119 = arith.addf %114, %118 : vector<2x16xf32>
    %120 = math.tanh %119 : vector<2x16xf32>
    %cst_43 = arith.constant 1.000000e+00 : f32
    %121 = vector.broadcast %cst_43 : f32 to vector<2x16xf32>
    %122 = arith.subf %121, %113 : vector<2x16xf32>
    %123 = arith.mulf %122, %120 : vector<2x16xf32>
    %124 = arith.mulf %113, %57 : vector<2x16xf32>
    %125 = arith.addf %123, %124 : vector<2x16xf32>
    %126 = vector.extract_strided_slice %20 {offsets = [0, 6, 0], sizes = [2, 1, 48], strides = [1, 1, 1]} : vector<2x8x48xf32> to vector<2x1x48xf32>
    %127 = vector.shape_cast %126 : vector<2x1x48xf32> to vector<2x48xf32>
    %cst_44 = arith.constant dense<0.000000e+00> : vector<2x48xf32>
    %128 = tpu.matmul %88, %22, %cst_44 {dimension_numbers = #tpu.dot_dimension_numbers<[1], [0], [0], [1], [0, 0, 1, 1], [], []>} : vector<2x16xf32>, vector<16x48xf32>, vector<2x48xf32> -> vector<2x48xf32>
    %129 = vector.extract_strided_slice %127 {offsets = [0, 0], sizes = [2, 16], strides = [1, 1]} : vector<2x48xf32> to vector<2x16xf32>
    %130 = vector.extract_strided_slice %128 {offsets = [0, 0], sizes = [2, 16], strides = [1, 1]} : vector<2x48xf32> to vector<2x16xf32>
    %131 = arith.addf %129, %130 : vector<2x16xf32>
    %132 = arith.negf %131 : vector<2x16xf32>
    %133 = math.exp %132 : vector<2x16xf32>
    %cst_45 = arith.constant 1.000000e+00 : f32
    %134 = vector.broadcast %cst_45 : f32 to vector<2x16xf32>
    %135 = arith.addf %134, %133 : vector<2x16xf32>
    %136 = arith.divf %134, %135 : vector<2x16xf32>
    %137 = vector.extract_strided_slice %127 {offsets = [0, 16], sizes = [2, 16], strides = [1, 1]} : vector<2x48xf32> to vector<2x16xf32>
    %138 = vector.extract_strided_slice %128 {offsets = [0, 16], sizes = [2, 16], strides = [1, 1]} : vector<2x48xf32> to vector<2x16xf32>
    %139 = arith.addf %137, %138 : vector<2x16xf32>
    %140 = arith.negf %139 : vector<2x16xf32>
    %141 = math.exp %140 : vector<2x16xf32>
    %cst_46 = arith.constant 1.000000e+00 : f32
    %142 = vector.broadcast %cst_46 : f32 to vector<2x16xf32>
    %143 = arith.addf %142, %141 : vector<2x16xf32>
    %144 = arith.divf %142, %143 : vector<2x16xf32>
    %145 = vector.extract_strided_slice %127 {offsets = [0, 32], sizes = [2, 16], strides = [1, 1]} : vector<2x48xf32> to vector<2x16xf32>
    %146 = vector.extract_strided_slice %128 {offsets = [0, 32], sizes = [2, 16], strides = [1, 1]} : vector<2x48xf32> to vector<2x16xf32>
    %147 = vector.broadcast %24 : vector<1x16xf32> to vector<2x16xf32>
    %148 = arith.addf %146, %147 : vector<2x16xf32>
    %149 = arith.mulf %136, %148 : vector<2x16xf32>
    %150 = arith.addf %145, %149 : vector<2x16xf32>
    %151 = math.tanh %150 : vector<2x16xf32>
    %cst_47 = arith.constant 1.000000e+00 : f32
    %152 = vector.broadcast %cst_47 : f32 to vector<2x16xf32>
    %153 = arith.subf %152, %144 : vector<2x16xf32>
    %154 = arith.mulf %153, %151 : vector<2x16xf32>
    %155 = arith.mulf %144, %88 : vector<2x16xf32>
    %156 = arith.addf %154, %155 : vector<2x16xf32>
    %c0_48 = arith.constant 0 : index
    %c1 = arith.constant 1 : index
    %c0_49 = arith.constant 0 : index
    %157 = vector.load %arg11[%c0_48, %c1, %c0_49] : memref<2x8x16xf32, #tpu.memory_space<vmem>>, vector<2x1x16xf32>
    %158 = vector.shape_cast %157 : vector<2x1x16xf32> to vector<2x16xf32>
    %159 = vector.shape_cast %125 : vector<2x16xf32> to vector<2x1x16xf32>
    tpu.vector_store %arg11[%c0_48, %c1, %c0_49], %159 {strides = array<i32>} : memref<2x8x16xf32, #tpu.memory_space<vmem>>, vector<2x1x16xf32>,
    %c0_50 = arith.constant 0 : index
    %c6 = arith.constant 6 : index
    %c0_51 = arith.constant 0 : index
    %160 = vector.load %arg12[%c0_50, %c6, %c0_51] : memref<2x8x16xf32, #tpu.memory_space<vmem>>, vector<2x1x16xf32>
    %161 = vector.shape_cast %160 : vector<2x1x16xf32> to vector<2x16xf32>
    %162 = vector.shape_cast %156 : vector<2x16xf32> to vector<2x1x16xf32>
    tpu.vector_store %arg12[%c0_50, %c6, %c0_51], %162 {strides = array<i32>} : memref<2x8x16xf32, #tpu.memory_space<vmem>>, vector<2x1x16xf32>,
    %163 = vector.extract_strided_slice %14 {offsets = [0, 2, 0], sizes = [2, 1, 48], strides = [1, 1, 1]} : vector<2x8x48xf32> to vector<2x1x48xf32>
    %164 = vector.shape_cast %163 : vector<2x1x48xf32> to vector<2x48xf32>
    %cst_52 = arith.constant dense<0.000000e+00> : vector<2x48xf32>
    %165 = tpu.matmul %125, %21, %cst_52 {dimension_numbers = #tpu.dot_dimension_numbers<[1], [0], [0], [1], [0, 0, 1, 1], [], []>} : vector<2x16xf32>, vector<16x48xf32>, vector<2x48xf32> -> vector<2x48xf32>
    %166 = vector.extract_strided_slice %164 {offsets = [0, 0], sizes = [2, 16], strides = [1, 1]} : vector<2x48xf32> to vector<2x16xf32>
    %167 = vector.extract_strided_slice %165 {offsets = [0, 0], sizes = [2, 16], strides = [1, 1]} : vector<2x48xf32> to vector<2x16xf32>
    %168 = arith.addf %166, %167 : vector<2x16xf32>
    %169 = arith.negf %168 : vector<2x16xf32>
    %170 = math.exp %169 : vector<2x16xf32>
    %cst_53 = arith.constant 1.000000e+00 : f32
    %171 = vector.broadcast %cst_53 : f32 to vector<2x16xf32>
    %172 = arith.addf %171, %170 : vector<2x16xf32>
    %173 = arith.divf %171, %172 : vector<2x16xf32>
    %174 = vector.extract_strided_slice %164 {offsets = [0, 16], sizes = [2, 16], strides = [1, 1]} : vector<2x48xf32> to vector<2x16xf32>
    %175 = vector.extract_strided_slice %165 {offsets = [0, 16], sizes = [2, 16], strides = [1, 1]} : vector<2x48xf32> to vector<2x16xf32>
    %176 = arith.addf %174, %175 : vector<2x16xf32>
    %177 = arith.negf %176 : vector<2x16xf32>
    %178 = math.exp %177 : vector<2x16xf32>
    %cst_54 = arith.constant 1.000000e+00 : f32
    %179 = vector.broadcast %cst_54 : f32 to vector<2x16xf32>
    %180 = arith.addf %179, %178 : vector<2x16xf32>
    %181 = arith.divf %179, %180 : vector<2x16xf32>
    %182 = vector.extract_strided_slice %164 {offsets = [0, 32], sizes = [2, 16], strides = [1, 1]} : vector<2x48xf32> to vector<2x16xf32>
    %183 = vector.extract_strided_slice %165 {offsets = [0, 32], sizes = [2, 16], strides = [1, 1]} : vector<2x48xf32> to vector<2x16xf32>
    %184 = vector.broadcast %23 : vector<1x16xf32> to vector<2x16xf32>
    %185 = arith.addf %183, %184 : vector<2x16xf32>
    %186 = arith.mulf %173, %185 : vector<2x16xf32>
    %187 = arith.addf %182, %186 : vector<2x16xf32>
    %188 = math.tanh %187 : vector<2x16xf32>
    %cst_55 = arith.constant 1.000000e+00 : f32
    %189 = vector.broadcast %cst_55 : f32 to vector<2x16xf32>
    %190 = arith.subf %189, %181 : vector<2x16xf32>
    %191 = arith.mulf %190, %188 : vector<2x16xf32>
    %192 = arith.mulf %181, %125 : vector<2x16xf32>
    %193 = arith.addf %191, %192 : vector<2x16xf32>
    %194 = vector.extract_strided_slice %20 {offsets = [0, 5, 0], sizes = [2, 1, 48], strides = [1, 1, 1]} : vector<2x8x48xf32> to vector<2x1x48xf32>
    %195 = vector.shape_cast %194 : vector<2x1x48xf32> to vector<2x48xf32>
    %cst_56 = arith.constant dense<0.000000e+00> : vector<2x48xf32>
    %196 = tpu.matmul %156, %22, %cst_56 {dimension_numbers = #tpu.dot_dimension_numbers<[1], [0], [0], [1], [0, 0, 1, 1], [], []>} : vector<2x16xf32>, vector<16x48xf32>, vector<2x48xf32> -> vector<2x48xf32>
    %197 = vector.extract_strided_slice %195 {offsets = [0, 0], sizes = [2, 16], strides = [1, 1]} : vector<2x48xf32> to vector<2x16xf32>
    %198 = vector.extract_strided_slice %196 {offsets = [0, 0], sizes = [2, 16], strides = [1, 1]} : vector<2x48xf32> to vector<2x16xf32>
    %199 = arith.addf %197, %198 : vector<2x16xf32>
    %200 = arith.negf %199 : vector<2x16xf32>
    %201 = math.exp %200 : vector<2x16xf32>
    %cst_57 = arith.constant 1.000000e+00 : f32
    %202 = vector.broadcast %cst_57 : f32 to vector<2x16xf32>
    %203 = arith.addf %202, %201 : vector<2x16xf32>
    %204 = arith.divf %202, %203 : vector<2x16xf32>
    %205 = vector.extract_strided_slice %195 {offsets = [0, 16], sizes = [2, 16], strides = [1, 1]} : vector<2x48xf32> to vector<2x16xf32>
    %206 = vector.extract_strided_slice %196 {offsets = [0, 16], sizes = [2, 16], strides = [1, 1]} : vector<2x48xf32> to vector<2x16xf32>
    %207 = arith.addf %205, %206 : vector<2x16xf32>
    %208 = arith.negf %207 : vector<2x16xf32>
    %209 = math.exp %208 : vector<2x16xf32>
    %cst_58 = arith.constant 1.000000e+00 : f32
    %210 = vector.broadcast %cst_58 : f32 to vector<2x16xf32>
    %211 = arith.addf %210, %209 : vector<2x16xf32>
    %212 = arith.divf %210, %211 : vector<2x16xf32>
    %213 = vector.extract_strided_slice %195 {offsets = [0, 32], sizes = [2, 16], strides = [1, 1]} : vector<2x48xf32> to vector<2x16xf32>
    %214 = vector.extract_strided_slice %196 {offsets = [0, 32], sizes = [2, 16], strides = [1, 1]} : vector<2x48xf32> to vector<2x16xf32>
    %215 = vector.broadcast %24 : vector<1x16xf32> to vector<2x16xf32>
    %216 = arith.addf %214, %215 : vector<2x16xf32>
    %217 = arith.mulf %204, %216 : vector<2x16xf32>
    %218 = arith.addf %213, %217 : vector<2x16xf32>
    %219 = math.tanh %218 : vector<2x16xf32>
    %cst_59 = arith.constant 1.000000e+00 : f32
    %220 = vector.broadcast %cst_59 : f32 to vector<2x16xf32>
    %221 = arith.subf %220, %212 : vector<2x16xf32>
    %222 = arith.mulf %221, %219 : vector<2x16xf32>
    %223 = arith.mulf %212, %156 : vector<2x16xf32>
    %224 = arith.addf %222, %223 : vector<2x16xf32>
    %c0_60 = arith.constant 0 : index
    %c2 = arith.constant 2 : index
    %c0_61 = arith.constant 0 : index
    %225 = vector.load %arg11[%c0_60, %c2, %c0_61] : memref<2x8x16xf32, #tpu.memory_space<vmem>>, vector<2x1x16xf32>
    %226 = vector.shape_cast %225 : vector<2x1x16xf32> to vector<2x16xf32>
    %227 = vector.shape_cast %193 : vector<2x16xf32> to vector<2x1x16xf32>
    tpu.vector_store %arg11[%c0_60, %c2, %c0_61], %227 {strides = array<i32>} : memref<2x8x16xf32, #tpu.memory_space<vmem>>, vector<2x1x16xf32>,
    %c0_62 = arith.constant 0 : index
    %c5 = arith.constant 5 : index
    %c0_63 = arith.constant 0 : index
    %228 = vector.load %arg12[%c0_62, %c5, %c0_63] : memref<2x8x16xf32, #tpu.memory_space<vmem>>, vector<2x1x16xf32>
    %229 = vector.shape_cast %228 : vector<2x1x16xf32> to vector<2x16xf32>
    %230 = vector.shape_cast %224 : vector<2x16xf32> to vector<2x1x16xf32>
    tpu.vector_store %arg12[%c0_62, %c5, %c0_63], %230 {strides = array<i32>} : memref<2x8x16xf32, #tpu.memory_space<vmem>>, vector<2x1x16xf32>,
    %231 = vector.extract_strided_slice %14 {offsets = [0, 3, 0], sizes = [2, 1, 48], strides = [1, 1, 1]} : vector<2x8x48xf32> to vector<2x1x48xf32>
    %232 = vector.shape_cast %231 : vector<2x1x48xf32> to vector<2x48xf32>
    %cst_64 = arith.constant dense<0.000000e+00> : vector<2x48xf32>
    %233 = tpu.matmul %193, %21, %cst_64 {dimension_numbers = #tpu.dot_dimension_numbers<[1], [0], [0], [1], [0, 0, 1, 1], [], []>} : vector<2x16xf32>, vector<16x48xf32>, vector<2x48xf32> -> vector<2x48xf32>
    %234 = vector.extract_strided_slice %232 {offsets = [0, 0], sizes = [2, 16], strides = [1, 1]} : vector<2x48xf32> to vector<2x16xf32>
    %235 = vector.extract_strided_slice %233 {offsets = [0, 0], sizes = [2, 16], strides = [1, 1]} : vector<2x48xf32> to vector<2x16xf32>
    %236 = arith.addf %234, %235 : vector<2x16xf32>
    %237 = arith.negf %236 : vector<2x16xf32>
    %238 = math.exp %237 : vector<2x16xf32>
    %cst_65 = arith.constant 1.000000e+00 : f32
    %239 = vector.broadcast %cst_65 : f32 to vector<2x16xf32>
    %240 = arith.addf %239, %238 : vector<2x16xf32>
    %241 = arith.divf %239, %240 : vector<2x16xf32>
    %242 = vector.extract_strided_slice %232 {offsets = [0, 16], sizes = [2, 16], strides = [1, 1]} : vector<2x48xf32> to vector<2x16xf32>
    %243 = vector.extract_strided_slice %233 {offsets = [0, 16], sizes = [2, 16], strides = [1, 1]} : vector<2x48xf32> to vector<2x16xf32>
    %244 = arith.addf %242, %243 : vector<2x16xf32>
    %245 = arith.negf %244 : vector<2x16xf32>
    %246 = math.exp %245 : vector<2x16xf32>
    %cst_66 = arith.constant 1.000000e+00 : f32
    %247 = vector.broadcast %cst_66 : f32 to vector<2x16xf32>
    %248 = arith.addf %247, %246 : vector<2x16xf32>
    %249 = arith.divf %247, %248 : vector<2x16xf32>
    %250 = vector.extract_strided_slice %232 {offsets = [0, 32], sizes = [2, 16], strides = [1, 1]} : vector<2x48xf32> to vector<2x16xf32>
    %251 = vector.extract_strided_slice %233 {offsets = [0, 32], sizes = [2, 16], strides = [1, 1]} : vector<2x48xf32> to vector<2x16xf32>
    %252 = vector.broadcast %23 : vector<1x16xf32> to vector<2x16xf32>
    %253 = arith.addf %251, %252 : vector<2x16xf32>
    %254 = arith.mulf %241, %253 : vector<2x16xf32>
    %255 = arith.addf %250, %254 : vector<2x16xf32>
    %256 = math.tanh %255 : vector<2x16xf32>
    %cst_67 = arith.constant 1.000000e+00 : f32
    %257 = vector.broadcast %cst_67 : f32 to vector<2x16xf32>
    %258 = arith.subf %257, %249 : vector<2x16xf32>
    %259 = arith.mulf %258, %256 : vector<2x16xf32>
    %260 = arith.mulf %249, %193 : vector<2x16xf32>
    %261 = arith.addf %259, %260 : vector<2x16xf32>
    %262 = vector.extract_strided_slice %20 {offsets = [0, 4, 0], sizes = [2, 1, 48], strides = [1, 1, 1]} : vector<2x8x48xf32> to vector<2x1x48xf32>
    %263 = vector.shape_cast %262 : vector<2x1x48xf32> to vector<2x48xf32>
    %cst_68 = arith.constant dense<0.000000e+00> : vector<2x48xf32>
    %264 = tpu.matmul %224, %22, %cst_68 {dimension_numbers = #tpu.dot_dimension_numbers<[1], [0], [0], [1], [0, 0, 1, 1], [], []>} : vector<2x16xf32>, vector<16x48xf32>, vector<2x48xf32> -> vector<2x48xf32>
    %265 = vector.extract_strided_slice %263 {offsets = [0, 0], sizes = [2, 16], strides = [1, 1]} : vector<2x48xf32> to vector<2x16xf32>
    %266 = vector.extract_strided_slice %264 {offsets = [0, 0], sizes = [2, 16], strides = [1, 1]} : vector<2x48xf32> to vector<2x16xf32>
    %267 = arith.addf %265, %266 : vector<2x16xf32>
    %268 = arith.negf %267 : vector<2x16xf32>
    %269 = math.exp %268 : vector<2x16xf32>
    %cst_69 = arith.constant 1.000000e+00 : f32
    %270 = vector.broadcast %cst_69 : f32 to vector<2x16xf32>
    %271 = arith.addf %270, %269 : vector<2x16xf32>
    %272 = arith.divf %270, %271 : vector<2x16xf32>
    %273 = vector.extract_strided_slice %263 {offsets = [0, 16], sizes = [2, 16], strides = [1, 1]} : vector<2x48xf32> to vector<2x16xf32>
    %274 = vector.extract_strided_slice %264 {offsets = [0, 16], sizes = [2, 16], strides = [1, 1]} : vector<2x48xf32> to vector<2x16xf32>
    %275 = arith.addf %273, %274 : vector<2x16xf32>
    %276 = arith.negf %275 : vector<2x16xf32>
    %277 = math.exp %276 : vector<2x16xf32>
    %cst_70 = arith.constant 1.000000e+00 : f32
    %278 = vector.broadcast %cst_70 : f32 to vector<2x16xf32>
    %279 = arith.addf %278, %277 : vector<2x16xf32>
    %280 = arith.divf %278, %279 : vector<2x16xf32>
    %281 = vector.extract_strided_slice %263 {offsets = [0, 32], sizes = [2, 16], strides = [1, 1]} : vector<2x48xf32> to vector<2x16xf32>
    %282 = vector.extract_strided_slice %264 {offsets = [0, 32], sizes = [2, 16], strides = [1, 1]} : vector<2x48xf32> to vector<2x16xf32>
    %283 = vector.broadcast %24 : vector<1x16xf32> to vector<2x16xf32>
    %284 = arith.addf %282, %283 : vector<2x16xf32>
    %285 = arith.mulf %272, %284 : vector<2x16xf32>
    %286 = arith.addf %281, %285 : vector<2x16xf32>
    %287 = math.tanh %286 : vector<2x16xf32>
    %cst_71 = arith.constant 1.000000e+00 : f32
    %288 = vector.broadcast %cst_71 : f32 to vector<2x16xf32>
    %289 = arith.subf %288, %280 : vector<2x16xf32>
    %290 = arith.mulf %289, %287 : vector<2x16xf32>
    %291 = arith.mulf %280, %224 : vector<2x16xf32>
    %292 = arith.addf %290, %291 : vector<2x16xf32>
    %c0_72 = arith.constant 0 : index
    %c3 = arith.constant 3 : index
    %c0_73 = arith.constant 0 : index
    %293 = vector.load %arg11[%c0_72, %c3, %c0_73] : memref<2x8x16xf32, #tpu.memory_space<vmem>>, vector<2x1x16xf32>
    %294 = vector.shape_cast %293 : vector<2x1x16xf32> to vector<2x16xf32>
    %295 = vector.shape_cast %261 : vector<2x16xf32> to vector<2x1x16xf32>
    tpu.vector_store %arg11[%c0_72, %c3, %c0_73], %295 {strides = array<i32>} : memref<2x8x16xf32, #tpu.memory_space<vmem>>, vector<2x1x16xf32>,
    %c0_74 = arith.constant 0 : index
    %c4 = arith.constant 4 : index
    %c0_75 = arith.constant 0 : index
    %296 = vector.load %arg12[%c0_74, %c4, %c0_75] : memref<2x8x16xf32, #tpu.memory_space<vmem>>, vector<2x1x16xf32>
    %297 = vector.shape_cast %296 : vector<2x1x16xf32> to vector<2x16xf32>
    %298 = vector.shape_cast %292 : vector<2x16xf32> to vector<2x1x16xf32>
    tpu.vector_store %arg12[%c0_74, %c4, %c0_75], %298 {strides = array<i32>} : memref<2x8x16xf32, #tpu.memory_space<vmem>>, vector<2x1x16xf32>,
    %299 = vector.extract_strided_slice %14 {offsets = [0, 4, 0], sizes = [2, 1, 48], strides = [1, 1, 1]} : vector<2x8x48xf32> to vector<2x1x48xf32>
    %300 = vector.shape_cast %299 : vector<2x1x48xf32> to vector<2x48xf32>
    %cst_76 = arith.constant dense<0.000000e+00> : vector<2x48xf32>
    %301 = tpu.matmul %261, %21, %cst_76 {dimension_numbers = #tpu.dot_dimension_numbers<[1], [0], [0], [1], [0, 0, 1, 1], [], []>} : vector<2x16xf32>, vector<16x48xf32>, vector<2x48xf32> -> vector<2x48xf32>
    %302 = vector.extract_strided_slice %300 {offsets = [0, 0], sizes = [2, 16], strides = [1, 1]} : vector<2x48xf32> to vector<2x16xf32>
    %303 = vector.extract_strided_slice %301 {offsets = [0, 0], sizes = [2, 16], strides = [1, 1]} : vector<2x48xf32> to vector<2x16xf32>
    %304 = arith.addf %302, %303 : vector<2x16xf32>
    %305 = arith.negf %304 : vector<2x16xf32>
    %306 = math.exp %305 : vector<2x16xf32>
    %cst_77 = arith.constant 1.000000e+00 : f32
    %307 = vector.broadcast %cst_77 : f32 to vector<2x16xf32>
    %308 = arith.addf %307, %306 : vector<2x16xf32>
    %309 = arith.divf %307, %308 : vector<2x16xf32>
    %310 = vector.extract_strided_slice %300 {offsets = [0, 16], sizes = [2, 16], strides = [1, 1]} : vector<2x48xf32> to vector<2x16xf32>
    %311 = vector.extract_strided_slice %301 {offsets = [0, 16], sizes = [2, 16], strides = [1, 1]} : vector<2x48xf32> to vector<2x16xf32>
    %312 = arith.addf %310, %311 : vector<2x16xf32>
    %313 = arith.negf %312 : vector<2x16xf32>
    %314 = math.exp %313 : vector<2x16xf32>
    %cst_78 = arith.constant 1.000000e+00 : f32
    %315 = vector.broadcast %cst_78 : f32 to vector<2x16xf32>
    %316 = arith.addf %315, %314 : vector<2x16xf32>
    %317 = arith.divf %315, %316 : vector<2x16xf32>
    %318 = vector.extract_strided_slice %300 {offsets = [0, 32], sizes = [2, 16], strides = [1, 1]} : vector<2x48xf32> to vector<2x16xf32>
    %319 = vector.extract_strided_slice %301 {offsets = [0, 32], sizes = [2, 16], strides = [1, 1]} : vector<2x48xf32> to vector<2x16xf32>
    %320 = vector.broadcast %23 : vector<1x16xf32> to vector<2x16xf32>
    %321 = arith.addf %319, %320 : vector<2x16xf32>
    %322 = arith.mulf %309, %321 : vector<2x16xf32>
    %323 = arith.addf %318, %322 : vector<2x16xf32>
    %324 = math.tanh %323 : vector<2x16xf32>
    %cst_79 = arith.constant 1.000000e+00 : f32
    %325 = vector.broadcast %cst_79 : f32 to vector<2x16xf32>
    %326 = arith.subf %325, %317 : vector<2x16xf32>
    %327 = arith.mulf %326, %324 : vector<2x16xf32>
    %328 = arith.mulf %317, %261 : vector<2x16xf32>
    %329 = arith.addf %327, %328 : vector<2x16xf32>
    %330 = vector.extract_strided_slice %20 {offsets = [0, 3, 0], sizes = [2, 1, 48], strides = [1, 1, 1]} : vector<2x8x48xf32> to vector<2x1x48xf32>
    %331 = vector.shape_cast %330 : vector<2x1x48xf32> to vector<2x48xf32>
    %cst_80 = arith.constant dense<0.000000e+00> : vector<2x48xf32>
    %332 = tpu.matmul %292, %22, %cst_80 {dimension_numbers = #tpu.dot_dimension_numbers<[1], [0], [0], [1], [0, 0, 1, 1], [], []>} : vector<2x16xf32>, vector<16x48xf32>, vector<2x48xf32> -> vector<2x48xf32>
    %333 = vector.extract_strided_slice %331 {offsets = [0, 0], sizes = [2, 16], strides = [1, 1]} : vector<2x48xf32> to vector<2x16xf32>
    %334 = vector.extract_strided_slice %332 {offsets = [0, 0], sizes = [2, 16], strides = [1, 1]} : vector<2x48xf32> to vector<2x16xf32>
    %335 = arith.addf %333, %334 : vector<2x16xf32>
    %336 = arith.negf %335 : vector<2x16xf32>
    %337 = math.exp %336 : vector<2x16xf32>
    %cst_81 = arith.constant 1.000000e+00 : f32
    %338 = vector.broadcast %cst_81 : f32 to vector<2x16xf32>
    %339 = arith.addf %338, %337 : vector<2x16xf32>
    %340 = arith.divf %338, %339 : vector<2x16xf32>
    %341 = vector.extract_strided_slice %331 {offsets = [0, 16], sizes = [2, 16], strides = [1, 1]} : vector<2x48xf32> to vector<2x16xf32>
    %342 = vector.extract_strided_slice %332 {offsets = [0, 16], sizes = [2, 16], strides = [1, 1]} : vector<2x48xf32> to vector<2x16xf32>
    %343 = arith.addf %341, %342 : vector<2x16xf32>
    %344 = arith.negf %343 : vector<2x16xf32>
    %345 = math.exp %344 : vector<2x16xf32>
    %cst_82 = arith.constant 1.000000e+00 : f32
    %346 = vector.broadcast %cst_82 : f32 to vector<2x16xf32>
    %347 = arith.addf %346, %345 : vector<2x16xf32>
    %348 = arith.divf %346, %347 : vector<2x16xf32>
    %349 = vector.extract_strided_slice %331 {offsets = [0, 32], sizes = [2, 16], strides = [1, 1]} : vector<2x48xf32> to vector<2x16xf32>
    %350 = vector.extract_strided_slice %332 {offsets = [0, 32], sizes = [2, 16], strides = [1, 1]} : vector<2x48xf32> to vector<2x16xf32>
    %351 = vector.broadcast %24 : vector<1x16xf32> to vector<2x16xf32>
    %352 = arith.addf %350, %351 : vector<2x16xf32>
    %353 = arith.mulf %340, %352 : vector<2x16xf32>
    %354 = arith.addf %349, %353 : vector<2x16xf32>
    %355 = math.tanh %354 : vector<2x16xf32>
    %cst_83 = arith.constant 1.000000e+00 : f32
    %356 = vector.broadcast %cst_83 : f32 to vector<2x16xf32>
    %357 = arith.subf %356, %348 : vector<2x16xf32>
    %358 = arith.mulf %357, %355 : vector<2x16xf32>
    %359 = arith.mulf %348, %292 : vector<2x16xf32>
    %360 = arith.addf %358, %359 : vector<2x16xf32>
    %c0_84 = arith.constant 0 : index
    %c4_85 = arith.constant 4 : index
    %c0_86 = arith.constant 0 : index
    %361 = vector.load %arg11[%c0_84, %c4_85, %c0_86] : memref<2x8x16xf32, #tpu.memory_space<vmem>>, vector<2x1x16xf32>
    %362 = vector.shape_cast %361 : vector<2x1x16xf32> to vector<2x16xf32>
    %363 = vector.shape_cast %329 : vector<2x16xf32> to vector<2x1x16xf32>
    tpu.vector_store %arg11[%c0_84, %c4_85, %c0_86], %363 {strides = array<i32>} : memref<2x8x16xf32, #tpu.memory_space<vmem>>, vector<2x1x16xf32>,
    %c0_87 = arith.constant 0 : index
    %c3_88 = arith.constant 3 : index
    %c0_89 = arith.constant 0 : index
    %364 = vector.load %arg12[%c0_87, %c3_88, %c0_89] : memref<2x8x16xf32, #tpu.memory_space<vmem>>, vector<2x1x16xf32>
    %365 = vector.shape_cast %364 : vector<2x1x16xf32> to vector<2x16xf32>
    %366 = vector.shape_cast %360 : vector<2x16xf32> to vector<2x1x16xf32>
    tpu.vector_store %arg12[%c0_87, %c3_88, %c0_89], %366 {strides = array<i32>} : memref<2x8x16xf32, #tpu.memory_space<vmem>>, vector<2x1x16xf32>,
    %367 = vector.extract_strided_slice %14 {offsets = [0, 5, 0], sizes = [2, 1, 48], strides = [1, 1, 1]} : vector<2x8x48xf32> to vector<2x1x48xf32>
    %368 = vector.shape_cast %367 : vector<2x1x48xf32> to vector<2x48xf32>
    %cst_90 = arith.constant dense<0.000000e+00> : vector<2x48xf32>
    %369 = tpu.matmul %329, %21, %cst_90 {dimension_numbers = #tpu.dot_dimension_numbers<[1], [0], [0], [1], [0, 0, 1, 1], [], []>} : vector<2x16xf32>, vector<16x48xf32>, vector<2x48xf32> -> vector<2x48xf32>
    %370 = vector.extract_strided_slice %368 {offsets = [0, 0], sizes = [2, 16], strides = [1, 1]} : vector<2x48xf32> to vector<2x16xf32>
    %371 = vector.extract_strided_slice %369 {offsets = [0, 0], sizes = [2, 16], strides = [1, 1]} : vector<2x48xf32> to vector<2x16xf32>
    %372 = arith.addf %370, %371 : vector<2x16xf32>
    %373 = arith.negf %372 : vector<2x16xf32>
    %374 = math.exp %373 : vector<2x16xf32>
    %cst_91 = arith.constant 1.000000e+00 : f32
    %375 = vector.broadcast %cst_91 : f32 to vector<2x16xf32>
    %376 = arith.addf %375, %374 : vector<2x16xf32>
    %377 = arith.divf %375, %376 : vector<2x16xf32>
    %378 = vector.extract_strided_slice %368 {offsets = [0, 16], sizes = [2, 16], strides = [1, 1]} : vector<2x48xf32> to vector<2x16xf32>
    %379 = vector.extract_strided_slice %369 {offsets = [0, 16], sizes = [2, 16], strides = [1, 1]} : vector<2x48xf32> to vector<2x16xf32>
    %380 = arith.addf %378, %379 : vector<2x16xf32>
    %381 = arith.negf %380 : vector<2x16xf32>
    %382 = math.exp %381 : vector<2x16xf32>
    %cst_92 = arith.constant 1.000000e+00 : f32
    %383 = vector.broadcast %cst_92 : f32 to vector<2x16xf32>
    %384 = arith.addf %383, %382 : vector<2x16xf32>
    %385 = arith.divf %383, %384 : vector<2x16xf32>
    %386 = vector.extract_strided_slice %368 {offsets = [0, 32], sizes = [2, 16], strides = [1, 1]} : vector<2x48xf32> to vector<2x16xf32>
    %387 = vector.extract_strided_slice %369 {offsets = [0, 32], sizes = [2, 16], strides = [1, 1]} : vector<2x48xf32> to vector<2x16xf32>
    %388 = vector.broadcast %23 : vector<1x16xf32> to vector<2x16xf32>
    %389 = arith.addf %387, %388 : vector<2x16xf32>
    %390 = arith.mulf %377, %389 : vector<2x16xf32>
    %391 = arith.addf %386, %390 : vector<2x16xf32>
    %392 = math.tanh %391 : vector<2x16xf32>
    %cst_93 = arith.constant 1.000000e+00 : f32
    %393 = vector.broadcast %cst_93 : f32 to vector<2x16xf32>
    %394 = arith.subf %393, %385 : vector<2x16xf32>
    %395 = arith.mulf %394, %392 : vector<2x16xf32>
    %396 = arith.mulf %385, %329 : vector<2x16xf32>
    %397 = arith.addf %395, %396 : vector<2x16xf32>
    %398 = vector.extract_strided_slice %20 {offsets = [0, 2, 0], sizes = [2, 1, 48], strides = [1, 1, 1]} : vector<2x8x48xf32> to vector<2x1x48xf32>
    %399 = vector.shape_cast %398 : vector<2x1x48xf32> to vector<2x48xf32>
    %cst_94 = arith.constant dense<0.000000e+00> : vector<2x48xf32>
    %400 = tpu.matmul %360, %22, %cst_94 {dimension_numbers = #tpu.dot_dimension_numbers<[1], [0], [0], [1], [0, 0, 1, 1], [], []>} : vector<2x16xf32>, vector<16x48xf32>, vector<2x48xf32> -> vector<2x48xf32>
    %401 = vector.extract_strided_slice %399 {offsets = [0, 0], sizes = [2, 16], strides = [1, 1]} : vector<2x48xf32> to vector<2x16xf32>
    %402 = vector.extract_strided_slice %400 {offsets = [0, 0], sizes = [2, 16], strides = [1, 1]} : vector<2x48xf32> to vector<2x16xf32>
    %403 = arith.addf %401, %402 : vector<2x16xf32>
    %404 = arith.negf %403 : vector<2x16xf32>
    %405 = math.exp %404 : vector<2x16xf32>
    %cst_95 = arith.constant 1.000000e+00 : f32
    %406 = vector.broadcast %cst_95 : f32 to vector<2x16xf32>
    %407 = arith.addf %406, %405 : vector<2x16xf32>
    %408 = arith.divf %406, %407 : vector<2x16xf32>
    %409 = vector.extract_strided_slice %399 {offsets = [0, 16], sizes = [2, 16], strides = [1, 1]} : vector<2x48xf32> to vector<2x16xf32>
    %410 = vector.extract_strided_slice %400 {offsets = [0, 16], sizes = [2, 16], strides = [1, 1]} : vector<2x48xf32> to vector<2x16xf32>
    %411 = arith.addf %409, %410 : vector<2x16xf32>
    %412 = arith.negf %411 : vector<2x16xf32>
    %413 = math.exp %412 : vector<2x16xf32>
    %cst_96 = arith.constant 1.000000e+00 : f32
    %414 = vector.broadcast %cst_96 : f32 to vector<2x16xf32>
    %415 = arith.addf %414, %413 : vector<2x16xf32>
    %416 = arith.divf %414, %415 : vector<2x16xf32>
    %417 = vector.extract_strided_slice %399 {offsets = [0, 32], sizes = [2, 16], strides = [1, 1]} : vector<2x48xf32> to vector<2x16xf32>
    %418 = vector.extract_strided_slice %400 {offsets = [0, 32], sizes = [2, 16], strides = [1, 1]} : vector<2x48xf32> to vector<2x16xf32>
    %419 = vector.broadcast %24 : vector<1x16xf32> to vector<2x16xf32>
    %420 = arith.addf %418, %419 : vector<2x16xf32>
    %421 = arith.mulf %408, %420 : vector<2x16xf32>
    %422 = arith.addf %417, %421 : vector<2x16xf32>
    %423 = math.tanh %422 : vector<2x16xf32>
    %cst_97 = arith.constant 1.000000e+00 : f32
    %424 = vector.broadcast %cst_97 : f32 to vector<2x16xf32>
    %425 = arith.subf %424, %416 : vector<2x16xf32>
    %426 = arith.mulf %425, %423 : vector<2x16xf32>
    %427 = arith.mulf %416, %360 : vector<2x16xf32>
    %428 = arith.addf %426, %427 : vector<2x16xf32>
    %c0_98 = arith.constant 0 : index
    %c5_99 = arith.constant 5 : index
    %c0_100 = arith.constant 0 : index
    %429 = vector.load %arg11[%c0_98, %c5_99, %c0_100] : memref<2x8x16xf32, #tpu.memory_space<vmem>>, vector<2x1x16xf32>
    %430 = vector.shape_cast %429 : vector<2x1x16xf32> to vector<2x16xf32>
    %431 = vector.shape_cast %397 : vector<2x16xf32> to vector<2x1x16xf32>
    tpu.vector_store %arg11[%c0_98, %c5_99, %c0_100], %431 {strides = array<i32>} : memref<2x8x16xf32, #tpu.memory_space<vmem>>, vector<2x1x16xf32>,
    %c0_101 = arith.constant 0 : index
    %c2_102 = arith.constant 2 : index
    %c0_103 = arith.constant 0 : index
    %432 = vector.load %arg12[%c0_101, %c2_102, %c0_103] : memref<2x8x16xf32, #tpu.memory_space<vmem>>, vector<2x1x16xf32>
    %433 = vector.shape_cast %432 : vector<2x1x16xf32> to vector<2x16xf32>
    %434 = vector.shape_cast %428 : vector<2x16xf32> to vector<2x1x16xf32>
    tpu.vector_store %arg12[%c0_101, %c2_102, %c0_103], %434 {strides = array<i32>} : memref<2x8x16xf32, #tpu.memory_space<vmem>>, vector<2x1x16xf32>,
    %435 = vector.extract_strided_slice %14 {offsets = [0, 6, 0], sizes = [2, 1, 48], strides = [1, 1, 1]} : vector<2x8x48xf32> to vector<2x1x48xf32>
    %436 = vector.shape_cast %435 : vector<2x1x48xf32> to vector<2x48xf32>
    %cst_104 = arith.constant dense<0.000000e+00> : vector<2x48xf32>
    %437 = tpu.matmul %397, %21, %cst_104 {dimension_numbers = #tpu.dot_dimension_numbers<[1], [0], [0], [1], [0, 0, 1, 1], [], []>} : vector<2x16xf32>, vector<16x48xf32>, vector<2x48xf32> -> vector<2x48xf32>
    %438 = vector.extract_strided_slice %436 {offsets = [0, 0], sizes = [2, 16], strides = [1, 1]} : vector<2x48xf32> to vector<2x16xf32>
    %439 = vector.extract_strided_slice %437 {offsets = [0, 0], sizes = [2, 16], strides = [1, 1]} : vector<2x48xf32> to vector<2x16xf32>
    %440 = arith.addf %438, %439 : vector<2x16xf32>
    %441 = arith.negf %440 : vector<2x16xf32>
    %442 = math.exp %441 : vector<2x16xf32>
    %cst_105 = arith.constant 1.000000e+00 : f32
    %443 = vector.broadcast %cst_105 : f32 to vector<2x16xf32>
    %444 = arith.addf %443, %442 : vector<2x16xf32>
    %445 = arith.divf %443, %444 : vector<2x16xf32>
    %446 = vector.extract_strided_slice %436 {offsets = [0, 16], sizes = [2, 16], strides = [1, 1]} : vector<2x48xf32> to vector<2x16xf32>
    %447 = vector.extract_strided_slice %437 {offsets = [0, 16], sizes = [2, 16], strides = [1, 1]} : vector<2x48xf32> to vector<2x16xf32>
    %448 = arith.addf %446, %447 : vector<2x16xf32>
    %449 = arith.negf %448 : vector<2x16xf32>
    %450 = math.exp %449 : vector<2x16xf32>
    %cst_106 = arith.constant 1.000000e+00 : f32
    %451 = vector.broadcast %cst_106 : f32 to vector<2x16xf32>
    %452 = arith.addf %451, %450 : vector<2x16xf32>
    %453 = arith.divf %451, %452 : vector<2x16xf32>
    %454 = vector.extract_strided_slice %436 {offsets = [0, 32], sizes = [2, 16], strides = [1, 1]} : vector<2x48xf32> to vector<2x16xf32>
    %455 = vector.extract_strided_slice %437 {offsets = [0, 32], sizes = [2, 16], strides = [1, 1]} : vector<2x48xf32> to vector<2x16xf32>
    %456 = vector.broadcast %23 : vector<1x16xf32> to vector<2x16xf32>
    %457 = arith.addf %455, %456 : vector<2x16xf32>
    %458 = arith.mulf %445, %457 : vector<2x16xf32>
    %459 = arith.addf %454, %458 : vector<2x16xf32>
    %460 = math.tanh %459 : vector<2x16xf32>
    %cst_107 = arith.constant 1.000000e+00 : f32
    %461 = vector.broadcast %cst_107 : f32 to vector<2x16xf32>
    %462 = arith.subf %461, %453 : vector<2x16xf32>
    %463 = arith.mulf %462, %460 : vector<2x16xf32>
    %464 = arith.mulf %453, %397 : vector<2x16xf32>
    %465 = arith.addf %463, %464 : vector<2x16xf32>
    %466 = vector.extract_strided_slice %20 {offsets = [0, 1, 0], sizes = [2, 1, 48], strides = [1, 1, 1]} : vector<2x8x48xf32> to vector<2x1x48xf32>
    %467 = vector.shape_cast %466 : vector<2x1x48xf32> to vector<2x48xf32>
    %cst_108 = arith.constant dense<0.000000e+00> : vector<2x48xf32>
    %468 = tpu.matmul %428, %22, %cst_108 {dimension_numbers = #tpu.dot_dimension_numbers<[1], [0], [0], [1], [0, 0, 1, 1], [], []>} : vector<2x16xf32>, vector<16x48xf32>, vector<2x48xf32> -> vector<2x48xf32>
    %469 = vector.extract_strided_slice %467 {offsets = [0, 0], sizes = [2, 16], strides = [1, 1]} : vector<2x48xf32> to vector<2x16xf32>
    %470 = vector.extract_strided_slice %468 {offsets = [0, 0], sizes = [2, 16], strides = [1, 1]} : vector<2x48xf32> to vector<2x16xf32>
    %471 = arith.addf %469, %470 : vector<2x16xf32>
    %472 = arith.negf %471 : vector<2x16xf32>
    %473 = math.exp %472 : vector<2x16xf32>
    %cst_109 = arith.constant 1.000000e+00 : f32
    %474 = vector.broadcast %cst_109 : f32 to vector<2x16xf32>
    %475 = arith.addf %474, %473 : vector<2x16xf32>
    %476 = arith.divf %474, %475 : vector<2x16xf32>
    %477 = vector.extract_strided_slice %467 {offsets = [0, 16], sizes = [2, 16], strides = [1, 1]} : vector<2x48xf32> to vector<2x16xf32>
    %478 = vector.extract_strided_slice %468 {offsets = [0, 16], sizes = [2, 16], strides = [1, 1]} : vector<2x48xf32> to vector<2x16xf32>
    %479 = arith.addf %477, %478 : vector<2x16xf32>
    %480 = arith.negf %479 : vector<2x16xf32>
    %481 = math.exp %480 : vector<2x16xf32>
    %cst_110 = arith.constant 1.000000e+00 : f32
    %482 = vector.broadcast %cst_110 : f32 to vector<2x16xf32>
    %483 = arith.addf %482, %481 : vector<2x16xf32>
    %484 = arith.divf %482, %483 : vector<2x16xf32>
    %485 = vector.extract_strided_slice %467 {offsets = [0, 32], sizes = [2, 16], strides = [1, 1]} : vector<2x48xf32> to vector<2x16xf32>
    %486 = vector.extract_strided_slice %468 {offsets = [0, 32], sizes = [2, 16], strides = [1, 1]} : vector<2x48xf32> to vector<2x16xf32>
    %487 = vector.broadcast %24 : vector<1x16xf32> to vector<2x16xf32>
    %488 = arith.addf %486, %487 : vector<2x16xf32>
    %489 = arith.mulf %476, %488 : vector<2x16xf32>
    %490 = arith.addf %485, %489 : vector<2x16xf32>
    %491 = math.tanh %490 : vector<2x16xf32>
    %cst_111 = arith.constant 1.000000e+00 : f32
    %492 = vector.broadcast %cst_111 : f32 to vector<2x16xf32>
    %493 = arith.subf %492, %484 : vector<2x16xf32>
    %494 = arith.mulf %493, %491 : vector<2x16xf32>
    %495 = arith.mulf %484, %428 : vector<2x16xf32>
    %496 = arith.addf %494, %495 : vector<2x16xf32>
    %c0_112 = arith.constant 0 : index
    %c6_113 = arith.constant 6 : index
    %c0_114 = arith.constant 0 : index
    %497 = vector.load %arg11[%c0_112, %c6_113, %c0_114] : memref<2x8x16xf32, #tpu.memory_space<vmem>>, vector<2x1x16xf32>
    %498 = vector.shape_cast %497 : vector<2x1x16xf32> to vector<2x16xf32>
    %499 = vector.shape_cast %465 : vector<2x16xf32> to vector<2x1x16xf32>
    tpu.vector_store %arg11[%c0_112, %c6_113, %c0_114], %499 {strides = array<i32>} : memref<2x8x16xf32, #tpu.memory_space<vmem>>, vector<2x1x16xf32>,
    %c0_115 = arith.constant 0 : index
    %c1_116 = arith.constant 1 : index
    %c0_117 = arith.constant 0 : index
    %500 = vector.load %arg12[%c0_115, %c1_116, %c0_117] : memref<2x8x16xf32, #tpu.memory_space<vmem>>, vector<2x1x16xf32>
    %501 = vector.shape_cast %500 : vector<2x1x16xf32> to vector<2x16xf32>
    %502 = vector.shape_cast %496 : vector<2x16xf32> to vector<2x1x16xf32>
    tpu.vector_store %arg12[%c0_115, %c1_116, %c0_117], %502 {strides = array<i32>} : memref<2x8x16xf32, #tpu.memory_space<vmem>>, vector<2x1x16xf32>,
    %503 = vector.extract_strided_slice %14 {offsets = [0, 7, 0], sizes = [2, 1, 48], strides = [1, 1, 1]} : vector<2x8x48xf32> to vector<2x1x48xf32>
    %504 = vector.shape_cast %503 : vector<2x1x48xf32> to vector<2x48xf32>
    %cst_118 = arith.constant dense<0.000000e+00> : vector<2x48xf32>
    %505 = tpu.matmul %465, %21, %cst_118 {dimension_numbers = #tpu.dot_dimension_numbers<[1], [0], [0], [1], [0, 0, 1, 1], [], []>} : vector<2x16xf32>, vector<16x48xf32>, vector<2x48xf32> -> vector<2x48xf32>
    %506 = vector.extract_strided_slice %504 {offsets = [0, 0], sizes = [2, 16], strides = [1, 1]} : vector<2x48xf32> to vector<2x16xf32>
    %507 = vector.extract_strided_slice %505 {offsets = [0, 0], sizes = [2, 16], strides = [1, 1]} : vector<2x48xf32> to vector<2x16xf32>
    %508 = arith.addf %506, %507 : vector<2x16xf32>
    %509 = arith.negf %508 : vector<2x16xf32>
    %510 = math.exp %509 : vector<2x16xf32>
    %cst_119 = arith.constant 1.000000e+00 : f32
    %511 = vector.broadcast %cst_119 : f32 to vector<2x16xf32>
    %512 = arith.addf %511, %510 : vector<2x16xf32>
    %513 = arith.divf %511, %512 : vector<2x16xf32>
    %514 = vector.extract_strided_slice %504 {offsets = [0, 16], sizes = [2, 16], strides = [1, 1]} : vector<2x48xf32> to vector<2x16xf32>
    %515 = vector.extract_strided_slice %505 {offsets = [0, 16], sizes = [2, 16], strides = [1, 1]} : vector<2x48xf32> to vector<2x16xf32>
    %516 = arith.addf %514, %515 : vector<2x16xf32>
    %517 = arith.negf %516 : vector<2x16xf32>
    %518 = math.exp %517 : vector<2x16xf32>
    %cst_120 = arith.constant 1.000000e+00 : f32
    %519 = vector.broadcast %cst_120 : f32 to vector<2x16xf32>
    %520 = arith.addf %519, %518 : vector<2x16xf32>
    %521 = arith.divf %519, %520 : vector<2x16xf32>
    %522 = vector.extract_strided_slice %504 {offsets = [0, 32], sizes = [2, 16], strides = [1, 1]} : vector<2x48xf32> to vector<2x16xf32>
    %523 = vector.extract_strided_slice %505 {offsets = [0, 32], sizes = [2, 16], strides = [1, 1]} : vector<2x48xf32> to vector<2x16xf32>
    %524 = vector.broadcast %23 : vector<1x16xf32> to vector<2x16xf32>
    %525 = arith.addf %523, %524 : vector<2x16xf32>
    %526 = arith.mulf %513, %525 : vector<2x16xf32>
    %527 = arith.addf %522, %526 : vector<2x16xf32>
    %528 = math.tanh %527 : vector<2x16xf32>
    %cst_121 = arith.constant 1.000000e+00 : f32
    %529 = vector.broadcast %cst_121 : f32 to vector<2x16xf32>
    %530 = arith.subf %529, %521 : vector<2x16xf32>
    %531 = arith.mulf %530, %528 : vector<2x16xf32>
    %532 = arith.mulf %521, %465 : vector<2x16xf32>
    %533 = arith.addf %531, %532 : vector<2x16xf32>
    %534 = vector.extract_strided_slice %20 {offsets = [0, 0, 0], sizes = [2, 1, 48], strides = [1, 1, 1]} : vector<2x8x48xf32> to vector<2x1x48xf32>
    %535 = vector.shape_cast %534 : vector<2x1x48xf32> to vector<2x48xf32>
    %cst_122 = arith.constant dense<0.000000e+00> : vector<2x48xf32>
    %536 = tpu.matmul %496, %22, %cst_122 {dimension_numbers = #tpu.dot_dimension_numbers<[1], [0], [0], [1], [0, 0, 1, 1], [], []>} : vector<2x16xf32>, vector<16x48xf32>, vector<2x48xf32> -> vector<2x48xf32>
    %537 = vector.extract_strided_slice %535 {offsets = [0, 0], sizes = [2, 16], strides = [1, 1]} : vector<2x48xf32> to vector<2x16xf32>
    %538 = vector.extract_strided_slice %536 {offsets = [0, 0], sizes = [2, 16], strides = [1, 1]} : vector<2x48xf32> to vector<2x16xf32>
    %539 = arith.addf %537, %538 : vector<2x16xf32>
    %540 = arith.negf %539 : vector<2x16xf32>
    %541 = math.exp %540 : vector<2x16xf32>
    %cst_123 = arith.constant 1.000000e+00 : f32
    %542 = vector.broadcast %cst_123 : f32 to vector<2x16xf32>
    %543 = arith.addf %542, %541 : vector<2x16xf32>
    %544 = arith.divf %542, %543 : vector<2x16xf32>
    %545 = vector.extract_strided_slice %535 {offsets = [0, 16], sizes = [2, 16], strides = [1, 1]} : vector<2x48xf32> to vector<2x16xf32>
    %546 = vector.extract_strided_slice %536 {offsets = [0, 16], sizes = [2, 16], strides = [1, 1]} : vector<2x48xf32> to vector<2x16xf32>
    %547 = arith.addf %545, %546 : vector<2x16xf32>
    %548 = arith.negf %547 : vector<2x16xf32>
    %549 = math.exp %548 : vector<2x16xf32>
    %cst_124 = arith.constant 1.000000e+00 : f32
    %550 = vector.broadcast %cst_124 : f32 to vector<2x16xf32>
    %551 = arith.addf %550, %549 : vector<2x16xf32>
    %552 = arith.divf %550, %551 : vector<2x16xf32>
    %553 = vector.extract_strided_slice %535 {offsets = [0, 32], sizes = [2, 16], strides = [1, 1]} : vector<2x48xf32> to vector<2x16xf32>
    %554 = vector.extract_strided_slice %536 {offsets = [0, 32], sizes = [2, 16], strides = [1, 1]} : vector<2x48xf32> to vector<2x16xf32>
    %555 = vector.broadcast %24 : vector<1x16xf32> to vector<2x16xf32>
    %556 = arith.addf %554, %555 : vector<2x16xf32>
    %557 = arith.mulf %544, %556 : vector<2x16xf32>
    %558 = arith.addf %553, %557 : vector<2x16xf32>
    %559 = math.tanh %558 : vector<2x16xf32>
    %cst_125 = arith.constant 1.000000e+00 : f32
    %560 = vector.broadcast %cst_125 : f32 to vector<2x16xf32>
    %561 = arith.subf %560, %552 : vector<2x16xf32>
    %562 = arith.mulf %561, %559 : vector<2x16xf32>
    %563 = arith.mulf %552, %496 : vector<2x16xf32>
    %564 = arith.addf %562, %563 : vector<2x16xf32>
    %c0_126 = arith.constant 0 : index
    %c7_127 = arith.constant 7 : index
    %c0_128 = arith.constant 0 : index
    %565 = vector.load %arg11[%c0_126, %c7_127, %c0_128] : memref<2x8x16xf32, #tpu.memory_space<vmem>>, vector<2x1x16xf32>
    %566 = vector.shape_cast %565 : vector<2x1x16xf32> to vector<2x16xf32>
    %567 = vector.shape_cast %533 : vector<2x16xf32> to vector<2x1x16xf32>
    tpu.vector_store %arg11[%c0_126, %c7_127, %c0_128], %567 {strides = array<i32>} : memref<2x8x16xf32, #tpu.memory_space<vmem>>, vector<2x1x16xf32>,
    %c0_129 = arith.constant 0 : index
    %c0_130 = arith.constant 0 : index
    %c0_131 = arith.constant 0 : index
    %568 = vector.load %arg12[%c0_129, %c0_130, %c0_131] : memref<2x8x16xf32, #tpu.memory_space<vmem>>, vector<2x1x16xf32>
    %569 = vector.shape_cast %568 : vector<2x1x16xf32> to vector<2x16xf32>
    %570 = vector.shape_cast %564 : vector<2x16xf32> to vector<2x1x16xf32>
    tpu.vector_store %arg12[%c0_129, %c0_130, %c0_131], %570 {strides = array<i32>} : memref<2x8x16xf32, #tpu.memory_space<vmem>>, vector<2x1x16xf32>,
    %c0_132 = arith.constant 0 : index
    %c0_133 = arith.constant 0 : index
    %571 = vector.load %arg13[%c0_132, %c0_133] : memref<2x16xf32, #tpu.memory_space<vmem>>, vector<2x16xf32>
    tpu.vector_store %arg13[%c0_132, %c0_133], %533 {strides = array<i32>} : memref<2x16xf32, #tpu.memory_space<vmem>>, vector<2x16xf32>,
    %c0_134 = arith.constant 0 : index
    %c0_135 = arith.constant 0 : index
    %572 = vector.load %arg14[%c0_134, %c0_135] : memref<2x16xf32, #tpu.memory_space<vmem>>, vector<2x16xf32>
    tpu.vector_store %arg14[%c0_134, %c0_135], %564 {strides = array<i32>} : memref<2x16xf32, #tpu.memory_space<vmem>>, vector<2x16xf32>,
    return
  }
  func.func @transform_0(%arg0: i32) -> (i32, i32, i32) {
    %c0_i32 = arith.constant 0 : i32
    %c0_i32_0 = arith.constant 0 : i32
    %c0_i32_1 = arith.constant 0 : i32
    return %c0_i32, %arg0, %c0_i32_0 : i32, i32, i32
  }
  func.func @transform_1(%arg0: i32) -> (i32, i32, i32) {
    %c0_i32 = arith.constant 0 : i32
    %0 = arith.subi %c0_i32, %arg0 : i32
    %c0_i32_0 = arith.constant 0 : i32
    %c0_i32_1 = arith.constant 0 : i32
    %c0_i32_2 = arith.constant 0 : i32
    return %c0_i32_0, %0, %c0_i32_1 : i32, i32, i32
  }
  func.func @transform_2(%arg0: i32) -> (i32, i32) {
    %c0_i32 = arith.constant 0 : i32
    %c0_i32_0 = arith.constant 0 : i32
    %c0_i32_1 = arith.constant 0 : i32
    return %c0_i32, %c0_i32_0 : i32, i32
  }
  func.func @transform_3(%arg0: i32) -> (i32, i32) {
    %c0_i32 = arith.constant 0 : i32
    %c0_i32_0 = arith.constant 0 : i32
    %c0_i32_1 = arith.constant 0 : i32
    return %c0_i32, %c0_i32_0 : i32, i32
  }
  func.func @transform_4(%arg0: i32) -> (i32, i32) {
    %c0_i32 = arith.constant 0 : i32
    %c0_i32_0 = arith.constant 0 : i32
    %c0_i32_1 = arith.constant 0 : i32
    return %c0_i32, %c0_i32_0 : i32, i32
  }
  func.func @transform_5(%arg0: i32) -> (i32, i32) {
    %c0_i32 = arith.constant 0 : i32
    %c0_i32_0 = arith.constant 0 : i32
    %c0_i32_1 = arith.constant 0 : i32
    return %c0_i32, %c0_i32_0 : i32, i32
  }
  func.func @transform_6(%arg0: i32) -> (i32, i32) {
    %c0_i32 = arith.constant 0 : i32
    %c0_i32_0 = arith.constant 0 : i32
    %c0_i32_1 = arith.constant 0 : i32
    return %c0_i32, %c0_i32_0 : i32, i32
  }
  func.func @transform_7(%arg0: i32) -> (i32, i32) {
    %c0_i32 = arith.constant 0 : i32
    %c0_i32_0 = arith.constant 0 : i32
    %c0_i32_1 = arith.constant 0 : i32
    return %c0_i32, %c0_i32_0 : i32, i32
  }
  func.func @transform_8(%arg0: i32) -> (i32, i32) {
    %c0_i32 = arith.constant 0 : i32
    %c0_i32_0 = arith.constant 0 : i32
    %c0_i32_1 = arith.constant 0 : i32
    return %c0_i32, %c0_i32_0 : i32, i32
  }
  func.func @transform_9(%arg0: i32) -> (i32, i32) {
    %c0_i32 = arith.constant 0 : i32
    %c0_i32_0 = arith.constant 0 : i32
    %c0_i32_1 = arith.constant 0 : i32
    return %c0_i32, %c0_i32_0 : i32, i32
  }
  func.func @transform_10(%arg0: i32) -> (i32, i32, i32) {
    %c0_i32 = arith.constant 0 : i32
    %c0_i32_0 = arith.constant 0 : i32
    %c0_i32_1 = arith.constant 0 : i32
    return %c0_i32, %arg0, %c0_i32_0 : i32, i32, i32
  }
  func.func @transform_11(%arg0: i32) -> (i32, i32, i32) {
    %c0_i32 = arith.constant 0 : i32
    %0 = arith.subi %c0_i32, %arg0 : i32
    %c0_i32_0 = arith.constant 0 : i32
    %c0_i32_1 = arith.constant 0 : i32
    %c0_i32_2 = arith.constant 0 : i32
    return %c0_i32_0, %0, %c0_i32_1 : i32, i32, i32
  }
}

</mosaic_0001>

<llo_original>
// kernel: tpu_custom_call.1
$region0: #{tpu_custom_call.1}
  #allocation0 [shape = 'u32[]', space=smem, size = 0x4, offset = 0x4, fixed_abs, tag = 'smem constant byte address 0x4 - core index']
  #allocation1 [shape = 'u32[72,128]{1,0:T(1,128)}', space=vmem, size = 0x9000, scoped, tag = 'internal scratch']
  #allocation2 [shape = 'f32[2,16]{1,0:T(2,128)}', space=vmem, size = 0x400, scoped, tag = 'scratch operand']
  #allocation3 [shape = 'f32[2,16]{1,0:T(2,128)}', space=vmem, size = 0x400, scoped, tag = 'scratch operand']
  %s0 = inlined_call_operand.vmem [shape: f32[2,8,6], index: 0, kind: input, shape index: {}]
  %s1 = inlined_call_operand.vmem [shape: f32[2,8,6], index: 1, kind: input, shape index: {}]
  %s2 = inlined_call_operand.vmem [shape: bf16[6,48], index: 2, kind: input, shape index: {}]
  %s3 = inlined_call_operand.vmem [shape: f32[16,48], index: 3, kind: input, shape index: {}]
  %s4 = inlined_call_operand.vmem [shape: f32[1,48], index: 4, kind: input, shape index: {}]
  %s5 = inlined_call_operand.vmem [shape: f32[1,16], index: 5, kind: input, shape index: {}]
  %s6 = inlined_call_operand.vmem [shape: bf16[6,48], index: 6, kind: input, shape index: {}]
  %s7 = inlined_call_operand.vmem [shape: f32[16,48], index: 7, kind: input, shape index: {}]
  %s8 = inlined_call_operand.vmem [shape: f32[1,48], index: 8, kind: input, shape index: {}]
  %s9 = inlined_call_operand.vmem [shape: f32[1,16], index: 9, kind: input, shape index: {}]
  %s10 = inlined_call_operand.hbm [shape: f32[2,8,16], index: 10, kind: output, shape index: {0}]
  %s11 = inlined_call_operand.hbm [shape: f32[2,8,16], index: 11, kind: output, shape index: {1}]
  %12 = xla_tuple %s10, %s11
  %s13 = sld [smem:[#allocation0]]
  $region62: #{tpu_custom_call.1} parent=0
    _
  %s15 = ssub.s32 1, %s13
  %s16 = scalar_select 0, %s15, %s13
  $region1: #{tpu_custom_call.1} parent=0
    #allocation4 [shape = 'u8[8192]{0}', space=vmem, size = 0x2000, scoped, tag = 'output window, operand 0, single buffered']
    #allocation5 [shape = 's32[1]{0}', space=sflag, size = 0x4, scoped, tag = 'scoped memory for tpu_custom_call.1']
    #allocation6 [shape = 'u8[8192]{0}', space=vmem, size = 0x2000, scoped, tag = 'output window, operand 1, single buffered']
    #allocation7 [shape = 's32[1]{0}', space=sflag, size = 0x4, scoped, tag = 'scoped memory for tpu_custom_call.1']
    %17 = vsyncpa [#allocation5], 0
    %18 = vsyncpa [#allocation7], 0
    // Predicated region
    $region2: #{tpu_custom_call.1} parent=1 // pred_check
      _
    $region3: #{tpu_custom_call.1} parent=1 // pred_check_branch
      %20 = sbr.rel (0) target = $region5
    $region4: #{tpu_custom_call.1} parent=1 // pred_region
      _
    $region5: #{tpu_custom_call.1} parent=1 // pred_fallthru
      _
    // Predicated region
    $region6: #{tpu_custom_call.1} parent=1 // pred_check
      _
    $region7: #{tpu_custom_call.1} parent=1 // pred_check_branch
      %22 = sbr.rel (0) target = $region9
    $region8: #{tpu_custom_call.1} parent=1 // pred_region
      %s23 = ssub.s32 0, 0
      %p24 = scmp.lt.s32.totalorder %s23, 0
      %s25 = scalar_select %p24, %s23, 0
      %s26 = smul.addr %s25, 8
      %s27 = scalar_lea.vmem %s1, %s26
      %s28 = ssub.s32 0, 0
    $region9: #{tpu_custom_call.1} parent=1 // pred_fallthru
      _
    // Predicated region
    $region10: #{tpu_custom_call.1} parent=1 // pred_check
      _
    $region11: #{tpu_custom_call.1} parent=1 // pred_check_branch
      %30 = sbr.rel (0) target = $region13
    $region12: #{tpu_custom_call.1} parent=1 // pred_region
      _
    $region13: #{tpu_custom_call.1} parent=1 // pred_fallthru
      _
    // Predicated region
    $region14: #{tpu_custom_call.1} parent=1 // pred_check
      _
    $region15: #{tpu_custom_call.1} parent=1 // pred_check_branch
      %32 = sbr.rel (0) target = $region17
    $region16: #{tpu_custom_call.1} parent=1 // pred_region
      _
    $region17: #{tpu_custom_call.1} parent=1 // pred_fallthru
      _
    // Predicated region
    $region18: #{tpu_custom_call.1} parent=1 // pred_check
      _
    $region19: #{tpu_custom_call.1} parent=1 // pred_check_branch
      %34 = sbr.rel (0) target = $region21
    $region20: #{tpu_custom_call.1} parent=1 // pred_region
      _
    $region21: #{tpu_custom_call.1} parent=1 // pred_fallthru
      _
    // Predicated region
    $region22: #{tpu_custom_call.1} parent=1 // pred_check
      _
    $region23: #{tpu_custom_call.1} parent=1 // pred_check_branch
      %36 = sbr.rel (0) target = $region25
    $region24: #{tpu_custom_call.1} parent=1 // pred_region
      _
    $region25: #{tpu_custom_call.1} parent=1 // pred_fallthru
      _
    // Predicated region
    $region26: #{tpu_custom_call.1} parent=1 // pred_check
      _
    $region27: #{tpu_custom_call.1} parent=1 // pred_check_branch
      %38 = sbr.rel (0) target = $region29
    $region28: #{tpu_custom_call.1} parent=1 // pred_region
      _
    $region29: #{tpu_custom_call.1} parent=1 // pred_fallthru
      _
    // Predicated region
    $region30: #{tpu_custom_call.1} parent=1 // pred_check
      _
    $region31: #{tpu_custom_call.1} parent=1 // pred_check_branch
      %40 = sbr.rel (0) target = $region33
    $region32: #{tpu_custom_call.1} parent=1 // pred_region
      _
    $region33: #{tpu_custom_call.1} parent=1 // pred_fallthru
      _
    // Predicated region
    $region34: #{tpu_custom_call.1} parent=1 // pred_check
      _
    $region35: #{tpu_custom_call.1} parent=1 // pred_check_branch
      %42 = sbr.rel (0) target = $region37
    $region36: #{tpu_custom_call.1} parent=1 // pred_region
      _
    $region37: #{tpu_custom_call.1} parent=1 // pred_fallthru
      _
    // Predicated region
    $region38: #{tpu_custom_call.1} parent=1 // pred_check
      _
    $region39: #{tpu_custom_call.1} parent=1 // pred_check_branch
      %44 = sbr.rel (0) target = $region41
    $region40: #{tpu_custom_call.1} parent=1 // pred_region
      _
    $region41: #{tpu_custom_call.1} parent=1 // pred_fallthru
      _
    %s45 = ssub.s32 0, 0
    %p46 = scmp.lt.s32.totalorder %s45, 0
    %s47 = scalar_select %p46, %s45, 0
    %s48 = smul.addr %s47, 8
    %s49 = scalar_lea.vmem %s1, %s48
    %s50 = ssub.s32 0, 0
    %p51 = scmp.lt.s32.totalorder %s50, 0
    %s52 = scalar_select %p51, %s50, 0
    %s53 = smul.addr %s52, 8
    %s54 = scalar_lea.vmem %s1, %s53
    %s55 = ssub.s32 0, 0
    %s56 = ssub.s32 0, 0
    %p58 = scmp.eq.s32.totalorder 0, 0
    // Predicated region
    $region42: #{tpu_custom_call.1} parent=1 // pred_check
      %p59 = pneg %p58
    $region43: #{tpu_custom_call.1} parent=1 // pred_check_branch
      %61 = sbr.rel (%p59) target = $region45
    $region44: #{tpu_custom_call.1} parent=1 // pred_region
      %vm62 = vcmask 123904
      %63 = vst.msk [vmem:[#allocation2] sm:$0x3] %vm62, 0.0
      %64 = vst.msk [vmem:[#allocation3] sm:$0x3] %vm62, 0.0
    $region45: #{tpu_custom_call.1} parent=1 // pred_fallthru
      _
    %v65 = vld [vmem:[%s0] sm:$0xff]
    %v66 = vld [vmem:[%s0 + $0x8] sm:$0xff]
    %v67 = vpack.c.bf16 %v66, %v65
    %v68 = vld [vmem:[%s54] sm:$0xff]
    %v69 = vld [vmem:[%s54 + $0x8] sm:$0xff]
    %v70 = vpack.c.bf16 %v69, %v68
    %v71 = vld [vmem:[%s2] sm:$0x7]
    %v72 = vld [vmem:[%s4] sm:$0x1]
    %v74 = vperm.slane %v72, 0
    %vm76 = vcmask 48128
    %v78 = vsel %vm76, %v67, 0
    %vm80 = vcmask 1042432
    %v82 = vsel %vm80, %v71, 0
    %84 = vmatpush.bf16.msra.mxu0 0
    %85 = vmatpush.bf16.msra.mxu0 0
    %86 = vmatpush.bf16.msra.mxu0 0
    %87 = vmatpush.bf16.msra.mxu0 0
    %88 = vmatpush.bf16.msra.mxu0 0
    %89 = vmatpush.bf16.msra.mxu0 0
    %90 = vmatpush.bf16.msra.mxu0 0
    %91 = vmatpush.bf16.msra.mxu0 %v82
    %92 = vmatmul.bf16.gmra.mxu0 %v78
    %v93 = vpop.f32.mrf.mxu0
    %v94 = vadd.f32 %v74, %v93
    %v95 = vpop.f32.mrf.mxu0
    %v96 = vadd.f32 %v74, %v95
    %97 = vdwg.mxu0
    %v98 = vld [vmem:[%s6] sm:$0x7]
    %v99 = vld [vmem:[%s8] sm:$0x1]
    %v101 = vperm.slane %v99, 0
    %v104 = vsel %vm76, %v70, 0
    %v107 = vsel %vm80, %v98, 0
    %109 = vmatpush.bf16.msra.mxu0 0
    %110 = vmatpush.bf16.msra.mxu0 0
    %111 = vmatpush.bf16.msra.mxu0 0
    %112 = vmatpush.bf16.msra.mxu0 0
    %113 = vmatpush.bf16.msra.mxu0 0
    %114 = vmatpush.bf16.msra.mxu0 0
    %115 = vmatpush.bf16.msra.mxu0 0
    %116 = vmatpush.bf16.msra.mxu0 %v107
    %117 = vmatmul.bf16.gmra.mxu0 %v104
    %v118 = vpop.f32.mrf.mxu0
    %v119 = vadd.f32 %v101, %v118
    %v120 = vpop.f32.mrf.mxu0
    %v121 = vadd.f32 %v101, %v120
    %122 = vdwg.mxu0
    %v123 = vld [vmem:[%s3] sm:$0xff]
    %v124 = vld [vmem:[%s3 + $0x8] sm:$0xff]
    %v125 = vld [vmem:[%s7] sm:$0xff]
    %v126 = vld [vmem:[%s7 + $0x8] sm:$0xff]
    %v127 = vld [vmem:[%s5] sm:$0x1]
    %v128 = vld [vmem:[%s9] sm:$0x1]
    %v129 = vld [vmem:[#allocation2] sm:$0x3]
    %v130 = vld [vmem:[#allocation3] sm:$0x3]
    %vm131 = vcmask 130048
    %v133 = vsel %vm131, %v129, 0
    %135 = vmatpush.msra.mxu0 0.0
    %136 = vmatpush.msra.mxu0 0.0
    %137 = vmatpush.msra.mxu0 0.0
    %138 = vmatpush.msra.mxu0 0.0
    %139 = vmatpush.msra.mxu0 0.0
    %140 = vmatpush.msra.mxu0 0.0
    %141 = vmatpush.msra.mxu0 0.0
    %142 = vmatpush.msra.mxu0 0.0
    %143 = vmatpush.msra.mxu0 0.0
    %144 = vmatpush.msra.mxu0 0.0
    %145 = vmatpush.msra.mxu0 0.0
    %146 = vmatpush.msra.mxu0 0.0
    %147 = vmatpush.msra.mxu0 0.0
    %148 = vmatpush.msra.mxu0 0.0
    %149 = vmatpush.msra.mxu0 %v124
    %150 = vmatpush.msra.mxu0 %v123
    %151 = vmatmul.f32.gmra.mxu0 %v133
    %v152 = vpop.f32.mrf.mxu0
    %v153 = vadd.f32 0.0, %v152
    %154 = vdwg.mxu0
    %v156 = vrot.slane %v153, 1
    %v159 = vadd.f32 %v94, %v153
    %v160 = vadd.f32 %v96, %v156
    %v161 = vxor.u32 %v159, 2147483648
    %v162 = vxor.u32 %v160, 2147483648
    %v163 = vmul.f32 %v161, 1.442695
    %v164 = vpow.pop %v163
    %v165 = vmul.f32 %v162, 1.442695
    %v166 = vpow.pop %v165
    %v167 = vadd.f32 %v164, 1.0
    %v168 = vadd.f32 %v166, 1.0
    %v169 = vrcp.pop %v167
    %v170 = vmul.f32 %v167, %v169
    %v171 = vsub.f32 1.0, %v170
    %v172 = vmul.f32 %v169, %v171
    %v173 = vadd.f32 %v169, %v172
    %vm174 = vweird.f32 %v167
    %vm175 = vweird.f32 %v169
    %vm176 = vmor %vm174, %vm175
    %v177 = vsel %vm176, %v169, %v173
    %v178 = vand.u32 2147483647, %v167
    %vm179 = vcmp.eq.f32.partialorder %v178, 8.507059e+37
    %v180 = vand.u32 %v167, 2147483648
    %v181 = vor.u32 1.1754944e-38, %v180
    %v182 = vsel %vm179, %v181, %v177
    %v183 = vmul.f32 1.0, %v182
    %v184 = vrcp.pop %v168
    %v185 = vmul.f32 %v168, %v184
    %v186 = vsub.f32 1.0, %v185
    %v187 = vmul.f32 %v184, %v186
    %v188 = vadd.f32 %v184, %v187
    %vm189 = vweird.f32 %v168
    %vm190 = vweird.f32 %v184
    %vm191 = vmor %vm189, %vm190
    %v192 = vsel %vm191, %v184, %v188
    %v193 = vand.u32 2147483647, %v168
    %vm194 = vcmp.eq.f32.partialorder %v193, 8.507059e+37
    %v195 = vand.u32 %v168, 2147483648
    %v196 = vor.u32 1.1754944e-38, %v195
    %v197 = vsel %vm194, %v196, %v192
    %v198 = vmul.f32 1.0, %v197
    %v200 = vperm.slane %v127, 0
    %201 = vrot.lane.b32.xlu0 %v200, 32
    %v202 = vpop.permute.xlu0 %201
    %v204 = vadd.f32 %v153, %v202
    %v206 = vrot.slane %v204, 1
    %207 = vrot.lane.b32.xlu0 %v204, 96
    %v208 = vpop.permute.xlu0 %207
    %209 = vrot.lane.b32.xlu0 %v206, 96
    %v210 = vpop.permute.xlu0 %209
    %v213 = vmul.f32 %v183, %v208
    %v214 = vmul.f32 %v198, %v210
    %217 = vrot.lane.b32.xlu0 %v213, 32
    %v218 = vpop.permute.xlu0 %217
    %219 = vrot.lane.b32.xlu0 %v214, 32
    %v220 = vpop.permute.xlu0 %219
    %v223 = vadd.f32 %v94, %v218
    %v224 = vadd.f32 %v96, %v220
    %v225 = vtanh.pop %v223
    %v226 = vtanh.pop %v224
    %v227 = vsub.f32 1.0, %v183
    %v228 = vsub.f32 1.0, %v198
    %231 = vrot.lane.b32.xlu0 %v225, 112
    %v232 = vpop.permute.xlu0 %231
    %233 = vrot.lane.b32.xlu0 %v226, 112
    %v234 = vpop.permute.xlu0 %233
    %v237 = vmul.f32 %v227, %v232
    %v238 = vmul.f32 %v228, %v234
    %v239 = vrot.slane %v129, 1
    %240 = vrot.lane.b32.xlu0 %v129, 16
    %v241 = vpop.permute.xlu0 %240
    %242 = vrot.lane.b32.xlu0 %v239, 16
    %v243 = vpop.permute.xlu0 %242
    %v246 = vmul.f32 %v183, %v241
    %v247 = vmul.f32 %v198, %v243
    %v248 = vadd.f32 %v237, %v246
    %v249 = vadd.f32 %v238, %v247
    %v251 = vsel %vm131, %v130, 0
    %253 = vmatpush.msra.mxu0 0.0
    %254 = vmatpush.msra.mxu0 0.0
    %255 = vmatpush.msra.mxu0 0.0
    %256 = vmatpush.msra.mxu0 0.0
    %257 = vmatpush.msra.mxu0 0.0
    %258 = vmatpush.msra.mxu0 0.0
    %259 = vmatpush.msra.mxu0 0.0
    %260 = vmatpush.msra.mxu0 0.0
    %261 = vmatpush.msra.mxu0 0.0
    %262 = vmatpush.msra.mxu0 0.0
    %263 = vmatpush.msra.mxu0 0.0
    %264 = vmatpush.msra.mxu0 0.0
    %265 = vmatpush.msra.mxu0 0.0
    %266 = vmatpush.msra.mxu0 0.0
    %267 = vmatpush.msra.mxu0 %v126
    %268 = vmatpush.msra.mxu0 %v125
    %269 = vmatmul.f32.gmra.mxu0 %v251
    %v270 = vpop.f32.mrf.mxu0
    %v271 = vadd.f32 0.0, %v270
    %272 = vdwg.mxu0
    %v274 = vrot.slane %v271, 1
    %v275 = vrot.slane %v271, 2
    %v278 = vadd.f32 %v119, %v274
    %v279 = vadd.f32 %v121, %v275
    %v280 = vxor.u32 %v278, 2147483648
    %v281 = vxor.u32 %v279, 2147483648
    %v282 = vmul.f32 %v280, 1.442695
    %v283 = vpow.pop %v282
    %v284 = vmul.f32 %v281, 1.442695
    %v285 = vpow.pop %v284
    %v286 = vadd.f32 %v283, 1.0
    %v287 = vadd.f32 %v285, 1.0
    %v288 = vrcp.pop %v286
    %v289 = vmul.f32 %v286, %v288
    %v290 = vsub.f32 1.0, %v289
    %v291 = vmul.f32 %v288, %v290
    %v292 = vadd.f32 %v288, %v291
    %vm293 = vweird.f32 %v286
    %vm294 = vweird.f32 %v288
    %vm295 = vmor %vm293, %vm294
    %v296 = vsel %vm295, %v288, %v292
    %v297 = vand.u32 2147483647, %v286
    %vm298 = vcmp.eq.f32.partialorder %v297, 8.507059e+37
    %v299 = vand.u32 %v286, 2147483648
    %v300 = vor.u32 1.1754944e-38, %v299
    %v301 = vsel %vm298, %v300, %v296
    %v302 = vmul.f32 1.0, %v301
    %v303 = vrcp.pop %v287
    %v304 = vmul.f32 %v287, %v303
    %v305 = vsub.f32 1.0, %v304
    %v306 = vmul.f32 %v303, %v305
    %v307 = vadd.f32 %v303, %v306
    %vm308 = vweird.f32 %v287
    %vm309 = vweird.f32 %v303
    %vm310 = vmor %vm308, %vm309
    %v311 = vsel %vm310, %v303, %v307
    %v312 = vand.u32 2147483647, %v287
    %vm313 = vcmp.eq.f32.partialorder %v312, 8.507059e+37
    %v314 = vand.u32 %v287, 2147483648
    %v315 = vor.u32 1.1754944e-38, %v314
    %v316 = vsel %vm313, %v315, %v311
    %v317 = vmul.f32 1.0, %v316
    %v319 = vperm.slane %v128, 0
    %320 = vrot.lane.b32.xlu0 %v319, 32
    %v321 = vpop.permute.xlu0 %320
    %v323 = vadd.f32 %v271, %v321
    %v325 = vrot.slane %v323, 1
    %v326 = vrot.slane %v323, 2
    %327 = vrot.lane.b32.xlu0 %v325, 96
    %v328 = vpop.permute.xlu0 %327
    %329 = vrot.lane.b32.xlu0 %v326, 96
    %v330 = vpop.permute.xlu0 %329
    %v333 = vmul.f32 %v302, %v328
    %v334 = vmul.f32 %v317, %v330
    %337 = vrot.lane.b32.xlu0 %v333, 32
    %v338 = vpop.permute.xlu0 %337
    %339 = vrot.lane.b32.xlu0 %v334, 32
    %v340 = vpop.permute.xlu0 %339
    %v343 = vadd.f32 %v119, %v338
    %v344 = vadd.f32 %v121, %v340
    %v345 = vtanh.pop %v343
    %v346 = vtanh.pop %v344
    %v347 = vsub.f32 1.0, %v302
    %v348 = vsub.f32 1.0, %v317
    %351 = vrot.lane.b32.xlu0 %v345, 112
    %v352 = vpop.permute.xlu0 %351
    %353 = vrot.lane.b32.xlu0 %v346, 112
    %v354 = vpop.permute.xlu0 %353
    %v357 = vmul.f32 %v347, %v352
    %v358 = vmul.f32 %v348, %v354
    %v359 = vrot.slane %v130, 1
    %v360 = vrot.slane %v130, 2
    %361 = vrot.lane.b32.xlu0 %v359, 16
    %v362 = vpop.permute.xlu0 %361
    %363 = vrot.lane.b32.xlu0 %v360, 16
    %v364 = vpop.permute.xlu0 %363
    %v367 = vmul.f32 %v302, %v362
    %v368 = vmul.f32 %v317, %v364
    %v369 = vadd.f32 %v357, %v367
    %v370 = vadd.f32 %v358, %v368
    %373 = vrot.lane.b32.xlu0 %v248, 112
    %v374 = vpop.permute.xlu0 %373
    %375 = vrot.lane.b32.xlu0 %v249, 112
    %v376 = vpop.permute.xlu0 %375
    %vm379 = vcmask 122880
    %380 = vst.msk [vmem:[#allocation4] sm:$0x1] %vm379, %v374
    %381 = vst.msk [vmem:[#allocation4 + $0x8] sm:$0x1] %vm379, %v376
    %384 = vrot.lane.b32.xlu0 %v369, 112
    %v385 = vpop.permute.xlu0 %384
    %386 = vrot.lane.b32.xlu0 %v370, 112
    %v387 = vpop.permute.xlu0 %386
    %vm390 = vcmask 130055
    %391 = vst.msk [vmem:[#allocation6] sm:$0x80] %vm390, %v385
    %392 = vst.msk [vmem:[#allocation6 + $0x8] sm:$0x80] %vm390, %v387
    %v393 = vrot.slane %v249, 7
    %vm394 = vcmask 1041409
    %v395 = vsel %vm394, %v393, %v248
    %396 = vrot.lane.b32.xlu0 %v395, 112
    %v397 = vpop.permute.xlu0 %396
    %v398 = vsel %vm131, %v397, 0
    %400 = vmatpush.msra.mxu0 0.0
    %401 = vmatpush.msra.mxu0 0.0
    %402 = vmatpush.msra.mxu0 0.0
    %403 = vmatpush.msra.mxu0 0.0
    %404 = vmatpush.msra.mxu0 0.0
    %405 = vmatpush.msra.mxu0 0.0
    %406 = vmatpush.msra.mxu0 0.0
    %407 = vmatpush.msra.mxu0 0.0
    %408 = vmatpush.msra.mxu0 0.0
    %409 = vmatpush.msra.mxu0 0.0
    %410 = vmatpush.msra.mxu0 0.0
    %411 = vmatpush.msra.mxu0 0.0
    %412 = vmatpush.msra.mxu0 0.0
    %413 = vmatpush.msra.mxu0 0.0
    %414 = vmatpush.msra.mxu0 %v124
    %415 = vmatpush.msra.mxu0 %v123
    %416 = vmatmul.f32.gmra.mxu0 %v398
    %v417 = vpop.f32.mrf.mxu0
    %v418 = vadd.f32 0.0, %v417
    %419 = vdwg.mxu0
    %v421 = vrot.slane %v418, 7
    %v424 = vadd.f32 %v94, %v421
    %v425 = vadd.f32 %v96, %v418
    %v426 = vxor.u32 %v424, 2147483648
    %v427 = vxor.u32 %v425, 2147483648
    %v428 = vmul.f32 %v426, 1.442695
    %v429 = vpow.pop %v428
    %v430 = vmul.f32 %v427, 1.442695
    %v431 = vpow.pop %v430
    %v432 = vadd.f32 %v429, 1.0
    %v433 = vadd.f32 %v431, 1.0
    %v434 = vrcp.pop %v432
    %v435 = vmul.f32 %v432, %v434
    %v436 = vsub.f32 1.0, %v435
    %v437 = vmul.f32 %v434, %v436
    %v438 = vadd.f32 %v434, %v437
    %vm439 = vweird.f32 %v432
    %vm440 = vweird.f32 %v434
    %vm441 = vmor %vm439, %vm440
    %v442 = vsel %vm441, %v434, %v438
    %v443 = vand.u32 2147483647, %v432
    %vm444 = vcmp.eq.f32.partialorder %v443, 8.507059e+37
    %v445 = vand.u32 %v432, 2147483648
    %v446 = vor.u32 1.1754944e-38, %v445
    %v447 = vsel %vm444, %v446, %v442
    %v448 = vmul.f32 1.0, %v447
    %v449 = vrcp.pop %v433
    %v450 = vmul.f32 %v433, %v449
    %v451 = vsub.f32 1.0, %v450
    %v452 = vmul.f32 %v449, %v451
    %v453 = vadd.f32 %v449, %v452
    %vm454 = vweird.f32 %v433
    %vm455 = vweird.f32 %v449
    %vm456 = vmor %vm454, %vm455
    %v457 = vsel %vm456, %v449, %v453
    %v458 = vand.u32 2147483647, %v433
    %vm459 = vcmp.eq.f32.partialorder %v458, 8.507059e+37
    %v460 = vand.u32 %v433, 2147483648
    %v461 = vor.u32 1.1754944e-38, %v460
    %v462 = vsel %vm459, %v461, %v457
    %v463 = vmul.f32 1.0, %v462
    %v464 = vadd.f32 %v418, %v202
    %v466 = vrot.slane %v464, 7
    %467 = vrot.lane.b32.xlu0 %v466, 96
    %v468 = vpop.permute.xlu0 %467
    %469 = vrot.lane.b32.xlu0 %v464, 96
    %v470 = vpop.permute.xlu0 %469
    %v473 = vmul.f32 %v448, %v468
    %v474 = vmul.f32 %v463, %v470
    %477 = vrot.lane.b32.xlu0 %v473, 32
    %v478 = vpop.permute.xlu0 %477
    %479 = vrot.lane.b32.xlu0 %v474, 32
    %v480 = vpop.permute.xlu0 %479
    %v483 = vadd.f32 %v94, %v478
    %v484 = vadd.f32 %v96, %v480
    %v485 = vtanh.pop %v483
    %v486 = vtanh.pop %v484
    %v487 = vsub.f32 1.0, %v448
    %v488 = vsub.f32 1.0, %v463
    %491 = vrot.lane.b32.xlu0 %v485, 112
    %v492 = vpop.permute.xlu0 %491
    %493 = vrot.lane.b32.xlu0 %v486, 112
    %v494 = vpop.permute.xlu0 %493
    %v497 = vmul.f32 %v487, %v492
    %v498 = vmul.f32 %v488, %v494
    %v499 = vrot.slane %v248, 7
    %v502 = vmul.f32 %v448, %v499
    %v503 = vmul.f32 %v463, %v393
    %v504 = vadd.f32 %v497, %v502
    %v505 = vadd.f32 %v498, %v503
    %v506 = vrot.slane %v369, 7
    %v507 = vrot.slane %v370, 6
    %v508 = vsel %vm394, %v507, %v506
    %509 = vrot.lane.b32.xlu0 %v508, 112
    %v510 = vpop.permute.xlu0 %509
    %v511 = vsel %vm131, %v510, 0
    %513 = vmatpush.msra.mxu0 0.0
    %514 = vmatpush.msra.mxu0 0.0
    %515 = vmatpush.msra.mxu0 0.0
    %516 = vmatpush.msra.mxu0 0.0
    %517 = vmatpush.msra.mxu0 0.0
    %518 = vmatpush.msra.mxu0 0.0
    %519 = vmatpush.msra.mxu0 0.0
    %520 = vmatpush.msra.mxu0 0.0
    %521 = vmatpush.msra.mxu0 0.0
    %522 = vmatpush.msra.mxu0 0.0
    %523 = vmatpush.msra.mxu0 0.0
    %524 = vmatpush.msra.mxu0 0.0
    %525 = vmatpush.msra.mxu0 0.0
    %526 = vmatpush.msra.mxu0 0.0
    %527 = vmatpush.msra.mxu0 %v126
    %528 = vmatpush.msra.mxu0 %v125
    %529 = vmatmul.f32.gmra.mxu0 %v511
    %v530 = vpop.f32.mrf.mxu0
    %v531 = vadd.f32 0.0, %v530
    %532 = vdwg.mxu0
    %v534 = vrot.slane %v531, 2
    %v535 = vrot.slane %v531, 3
    %v538 = vadd.f32 %v119, %v534
    %v539 = vadd.f32 %v121, %v535
    %v540 = vxor.u32 %v538, 2147483648
    %v541 = vxor.u32 %v539, 2147483648
    %v542 = vmul.f32 %v540, 1.442695
    %v543 = vpow.pop %v542
    %v544 = vmul.f32 %v541, 1.442695
    %v545 = vpow.pop %v544
    %v546 = vadd.f32 %v543, 1.0
    %v547 = vadd.f32 %v545, 1.0
    %v548 = vrcp.pop %v546
    %v549 = vmul.f32 %v546, %v548
    %v550 = vsub.f32 1.0, %v549
    %v551 = vmul.f32 %v548, %v550
    %v552 = vadd.f32 %v548, %v551
    %vm553 = vweird.f32 %v546
    %vm554 = vweird.f32 %v548
    %vm555 = vmor %vm553, %vm554
    %v556 = vsel %vm555, %v548, %v552
    %v557 = vand.u32 2147483647, %v546
    %vm558 = vcmp.eq.f32.partialorder %v557, 8.507059e+37
    %v559 = vand.u32 %v546, 2147483648
    %v560 = vor.u32 1.1754944e-38, %v559
    %v561 = vsel %vm558, %v560, %v556
    %v562 = vmul.f32 1.0, %v561
    %v563 = vrcp.pop %v547
    %v564 = vmul.f32 %v547, %v563
    %v565 = vsub.f32 1.0, %v564
    %v566 = vmul.f32 %v563, %v565
    %v567 = vadd.f32 %v563, %v566
    %vm568 = vweird.f32 %v547
    %vm569 = vweird.f32 %v563
    %vm570 = vmor %vm568, %vm569
    %v571 = vsel %vm570, %v563, %v567
    %v572 = vand.u32 2147483647, %v547
    %vm573 = vcmp.eq.f32.partialorder %v572, 8.507059e+37
    %v574 = vand.u32 %v547, 2147483648
    %v575 = vor.u32 1.1754944e-38, %v574
    %v576 = vsel %vm573, %v575, %v571
    %v577 = vmul.f32 1.0, %v576
    %v578 = vadd.f32 %v531, %v321
    %v580 = vrot.slane %v578, 2
    %v581 = vrot.slane %v578, 3
    %582 = vrot.lane.b32.xlu0 %v580, 96
    %v583 = vpop.permute.xlu0 %582
    %584 = vrot.lane.b32.xlu0 %v581, 96
    %v585 = vpop.permute.xlu0 %584
    %v588 = vmul.f32 %v562, %v583
    %v589 = vmul.f32 %v577, %v585
    %592 = vrot.lane.b32.xlu0 %v588, 32
    %v593 = vpop.permute.xlu0 %592
    %594 = vrot.lane.b32.xlu0 %v589, 32
    %v595 = vpop.permute.xlu0 %594
    %v598 = vadd.f32 %v119, %v593
    %v599 = vadd.f32 %v121, %v595
    %v600 = vtanh.pop %v598
    %v601 = vtanh.pop %v599
    %v602 = vsub.f32 1.0, %v562
    %v603 = vsub.f32 1.0, %v577
    %606 = vrot.lane.b32.xlu0 %v600, 112
    %v607 = vpop.permute.xlu0 %606
    %608 = vrot.lane.b32.xlu0 %v601, 112
    %v609 = vpop.permute.xlu0 %608
    %v612 = vmul.f32 %v602, %v607
    %v613 = vmul.f32 %v603, %v609
    %v614 = vrot.slane %v369, 1
    %v615 = vrot.slane %v370, 1
    %v618 = vmul.f32 %v562, %v614
    %v619 = vmul.f32 %v577, %v615
    %v620 = vadd.f32 %v612, %v618
    %v621 = vadd.f32 %v613, %v619
    %624 = vrot.lane.b32.xlu0 %v504, 112
    %v625 = vpop.permute.xlu0 %624
    %626 = vrot.lane.b32.xlu0 %v505, 112
    %v627 = vpop.permute.xlu0 %626
    %vm630 = vcmask 123905
    %631 = vst.msk [vmem:[#allocation4] sm:$0x2] %vm630, %v625
    %632 = vst.msk [vmem:[#allocation4 + $0x8] sm:$0x2] %vm630, %v627
    %635 = vrot.lane.b32.xlu0 %v620, 112
    %v636 = vpop.permute.xlu0 %635
    %637 = vrot.lane.b32.xlu0 %v621, 112
    %v638 = vpop.permute.xlu0 %637
    %vm641 = vcmask 129030
    %642 = vst.msk [vmem:[#allocation6] sm:$0x40] %vm641, %v636
    %643 = vst.msk [vmem:[#allocation6 + $0x8] sm:$0x40] %vm641, %v638
    %v644 = vrot.slane %v504, 1
    %v645 = vsel %vm394, %v505, %v644
    %646 = vrot.lane.b32.xlu0 %v645, 112
    %v647 = vpop.permute.xlu0 %646
    %v648 = vsel %vm131, %v647, 0
    %650 = vmatpush.msra.mxu0 0.0
    %651 = vmatpush.msra.mxu0 0.0
    %652 = vmatpush.msra.mxu0 0.0
    %653 = vmatpush.msra.mxu0 0.0
    %654 = vmatpush.msra.mxu0 0.0
    %655 = vmatpush.msra.mxu0 0.0
    %656 = vmatpush.msra.mxu0 0.0
    %657 = vmatpush.msra.mxu0 0.0
    %658 = vmatpush.msra.mxu0 0.0
    %659 = vmatpush.msra.mxu0 0.0
    %660 = vmatpush.msra.mxu0 0.0
    %661 = vmatpush.msra.mxu0 0.0
    %662 = vmatpush.msra.mxu0 0.0
    %663 = vmatpush.msra.mxu0 0.0
    %664 = vmatpush.msra.mxu0 %v124
    %665 = vmatpush.msra.mxu0 %v123
    %666 = vmatmul.f32.gmra.mxu0 %v648
    %v667 = vpop.f32.mrf.mxu0
    %v668 = vadd.f32 0.0, %v667
    %669 = vdwg.mxu0
    %v671 = vrot.slane %v668, 6
    %v672 = vrot.slane %v668, 7
    %v675 = vadd.f32 %v94, %v671
    %v676 = vadd.f32 %v96, %v672
    %v677 = vxor.u32 %v675, 2147483648
    %v678 = vxor.u32 %v676, 2147483648
    %v679 = vmul.f32 %v677, 1.442695
    %v680 = vpow.pop %v679
    %v681 = vmul.f32 %v678, 1.442695
    %v682 = vpow.pop %v681
    %v683 = vadd.f32 %v680, 1.0
    %v684 = vadd.f32 %v682, 1.0
    %v685 = vrcp.pop %v683
    %v686 = vmul.f32 %v683, %v685
    %v687 = vsub.f32 1.0, %v686
    %v688 = vmul.f32 %v685, %v687
    %v689 = vadd.f32 %v685, %v688
    %vm690 = vweird.f32 %v683
    %vm691 = vweird.f32 %v685
    %vm692 = vmor %vm690, %vm691
    %v693 = vsel %vm692, %v685, %v689
    %v694 = vand.u32 2147483647, %v683
    %vm695 = vcmp.eq.f32.partialorder %v694, 8.507059e+37
    %v696 = vand.u32 %v683, 2147483648
    %v697 = vor.u32 1.1754944e-38, %v696
    %v698 = vsel %vm695, %v697, %v693
    %v699 = vmul.f32 1.0, %v698
    %v700 = vrcp.pop %v684
    %v701 = vmul.f32 %v684, %v700
    %v702 = vsub.f32 1.0, %v701
    %v703 = vmul.f32 %v700, %v702
    %v704 = vadd.f32 %v700, %v703
    %vm705 = vweird.f32 %v684
    %vm706 = vweird.f32 %v700
    %vm707 = vmor %vm705, %vm706
    %v708 = vsel %vm707, %v700, %v704
    %v709 = vand.u32 2147483647, %v684
    %vm710 = vcmp.eq.f32.partialorder %v709, 8.507059e+37
    %v711 = vand.u32 %v684, 2147483648
    %v712 = vor.u32 1.1754944e-38, %v711
    %v713 = vsel %vm710, %v712, %v708
    %v714 = vmul.f32 1.0, %v713
    %v715 = vadd.f32 %v668, %v202
    %v717 = vrot.slane %v715, 6
    %v718 = vrot.slane %v715, 7
    %719 = vrot.lane.b32.xlu0 %v717, 96
    %v720 = vpop.permute.xlu0 %719
    %721 = vrot.lane.b32.xlu0 %v718, 96
    %v722 = vpop.permute.xlu0 %721
    %v725 = vmul.f32 %v699, %v720
    %v726 = vmul.f32 %v714, %v722
    %729 = vrot.lane.b32.xlu0 %v725, 32
    %v730 = vpop.permute.xlu0 %729
    %731 = vrot.lane.b32.xlu0 %v726, 32
    %v732 = vpop.permute.xlu0 %731
    %v735 = vadd.f32 %v94, %v730
    %v736 = vadd.f32 %v96, %v732
    %v737 = vtanh.pop %v735
    %v738 = vtanh.pop %v736
    %v739 = vsub.f32 1.0, %v699
    %v740 = vsub.f32 1.0, %v714
    %743 = vrot.lane.b32.xlu0 %v737, 112
    %v744 = vpop.permute.xlu0 %743
    %745 = vrot.lane.b32.xlu0 %v738, 112
    %v746 = vpop.permute.xlu0 %745
    %v749 = vmul.f32 %v739, %v744
    %v750 = vmul.f32 %v740, %v746
    %v751 = vrot.slane %v504, 7
    %v752 = vrot.slane %v505, 7
    %v755 = vmul.f32 %v699, %v751
    %v756 = vmul.f32 %v714, %v752
    %v757 = vadd.f32 %v749, %v755
    %v758 = vadd.f32 %v750, %v756
    %v759 = vrot.slane %v620, 6
    %v760 = vrot.slane %v621, 5
    %v761 = vsel %vm394, %v760, %v759
    %762 = vrot.lane.b32.xlu0 %v761, 112
    %v763 = vpop.permute.xlu0 %762
    %v764 = vsel %vm131, %v763, 0
    %766 = vmatpush.msra.mxu0 0.0
    %767 = vmatpush.msra.mxu0 0.0
    %768 = vmatpush.msra.mxu0 0.0
    %769 = vmatpush.msra.mxu0 0.0
    %770 = vmatpush.msra.mxu0 0.0
    %771 = vmatpush.msra.mxu0 0.0
    %772 = vmatpush.msra.mxu0 0.0
    %773 = vmatpush.msra.mxu0 0.0
    %774 = vmatpush.msra.mxu0 0.0
    %775 = vmatpush.msra.mxu0 0.0
    %776 = vmatpush.msra.mxu0 0.0
    %777 = vmatpush.msra.mxu0 0.0
    %778 = vmatpush.msra.mxu0 0.0
    %779 = vmatpush.msra.mxu0 0.0
    %780 = vmatpush.msra.mxu0 %v126
    %781 = vmatpush.msra.mxu0 %v125
    %782 = vmatmul.f32.gmra.mxu0 %v764
    %v783 = vpop.f32.mrf.mxu0
    %v784 = vadd.f32 0.0, %v783
    %785 = vdwg.mxu0
    %v787 = vrot.slane %v784, 3
    %v788 = vrot.slane %v784, 4
    %v791 = vadd.f32 %v119, %v787
    %v792 = vadd.f32 %v121, %v788
    %v793 = vxor.u32 %v791, 2147483648
    %v794 = vxor.u32 %v792, 2147483648
    %v795 = vmul.f32 %v793, 1.442695
    %v796 = vpow.pop %v795
    %v797 = vmul.f32 %v794, 1.442695
    %v798 = vpow.pop %v797
    %v799 = vadd.f32 %v796, 1.0
    %v800 = vadd.f32 %v798, 1.0
    %v801 = vrcp.pop %v799
    %v802 = vmul.f32 %v799, %v801
    %v803 = vsub.f32 1.0, %v802
    %v804 = vmul.f32 %v801, %v803
    %v805 = vadd.f32 %v801, %v804
    %vm806 = vweird.f32 %v799
    %vm807 = vweird.f32 %v801
    %vm808 = vmor %vm806, %vm807
    %v809 = vsel %vm808, %v801, %v805
    %v810 = vand.u32 2147483647, %v799
    %vm811 = vcmp.eq.f32.partialorder %v810, 8.507059e+37
    %v812 = vand.u32 %v799, 2147483648
    %v813 = vor.u32 1.1754944e-38, %v812
    %v814 = vsel %vm811, %v813, %v809
    %v815 = vmul.f32 1.0, %v814
    %v816 = vrcp.pop %v800
    %v817 = vmul.f32 %v800, %v816
    %v818 = vsub.f32 1.0, %v817
    %v819 = vmul.f32 %v816, %v818
    %v820 = vadd.f32 %v816, %v819
    %vm821 = vweird.f32 %v800
    %vm822 = vweird.f32 %v816
    %vm823 = vmor %vm821, %vm822
    %v824 = vsel %vm823, %v816, %v820
    %v825 = vand.u32 2147483647, %v800
    %vm826 = vcmp.eq.f32.partialorder %v825, 8.507059e+37
    %v827 = vand.u32 %v800, 2147483648
    %v828 = vor.u32 1.1754944e-38, %v827
    %v829 = vsel %vm826, %v828, %v824
    %v830 = vmul.f32 1.0, %v829
    %v831 = vadd.f32 %v784, %v321
    %v833 = vrot.slane %v831, 3
    %v834 = vrot.slane %v831, 4
    %835 = vrot.lane.b32.xlu0 %v833, 96
    %v836 = vpop.permute.xlu0 %835
    %837 = vrot.lane.b32.xlu0 %v834, 96
    %v838 = vpop.permute.xlu0 %837
    %v841 = vmul.f32 %v815, %v836
    %v842 = vmul.f32 %v830, %v838
    %845 = vrot.lane.b32.xlu0 %v841, 32
    %v846 = vpop.permute.xlu0 %845
    %847 = vrot.lane.b32.xlu0 %v842, 32
    %v848 = vpop.permute.xlu0 %847
    %v851 = vadd.f32 %v119, %v846
    %v852 = vadd.f32 %v121, %v848
    %v853 = vtanh.pop %v851
    %v854 = vtanh.pop %v852
    %v855 = vsub.f32 1.0, %v815
    %v856 = vsub.f32 1.0, %v830
    %859 = vrot.lane.b32.xlu0 %v853, 112
    %v860 = vpop.permute.xlu0 %859
    %861 = vrot.lane.b32.xlu0 %v854, 112
    %v862 = vpop.permute.xlu0 %861
    %v865 = vmul.f32 %v855, %v860
    %v866 = vmul.f32 %v856, %v862
    %v867 = vrot.slane %v620, 1
    %v868 = vrot.slane %v621, 1
    %v871 = vmul.f32 %v815, %v867
    %v872 = vmul.f32 %v830, %v868
    %v873 = vadd.f32 %v865, %v871
    %v874 = vadd.f32 %v866, %v872
    %877 = vrot.lane.b32.xlu0 %v757, 112
    %v878 = vpop.permute.xlu0 %877
    %879 = vrot.lane.b32.xlu0 %v758, 112
    %v880 = vpop.permute.xlu0 %879
    %vm883 = vcmask 124930
    %884 = vst.msk [vmem:[#allocation4] sm:$0x4] %vm883, %v878
    %885 = vst.msk [vmem:[#allocation4 + $0x8] sm:$0x4] %vm883, %v880
    %888 = vrot.lane.b32.xlu0 %v873, 112
    %v889 = vpop.permute.xlu0 %888
    %890 = vrot.lane.b32.xlu0 %v874, 112
    %v891 = vpop.permute.xlu0 %890
    %vm894 = vcmask 128005
    %895 = vst.msk [vmem:[#allocation6] sm:$0x20] %vm894, %v889
    %896 = vst.msk [vmem:[#allocation6 + $0x8] sm:$0x20] %vm894, %v891
    %v897 = vrot.slane %v757, 2
    %v898 = vrot.slane %v758, 1
    %v899 = vsel %vm394, %v898, %v897
    %900 = vrot.lane.b32.xlu0 %v899, 112
    %v901 = vpop.permute.xlu0 %900
    %v902 = vsel %vm131, %v901, 0
    %904 = vmatpush.msra.mxu0 0.0
    %905 = vmatpush.msra.mxu0 0.0
    %906 = vmatpush.msra.mxu0 0.0
    %907 = vmatpush.msra.mxu0 0.0
    %908 = vmatpush.msra.mxu0 0.0
    %909 = vmatpush.msra.mxu0 0.0
    %910 = vmatpush.msra.mxu0 0.0
    %911 = vmatpush.msra.mxu0 0.0
    %912 = vmatpush.msra.mxu0 0.0
    %913 = vmatpush.msra.mxu0 0.0
    %914 = vmatpush.msra.mxu0 0.0
    %915 = vmatpush.msra.mxu0 0.0
    %916 = vmatpush.msra.mxu0 0.0
    %917 = vmatpush.msra.mxu0 0.0
    %918 = vmatpush.msra.mxu0 %v124
    %919 = vmatpush.msra.mxu0 %v123
    %920 = vmatmul.f32.gmra.mxu0 %v902
    %v921 = vpop.f32.mrf.mxu0
    %v922 = vadd.f32 0.0, %v921
    %923 = vdwg.mxu0
    %v925 = vrot.slane %v922, 5
    %v926 = vrot.slane %v922, 6
    %v929 = vadd.f32 %v94, %v925
    %v930 = vadd.f32 %v96, %v926
    %v931 = vxor.u32 %v929, 2147483648
    %v932 = vxor.u32 %v930, 2147483648
    %v933 = vmul.f32 %v931, 1.442695
    %v934 = vpow.pop %v933
    %v935 = vmul.f32 %v932, 1.442695
    %v936 = vpow.pop %v935
    %v937 = vadd.f32 %v934, 1.0
    %v938 = vadd.f32 %v936, 1.0
    %v939 = vrcp.pop %v937
    %v940 = vmul.f32 %v937, %v939
    %v941 = vsub.f32 1.0, %v940
    %v942 = vmul.f32 %v939, %v941
    %v943 = vadd.f32 %v939, %v942
    %vm944 = vweird.f32 %v937
    %vm945 = vweird.f32 %v939
    %vm946 = vmor %vm944, %vm945
    %v947 = vsel %vm946, %v939, %v943
    %v948 = vand.u32 2147483647, %v937
    %vm949 = vcmp.eq.f32.partialorder %v948, 8.507059e+37
    %v950 = vand.u32 %v937, 2147483648
    %v951 = vor.u32 1.1754944e-38, %v950
    %v952 = vsel %vm949, %v951, %v947
    %v953 = vmul.f32 1.0, %v952
    %v954 = vrcp.pop %v938
    %v955 = vmul.f32 %v938, %v954
    %v956 = vsub.f32 1.0, %v955
    %v957 = vmul.f32 %v954, %v956
    %v958 = vadd.f32 %v954, %v957
    %vm959 = vweird.f32 %v938
    %vm960 = vweird.f32 %v954
    %vm961 = vmor %vm959, %vm960
    %v962 = vsel %vm961, %v954, %v958
    %v963 = vand.u32 2147483647, %v938
    %vm964 = vcmp.eq.f32.partialorder %v963, 8.507059e+37
    %v965 = vand.u32 %v938, 2147483648
    %v966 = vor.u32 1.1754944e-38, %v965
    %v967 = vsel %vm964, %v966, %v962
    %v968 = vmul.f32 1.0, %v967
    %v969 = vadd.f32 %v922, %v202
    %v971 = vrot.slane %v969, 5
    %v972 = vrot.slane %v969, 6
    %973 = vrot.lane.b32.xlu0 %v971, 96
    %v974 = vpop.permute.xlu0 %973
    %975 = vrot.lane.b32.xlu0 %v972, 96
    %v976 = vpop.permute.xlu0 %975
    %v979 = vmul.f32 %v953, %v974
    %v980 = vmul.f32 %v968, %v976
    %983 = vrot.lane.b32.xlu0 %v979, 32
    %v984 = vpop.permute.xlu0 %983
    %985 = vrot.lane.b32.xlu0 %v980, 32
    %v986 = vpop.permute.xlu0 %985
    %v989 = vadd.f32 %v94, %v984
    %v990 = vadd.f32 %v96, %v986
    %v991 = vtanh.pop %v989
    %v992 = vtanh.pop %v990
    %v993 = vsub.f32 1.0, %v953
    %v994 = vsub.f32 1.0, %v968
    %997 = vrot.lane.b32.xlu0 %v991, 112
    %v998 = vpop.permute.xlu0 %997
    %999 = vrot.lane.b32.xlu0 %v992, 112
    %v1000 = vpop.permute.xlu0 %999
    %v1003 = vmul.f32 %v993, %v998
    %v1004 = vmul.f32 %v994, %v1000
    %v1005 = vrot.slane %v757, 7
    %v1006 = vrot.slane %v758, 7
    %v1009 = vmul.f32 %v953, %v1005
    %v1010 = vmul.f32 %v968, %v1006
    %v1011 = vadd.f32 %v1003, %v1009
    %v1012 = vadd.f32 %v1004, %v1010
    %v1013 = vrot.slane %v873, 5
    %v1014 = vrot.slane %v874, 4
    %v1015 = vsel %vm394, %v1014, %v1013
    %1016 = vrot.lane.b32.xlu0 %v1015, 112
    %v1017 = vpop.permute.xlu0 %1016
    %v1018 = vsel %vm131, %v1017, 0
    %1020 = vmatpush.msra.mxu0 0.0
    %1021 = vmatpush.msra.mxu0 0.0
    %1022 = vmatpush.msra.mxu0 0.0
    %1023 = vmatpush.msra.mxu0 0.0
    %1024 = vmatpush.msra.mxu0 0.0
    %1025 = vmatpush.msra.mxu0 0.0
    %1026 = vmatpush.msra.mxu0 0.0
    %1027 = vmatpush.msra.mxu0 0.0
    %1028 = vmatpush.msra.mxu0 0.0
    %1029 = vmatpush.msra.mxu0 0.0
    %1030 = vmatpush.msra.mxu0 0.0
    %1031 = vmatpush.msra.mxu0 0.0
    %1032 = vmatpush.msra.mxu0 0.0
    %1033 = vmatpush.msra.mxu0 0.0
    %1034 = vmatpush.msra.mxu0 %v126
    %1035 = vmatpush.msra.mxu0 %v125
    %1036 = vmatmul.f32.gmra.mxu0 %v1018
    %v1037 = vpop.f32.mrf.mxu0
    %v1038 = vadd.f32 0.0, %v1037
    %1039 = vdwg.mxu0
    %v1041 = vrot.slane %v1038, 4
    %v1042 = vrot.slane %v1038, 5
    %v1045 = vadd.f32 %v119, %v1041
    %v1046 = vadd.f32 %v121, %v1042
    %v1047 = vxor.u32 %v1045, 2147483648
    %v1048 = vxor.u32 %v1046, 2147483648
    %v1049 = vmul.f32 %v1047, 1.442695
    %v1050 = vpow.pop %v1049
    %v1051 = vmul.f32 %v1048, 1.442695
    %v1052 = vpow.pop %v1051
    %v1053 = vadd.f32 %v1050, 1.0
    %v1054 = vadd.f32 %v1052, 1.0
    %v1055 = vrcp.pop %v1053
    %v1056 = vmul.f32 %v1053, %v1055
    %v1057 = vsub.f32 1.0, %v1056
    %v1058 = vmul.f32 %v1055, %v1057
    %v1059 = vadd.f32 %v1055, %v1058
    %vm1060 = vweird.f32 %v1053
    %vm1061 = vweird.f32 %v1055
    %vm1062 = vmor %vm1060, %vm1061
    %v1063 = vsel %vm1062, %v1055, %v1059
    %v1064 = vand.u32 2147483647, %v1053
    %vm1065 = vcmp.eq.f32.partialorder %v1064, 8.507059e+37
    %v1066 = vand.u32 %v1053, 2147483648
    %v1067 = vor.u32 1.1754944e-38, %v1066
    %v1068 = vsel %vm1065, %v1067, %v1063
    %v1069 = vmul.f32 1.0, %v1068
    %v1070 = vrcp.pop %v1054
    %v1071 = vmul.f32 %v1054, %v1070
    %v1072 = vsub.f32 1.0, %v1071
    %v1073 = vmul.f32 %v1070, %v1072
    %v1074 = vadd.f32 %v1070, %v1073
    %vm1075 = vweird.f32 %v1054
    %vm1076 = vweird.f32 %v1070
    %vm1077 = vmor %vm1075, %vm1076
    %v1078 = vsel %vm1077, %v1070, %v1074
    %v1079 = vand.u32 2147483647, %v1054
    %vm1080 = vcmp.eq.f32.partialorder %v1079, 8.507059e+37
    %v1081 = vand.u32 %v1054, 2147483648
    %v1082 = vor.u32 1.1754944e-38, %v1081
    %v1083 = vsel %vm1080, %v1082, %v1078
    %v1084 = vmul.f32 1.0, %v1083
    %v1085 = vadd.f32 %v1038, %v321
    %v1087 = vrot.slane %v1085, 4
    %v1088 = vrot.slane %v1085, 5
    %1089 = vrot.lane.b32.xlu0 %v1087, 96
    %v1090 = vpop.permute.xlu0 %1089
    %1091 = vrot.lane.b32.xlu0 %v1088, 96
    %v1092 = vpop.permute.xlu0 %1091
    %v1095 = vmul.f32 %v1069, %v1090
    %v1096 = vmul.f32 %v1084, %v1092
    %1099 = vrot.lane.b32.xlu0 %v1095, 32
    %v1100 = vpop.permute.xlu0 %1099
    %1101 = vrot.lane.b32.xlu0 %v1096, 32
    %v1102 = vpop.permute.xlu0 %1101
    %v1105 = vadd.f32 %v119, %v1100
    %v1106 = vadd.f32 %v121, %v1102
    %v1107 = vtanh.pop %v1105
    %v1108 = vtanh.pop %v1106
    %v1109 = vsub.f32 1.0, %v1069
    %v1110 = vsub.f32 1.0, %v1084
    %1113 = vrot.lane.b32.xlu0 %v1107, 112
    %v1114 = vpop.permute.xlu0 %1113
    %1115 = vrot.lane.b32.xlu0 %v1108, 112
    %v1116 = vpop.permute.xlu0 %1115
    %v1119 = vmul.f32 %v1109, %v1114
    %v1120 = vmul.f32 %v1110, %v1116
    %v1121 = vrot.slane %v873, 1
    %v1122 = vrot.slane %v874, 1
    %v1125 = vmul.f32 %v1069, %v1121
    %v1126 = vmul.f32 %v1084, %v1122
    %v1127 = vadd.f32 %v1119, %v1125
    %v1128 = vadd.f32 %v1120, %v1126
    %1131 = vrot.lane.b32.xlu0 %v1011, 112
    %v1132 = vpop.permute.xlu0 %1131
    %1133 = vrot.lane.b32.xlu0 %v1012, 112
    %v1134 = vpop.permute.xlu0 %1133
    %vm1137 = vcmask 125955
    %1138 = vst.msk [vmem:[#allocation4] sm:$0x8] %vm1137, %v1132
    %1139 = vst.msk [vmem:[#allocation4 + $0x8] sm:$0x8] %vm1137, %v1134
    %1142 = vrot.lane.b32.xlu0 %v1127, 112
    %v1143 = vpop.permute.xlu0 %1142
    %1144 = vrot.lane.b32.xlu0 %v1128, 112
    %v1145 = vpop.permute.xlu0 %1144
    %vm1148 = vcmask 126980
    %1149 = vst.msk [vmem:[#allocation6] sm:$0x10] %vm1148, %v1143
    %1150 = vst.msk [vmem:[#allocation6 + $0x8] sm:$0x10] %vm1148, %v1145
    %v1151 = vrot.slane %v1011, 3
    %v1152 = vrot.slane %v1012, 2
    %v1153 = vsel %vm394, %v1152, %v1151
    %1154 = vrot.lane.b32.xlu0 %v1153, 112
    %v1155 = vpop.permute.xlu0 %1154
    %v1156 = vsel %vm131, %v1155, 0
    %1158 = vmatpush.msra.mxu0 0.0
    %1159 = vmatpush.msra.mxu0 0.0
    %1160 = vmatpush.msra.mxu0 0.0
    %1161 = vmatpush.msra.mxu0 0.0
    %1162 = vmatpush.msra.mxu0 0.0
    %1163 = vmatpush.msra.mxu0 0.0
    %1164 = vmatpush.msra.mxu0 0.0
    %1165 = vmatpush.msra.mxu0 0.0
    %1166 = vmatpush.msra.mxu0 0.0
    %1167 = vmatpush.msra.mxu0 0.0
    %1168 = vmatpush.msra.mxu0 0.0
    %1169 = vmatpush.msra.mxu0 0.0
    %1170 = vmatpush.msra.mxu0 0.0
    %1171 = vmatpush.msra.mxu0 0.0
    %1172 = vmatpush.msra.mxu0 %v124
    %1173 = vmatpush.msra.mxu0 %v123
    %1174 = vmatmul.f32.gmra.mxu0 %v1156
    %v1175 = vpop.f32.mrf.mxu0
    %v1176 = vadd.f32 0.0, %v1175
    %1177 = vdwg.mxu0
    %v1179 = vrot.slane %v1176, 4
    %v1180 = vrot.slane %v1176, 5
    %v1183 = vadd.f32 %v94, %v1179
    %v1184 = vadd.f32 %v96, %v1180
    %v1185 = vxor.u32 %v1183, 2147483648
    %v1186 = vxor.u32 %v1184, 2147483648
    %v1187 = vmul.f32 %v1185, 1.442695
    %v1188 = vpow.pop %v1187
    %v1189 = vmul.f32 %v1186, 1.442695
    %v1190 = vpow.pop %v1189
    %v1191 = vadd.f32 %v1188, 1.0
    %v1192 = vadd.f32 %v1190, 1.0
    %v1193 = vrcp.pop %v1191
    %v1194 = vmul.f32 %v1191, %v1193
    %v1195 = vsub.f32 1.0, %v1194
    %v1196 = vmul.f32 %v1193, %v1195
    %v1197 = vadd.f32 %v1193, %v1196
    %vm1198 = vweird.f32 %v1191
    %vm1199 = vweird.f32 %v1193
    %vm1200 = vmor %vm1198, %vm1199
    %v1201 = vsel %vm1200, %v1193, %v1197
    %v1202 = vand.u32 2147483647, %v1191
    %vm1203 = vcmp.eq.f32.partialorder %v1202, 8.507059e+37
    %v1204 = vand.u32 %v1191, 2147483648
    %v1205 = vor.u32 1.1754944e-38, %v1204
    %v1206 = vsel %vm1203, %v1205, %v1201
    %v1207 = vmul.f32 1.0, %v1206
    %v1208 = vrcp.pop %v1192
    %v1209 = vmul.f32 %v1192, %v1208
    %v1210 = vsub.f32 1.0, %v1209
    %v1211 = vmul.f32 %v1208, %v1210
    %v1212 = vadd.f32 %v1208, %v1211
    %vm1213 = vweird.f32 %v1192
    %vm1214 = vweird.f32 %v1208
    %vm1215 = vmor %vm1213, %vm1214
    %v1216 = vsel %vm1215, %v1208, %v1212
    %v1217 = vand.u32 2147483647, %v1192
    %vm1218 = vcmp.eq.f32.partialorder %v1217, 8.507059e+37
    %v1219 = vand.u32 %v1192, 2147483648
    %v1220 = vor.u32 1.1754944e-38, %v1219
    %v1221 = vsel %vm1218, %v1220, %v1216
    %v1222 = vmul.f32 1.0, %v1221
    %v1223 = vadd.f32 %v1176, %v202
    %v1225 = vrot.slane %v1223, 4
    %v1226 = vrot.slane %v1223, 5
    %1227 = vrot.lane.b32.xlu0 %v1225, 96
    %v1228 = vpop.permute.xlu0 %1227
    %1229 = vrot.lane.b32.xlu0 %v1226, 96
    %v1230 = vpop.permute.xlu0 %1229
    %v1233 = vmul.f32 %v1207, %v1228
    %v1234 = vmul.f32 %v1222, %v1230
    %1237 = vrot.lane.b32.xlu0 %v1233, 32
    %v1238 = vpop.permute.xlu0 %1237
    %1239 = vrot.lane.b32.xlu0 %v1234, 32
    %v1240 = vpop.permute.xlu0 %1239
    %v1243 = vadd.f32 %v94, %v1238
    %v1244 = vadd.f32 %v96, %v1240
    %v1245 = vtanh.pop %v1243
    %v1246 = vtanh.pop %v1244
    %v1247 = vsub.f32 1.0, %v1207
    %v1248 = vsub.f32 1.0, %v1222
    %1251 = vrot.lane.b32.xlu0 %v1245, 112
    %v1252 = vpop.permute.xlu0 %1251
    %1253 = vrot.lane.b32.xlu0 %v1246, 112
    %v1254 = vpop.permute.xlu0 %1253
    %v1257 = vmul.f32 %v1247, %v1252
    %v1258 = vmul.f32 %v1248, %v1254
    %v1259 = vrot.slane %v1011, 7
    %v1260 = vrot.slane %v1012, 7
    %v1263 = vmul.f32 %v1207, %v1259
    %v1264 = vmul.f32 %v1222, %v1260
    %v1265 = vadd.f32 %v1257, %v1263
    %v1266 = vadd.f32 %v1258, %v1264
    %v1267 = vrot.slane %v1127, 4
    %v1268 = vrot.slane %v1128, 3
    %v1269 = vsel %vm394, %v1268, %v1267
    %1270 = vrot.lane.b32.xlu0 %v1269, 112
    %v1271 = vpop.permute.xlu0 %1270
    %v1272 = vsel %vm131, %v1271, 0
    %1274 = vmatpush.msra.mxu0 0.0
    %1275 = vmatpush.msra.mxu0 0.0
    %1276 = vmatpush.msra.mxu0 0.0
    %1277 = vmatpush.msra.mxu0 0.0
    %1278 = vmatpush.msra.mxu0 0.0
    %1279 = vmatpush.msra.mxu0 0.0
    %1280 = vmatpush.msra.mxu0 0.0
    %1281 = vmatpush.msra.mxu0 0.0
    %1282 = vmatpush.msra.mxu0 0.0
    %1283 = vmatpush.msra.mxu0 0.0
    %1284 = vmatpush.msra.mxu0 0.0
    %1285 = vmatpush.msra.mxu0 0.0
    %1286 = vmatpush.msra.mxu0 0.0
    %1287 = vmatpush.msra.mxu0 0.0
    %1288 = vmatpush.msra.mxu0 %v126
    %1289 = vmatpush.msra.mxu0 %v125
    %1290 = vmatmul.f32.gmra.mxu0 %v1272
    %v1291 = vpop.f32.mrf.mxu0
    %v1292 = vadd.f32 0.0, %v1291
    %1293 = vdwg.mxu0
    %v1295 = vrot.slane %v1292, 5
    %v1296 = vrot.slane %v1292, 6
    %v1299 = vadd.f32 %v119, %v1295
    %v1300 = vadd.f32 %v121, %v1296
    %v1301 = vxor.u32 %v1299, 2147483648
    %v1302 = vxor.u32 %v1300, 2147483648
    %v1303 = vmul.f32 %v1301, 1.442695
    %v1304 = vpow.pop %v1303
    %v1305 = vmul.f32 %v1302, 1.442695
    %v1306 = vpow.pop %v1305
    %v1307 = vadd.f32 %v1304, 1.0
    %v1308 = vadd.f32 %v1306, 1.0
    %v1309 = vrcp.pop %v1307
    %v1310 = vmul.f32 %v1307, %v1309
    %v1311 = vsub.f32 1.0, %v1310
    %v1312 = vmul.f32 %v1309, %v1311
    %v1313 = vadd.f32 %v1309, %v1312
    %vm1314 = vweird.f32 %v1307
    %vm1315 = vweird.f32 %v1309
    %vm1316 = vmor %vm1314, %vm1315
    %v1317 = vsel %vm1316, %v1309, %v1313
    %v1318 = vand.u32 2147483647, %v1307
    %vm1319 = vcmp.eq.f32.partialorder %v1318, 8.507059e+37
    %v1320 = vand.u32 %v1307, 2147483648
    %v1321 = vor.u32 1.1754944e-38, %v1320
    %v1322 = vsel %vm1319, %v1321, %v1317
    %v1323 = vmul.f32 1.0, %v1322
    %v1324 = vrcp.pop %v1308
    %v1325 = vmul.f32 %v1308, %v1324
    %v1326 = vsub.f32 1.0, %v1325
    %v1327 = vmul.f32 %v1324, %v1326
    %v1328 = vadd.f32 %v1324, %v1327
    %vm1329 = vweird.f32 %v1308
    %vm1330 = vweird.f32 %v1324
    %vm1331 = vmor %vm1329, %vm1330
    %v1332 = vsel %vm1331, %v1324, %v1328
    %v1333 = vand.u32 2147483647, %v1308
    %vm1334 = vcmp.eq.f32.partialorder %v1333, 8.507059e+37
    %v1335 = vand.u32 %v1308, 2147483648
    %v1336 = vor.u32 1.1754944e-38, %v1335
    %v1337 = vsel %vm1334, %v1336, %v1332
    %v1338 = vmul.f32 1.0, %v1337
    %v1339 = vadd.f32 %v1292, %v321
    %v1341 = vrot.slane %v1339, 5
    %v1342 = vrot.slane %v1339, 6
    %1343 = vrot.lane.b32.xlu0 %v1341, 96
    %v1344 = vpop.permute.xlu0 %1343
    %1345 = vrot.lane.b32.xlu0 %v1342, 96
    %v1346 = vpop.permute.xlu0 %1345
    %v1349 = vmul.f32 %v1323, %v1344
    %v1350 = vmul.f32 %v1338, %v1346
    %1353 = vrot.lane.b32.xlu0 %v1349, 32
    %v1354 = vpop.permute.xlu0 %1353
    %1355 = vrot.lane.b32.xlu0 %v1350, 32
    %v1356 = vpop.permute.xlu0 %1355
    %v1359 = vadd.f32 %v119, %v1354
    %v1360 = vadd.f32 %v121, %v1356
    %v1361 = vtanh.pop %v1359
    %v1362 = vtanh.pop %v1360
    %v1363 = vsub.f32 1.0, %v1323
    %v1364 = vsub.f32 1.0, %v1338
    %1367 = vrot.lane.b32.xlu0 %v1361, 112
    %v1368 = vpop.permute.xlu0 %1367
    %1369 = vrot.lane.b32.xlu0 %v1362, 112
    %v1370 = vpop.permute.xlu0 %1369
    %v1373 = vmul.f32 %v1363, %v1368
    %v1374 = vmul.f32 %v1364, %v1370
    %v1375 = vrot.slane %v1127, 1
    %v1376 = vrot.slane %v1128, 1
    %v1379 = vmul.f32 %v1323, %v1375
    %v1380 = vmul.f32 %v1338, %v1376
    %v1381 = vadd.f32 %v1373, %v1379
    %v1382 = vadd.f32 %v1374, %v1380
    %1385 = vrot.lane.b32.xlu0 %v1265, 112
    %v1386 = vpop.permute.xlu0 %1385
    %1387 = vrot.lane.b32.xlu0 %v1266, 112
    %v1388 = vpop.permute.xlu0 %1387
    %1391 = vst.msk [vmem:[#allocation4] sm:$0x10] %vm1148, %v1386
    %1392 = vst.msk [vmem:[#allocation4 + $0x8] sm:$0x10] %vm1148, %v1388
    %1395 = vrot.lane.b32.xlu0 %v1381, 112
    %v1396 = vpop.permute.xlu0 %1395
    %1397 = vrot.lane.b32.xlu0 %v1382, 112
    %v1398 = vpop.permute.xlu0 %1397
    %1401 = vst.msk [vmem:[#allocation6] sm:$0x8] %vm1137, %v1396
    %1402 = vst.msk [vmem:[#allocation6 + $0x8] sm:$0x8] %vm1137, %v1398
    %v1403 = vrot.slane %v1265, 4
    %v1404 = vrot.slane %v1266, 3
    %v1405 = vsel %vm394, %v1404, %v1403
    %1406 = vrot.lane.b32.xlu0 %v1405, 112
    %v1407 = vpop.permute.xlu0 %1406
    %v1408 = vsel %vm131, %v1407, 0
    %1410 = vmatpush.msra.mxu0 0.0
    %1411 = vmatpush.msra.mxu0 0.0
    %1412 = vmatpush.msra.mxu0 0.0
    %1413 = vmatpush.msra.mxu0 0.0
    %1414 = vmatpush.msra.mxu0 0.0
    %1415 = vmatpush.msra.mxu0 0.0
    %1416 = vmatpush.msra.mxu0 0.0
    %1417 = vmatpush.msra.mxu0 0.0
    %1418 = vmatpush.msra.mxu0 0.0
    %1419 = vmatpush.msra.mxu0 0.0
    %1420 = vmatpush.msra.mxu0 0.0
    %1421 = vmatpush.msra.mxu0 0.0
    %1422 = vmatpush.msra.mxu0 0.0
    %1423 = vmatpush.msra.mxu0 0.0
    %1424 = vmatpush.msra.mxu0 %v124
    %1425 = vmatpush.msra.mxu0 %v123
    %1426 = vmatmul.f32.gmra.mxu0 %v1408
    %v1427 = vpop.f32.mrf.mxu0
    %v1428 = vadd.f32 0.0, %v1427
    %1429 = vdwg.mxu0
    %v1431 = vrot.slane %v1428, 3
    %v1432 = vrot.slane %v1428, 4
    %v1435 = vadd.f32 %v94, %v1431
    %v1436 = vadd.f32 %v96, %v1432
    %v1437 = vxor.u32 %v1435, 2147483648
    %v1438 = vxor.u32 %v1436, 2147483648
    %v1439 = vmul.f32 %v1437, 1.442695
    %v1440 = vpow.pop %v1439
    %v1441 = vmul.f32 %v1438, 1.442695
    %v1442 = vpow.pop %v1441
    %v1443 = vadd.f32 %v1440, 1.0
    %v1444 = vadd.f32 %v1442, 1.0
    %v1445 = vrcp.pop %v1443
    %v1446 = vmul.f32 %v1443, %v1445
    %v1447 = vsub.f32 1.0, %v1446
    %v1448 = vmul.f32 %v1445, %v1447
    %v1449 = vadd.f32 %v1445, %v1448
    %vm1450 = vweird.f32 %v1443
    %vm1451 = vweird.f32 %v1445
    %vm1452 = vmor %vm1450, %vm1451
    %v1453 = vsel %vm1452, %v1445, %v1449
    %v1454 = vand.u32 2147483647, %v1443
    %vm1455 = vcmp.eq.f32.partialorder %v1454, 8.507059e+37
    %v1456 = vand.u32 %v1443, 2147483648
    %v1457 = vor.u32 1.1754944e-38, %v1456
    %v1458 = vsel %vm1455, %v1457, %v1453
    %v1459 = vmul.f32 1.0, %v1458
    %v1460 = vrcp.pop %v1444
    %v1461 = vmul.f32 %v1444, %v1460
    %v1462 = vsub.f32 1.0, %v1461
    %v1463 = vmul.f32 %v1460, %v1462
    %v1464 = vadd.f32 %v1460, %v1463
    %vm1465 = vweird.f32 %v1444
    %vm1466 = vweird.f32 %v1460
    %vm1467 = vmor %vm1465, %vm1466
    %v1468 = vsel %vm1467, %v1460, %v1464
    %v1469 = vand.u32 2147483647, %v1444
    %vm1470 = vcmp.eq.f32.partialorder %v1469, 8.507059e+37
    %v1471 = vand.u32 %v1444, 2147483648
    %v1472 = vor.u32 1.1754944e-38, %v1471
    %v1473 = vsel %vm1470, %v1472, %v1468
    %v1474 = vmul.f32 1.0, %v1473
    %v1475 = vadd.f32 %v1428, %v202
    %v1477 = vrot.slane %v1475, 3
    %v1478 = vrot.slane %v1475, 4
    %1479 = vrot.lane.b32.xlu0 %v1477, 96
    %v1480 = vpop.permute.xlu0 %1479
    %1481 = vrot.lane.b32.xlu0 %v1478, 96
    %v1482 = vpop.permute.xlu0 %1481
    %v1485 = vmul.f32 %v1459, %v1480
    %v1486 = vmul.f32 %v1474, %v1482
    %1489 = vrot.lane.b32.xlu0 %v1485, 32
    %v1490 = vpop.permute.xlu0 %1489
    %1491 = vrot.lane.b32.xlu0 %v1486, 32
    %v1492 = vpop.permute.xlu0 %1491
    %v1495 = vadd.f32 %v94, %v1490
    %v1496 = vadd.f32 %v96, %v1492
    %v1497 = vtanh.pop %v1495
    %v1498 = vtanh.pop %v1496
    %v1499 = vsub.f32 1.0, %v1459
    %v1500 = vsub.f32 1.0, %v1474
    %1503 = vrot.lane.b32.xlu0 %v1497, 112
    %v1504 = vpop.permute.xlu0 %1503
    %1505 = vrot.lane.b32.xlu0 %v1498, 112
    %v1506 = vpop.permute.xlu0 %1505
    %v1509 = vmul.f32 %v1499, %v1504
    %v1510 = vmul.f32 %v1500, %v1506
    %v1511 = vrot.slane %v1265, 7
    %v1512 = vrot.slane %v1266, 7
    %v1515 = vmul.f32 %v1459, %v1511
    %v1516 = vmul.f32 %v1474, %v1512
    %v1517 = vadd.f32 %v1509, %v1515
    %v1518 = vadd.f32 %v1510, %v1516
    %v1519 = vrot.slane %v1381, 3
    %v1520 = vrot.slane %v1382, 2
    %v1521 = vsel %vm394, %v1520, %v1519
    %1522 = vrot.lane.b32.xlu0 %v1521, 112
    %v1523 = vpop.permute.xlu0 %1522
    %v1524 = vsel %vm131, %v1523, 0
    %1526 = vmatpush.msra.mxu0 0.0
    %1527 = vmatpush.msra.mxu0 0.0
    %1528 = vmatpush.msra.mxu0 0.0
    %1529 = vmatpush.msra.mxu0 0.0
    %1530 = vmatpush.msra.mxu0 0.0
    %1531 = vmatpush.msra.mxu0 0.0
    %1532 = vmatpush.msra.mxu0 0.0
    %1533 = vmatpush.msra.mxu0 0.0
    %1534 = vmatpush.msra.mxu0 0.0
    %1535 = vmatpush.msra.mxu0 0.0
    %1536 = vmatpush.msra.mxu0 0.0
    %1537 = vmatpush.msra.mxu0 0.0
    %1538 = vmatpush.msra.mxu0 0.0
    %1539 = vmatpush.msra.mxu0 0.0
    %1540 = vmatpush.msra.mxu0 %v126
    %1541 = vmatpush.msra.mxu0 %v125
    %1542 = vmatmul.f32.gmra.mxu0 %v1524
    %v1543 = vpop.f32.mrf.mxu0
    %v1544 = vadd.f32 0.0, %v1543
    %1545 = vdwg.mxu0
    %v1547 = vrot.slane %v1544, 6
    %v1548 = vrot.slane %v1544, 7
    %v1551 = vadd.f32 %v119, %v1547
    %v1552 = vadd.f32 %v121, %v1548
    %v1553 = vxor.u32 %v1551, 2147483648
    %v1554 = vxor.u32 %v1552, 2147483648
    %v1555 = vmul.f32 %v1553, 1.442695
    %v1556 = vpow.pop %v1555
    %v1557 = vmul.f32 %v1554, 1.442695
    %v1558 = vpow.pop %v1557
    %v1559 = vadd.f32 %v1556, 1.0
    %v1560 = vadd.f32 %v1558, 1.0
    %v1561 = vrcp.pop %v1559
    %v1562 = vmul.f32 %v1559, %v1561
    %v1563 = vsub.f32 1.0, %v1562
    %v1564 = vmul.f32 %v1561, %v1563
    %v1565 = vadd.f32 %v1561, %v1564
    %vm1566 = vweird.f32 %v1559
    %vm1567 = vweird.f32 %v1561
    %vm1568 = vmor %vm1566, %vm1567
    %v1569 = vsel %vm1568, %v1561, %v1565
    %v1570 = vand.u32 2147483647, %v1559
    %vm1571 = vcmp.eq.f32.partialorder %v1570, 8.507059e+37
    %v1572 = vand.u32 %v1559, 2147483648
    %v1573 = vor.u32 1.1754944e-38, %v1572
    %v1574 = vsel %vm1571, %v1573, %v1569
    %v1575 = vmul.f32 1.0, %v1574
    %v1576 = vrcp.pop %v1560
    %v1577 = vmul.f32 %v1560, %v1576
    %v1578 = vsub.f32 1.0, %v1577
    %v1579 = vmul.f32 %v1576, %v1578
    %v1580 = vadd.f32 %v1576, %v1579
    %vm1581 = vweird.f32 %v1560
    %vm1582 = vweird.f32 %v1576
    %vm1583 = vmor %vm1581, %vm1582
    %v1584 = vsel %vm1583, %v1576, %v1580
    %v1585 = vand.u32 2147483647, %v1560
    %vm1586 = vcmp.eq.f32.partialorder %v1585, 8.507059e+37
    %v1587 = vand.u32 %v1560, 2147483648
    %v1588 = vor.u32 1.1754944e-38, %v1587
    %v1589 = vsel %vm1586, %v1588, %v1584
    %v1590 = vmul.f32 1.0, %v1589
    %v1591 = vadd.f32 %v1544, %v321
    %v1593 = vrot.slane %v1591, 6
    %v1594 = vrot.slane %v1591, 7
    %1595 = vrot.lane.b32.xlu0 %v1593, 96
    %v1596 = vpop.permute.xlu0 %1595
    %1597 = vrot.lane.b32.xlu0 %v1594, 96
    %v1598 = vpop.permute.xlu0 %1597
    %v1601 = vmul.f32 %v1575, %v1596
    %v1602 = vmul.f32 %v1590, %v1598
    %1605 = vrot.lane.b32.xlu0 %v1601, 32
    %v1606 = vpop.permute.xlu0 %1605
    %1607 = vrot.lane.b32.xlu0 %v1602, 32
    %v1608 = vpop.permute.xlu0 %1607
    %v1611 = vadd.f32 %v119, %v1606
    %v1612 = vadd.f32 %v121, %v1608
    %v1613 = vtanh.pop %v1611
    %v1614 = vtanh.pop %v1612
    %v1615 = vsub.f32 1.0, %v1575
    %v1616 = vsub.f32 1.0, %v1590
    %1619 = vrot.lane.b32.xlu0 %v1613, 112
    %v1620 = vpop.permute.xlu0 %1619
    %1621 = vrot.lane.b32.xlu0 %v1614, 112
    %v1622 = vpop.permute.xlu0 %1621
    %v1625 = vmul.f32 %v1615, %v1620
    %v1626 = vmul.f32 %v1616, %v1622
    %v1627 = vrot.slane %v1381, 1
    %v1628 = vrot.slane %v1382, 1
    %v1631 = vmul.f32 %v1575, %v1627
    %v1632 = vmul.f32 %v1590, %v1628
    %v1633 = vadd.f32 %v1625, %v1631
    %v1634 = vadd.f32 %v1626, %v1632
    %1637 = vrot.lane.b32.xlu0 %v1517, 112
    %v1638 = vpop.permute.xlu0 %1637
    %1639 = vrot.lane.b32.xlu0 %v1518, 112
    %v1640 = vpop.permute.xlu0 %1639
    %1643 = vst.msk [vmem:[#allocation4] sm:$0x20] %vm894, %v1638
    %1644 = vst.msk [vmem:[#allocation4 + $0x8] sm:$0x20] %vm894, %v1640
    %1647 = vrot.lane.b32.xlu0 %v1633, 112
    %v1648 = vpop.permute.xlu0 %1647
    %1649 = vrot.lane.b32.xlu0 %v1634, 112
    %v1650 = vpop.permute.xlu0 %1649
    %1653 = vst.msk [vmem:[#allocation6] sm:$0x4] %vm883, %v1648
    %1654 = vst.msk [vmem:[#allocation6 + $0x8] sm:$0x4] %vm883, %v1650
    %v1655 = vrot.slane %v1517, 5
    %v1656 = vrot.slane %v1518, 4
    %v1657 = vsel %vm394, %v1656, %v1655
    %1658 = vrot.lane.b32.xlu0 %v1657, 112
    %v1659 = vpop.permute.xlu0 %1658
    %v1660 = vsel %vm131, %v1659, 0
    %1662 = vmatpush.msra.mxu0 0.0
    %1663 = vmatpush.msra.mxu0 0.0
    %1664 = vmatpush.msra.mxu0 0.0
    %1665 = vmatpush.msra.mxu0 0.0
    %1666 = vmatpush.msra.mxu0 0.0
    %1667 = vmatpush.msra.mxu0 0.0
    %1668 = vmatpush.msra.mxu0 0.0
    %1669 = vmatpush.msra.mxu0 0.0
    %1670 = vmatpush.msra.mxu0 0.0
    %1671 = vmatpush.msra.mxu0 0.0
    %1672 = vmatpush.msra.mxu0 0.0
    %1673 = vmatpush.msra.mxu0 0.0
    %1674 = vmatpush.msra.mxu0 0.0
    %1675 = vmatpush.msra.mxu0 0.0
    %1676 = vmatpush.msra.mxu0 %v124
    %1677 = vmatpush.msra.mxu0 %v123
    %1678 = vmatmul.f32.gmra.mxu0 %v1660
    %v1679 = vpop.f32.mrf.mxu0
    %v1680 = vadd.f32 0.0, %v1679
    %1681 = vdwg.mxu0
    %v1683 = vrot.slane %v1680, 2
    %v1684 = vrot.slane %v1680, 3
    %v1687 = vadd.f32 %v94, %v1683
    %v1688 = vadd.f32 %v96, %v1684
    %v1689 = vxor.u32 %v1687, 2147483648
    %v1690 = vxor.u32 %v1688, 2147483648
    %v1691 = vmul.f32 %v1689, 1.442695
    %v1692 = vpow.pop %v1691
    %v1693 = vmul.f32 %v1690, 1.442695
    %v1694 = vpow.pop %v1693
    %v1695 = vadd.f32 %v1692, 1.0
    %v1696 = vadd.f32 %v1694, 1.0
    %v1697 = vrcp.pop %v1695
    %v1698 = vmul.f32 %v1695, %v1697
    %v1699 = vsub.f32 1.0, %v1698
    %v1700 = vmul.f32 %v1697, %v1699
    %v1701 = vadd.f32 %v1697, %v1700
    %vm1702 = vweird.f32 %v1695
    %vm1703 = vweird.f32 %v1697
    %vm1704 = vmor %vm1702, %vm1703
    %v1705 = vsel %vm1704, %v1697, %v1701
    %v1706 = vand.u32 2147483647, %v1695
    %vm1707 = vcmp.eq.f32.partialorder %v1706, 8.507059e+37
    %v1708 = vand.u32 %v1695, 2147483648
    %v1709 = vor.u32 1.1754944e-38, %v1708
    %v1710 = vsel %vm1707, %v1709, %v1705
    %v1711 = vmul.f32 1.0, %v1710
    %v1712 = vrcp.pop %v1696
    %v1713 = vmul.f32 %v1696, %v1712
    %v1714 = vsub.f32 1.0, %v1713
    %v1715 = vmul.f32 %v1712, %v1714
    %v1716 = vadd.f32 %v1712, %v1715
    %vm1717 = vweird.f32 %v1696
    %vm1718 = vweird.f32 %v1712
    %vm1719 = vmor %vm1717, %vm1718
    %v1720 = vsel %vm1719, %v1712, %v1716
    %v1721 = vand.u32 2147483647, %v1696
    %vm1722 = vcmp.eq.f32.partialorder %v1721, 8.507059e+37
    %v1723 = vand.u32 %v1696, 2147483648
    %v1724 = vor.u32 1.1754944e-38, %v1723
    %v1725 = vsel %vm1722, %v1724, %v1720
    %v1726 = vmul.f32 1.0, %v1725
    %v1727 = vadd.f32 %v1680, %v202
    %v1729 = vrot.slane %v1727, 2
    %v1730 = vrot.slane %v1727, 3
    %1731 = vrot.lane.b32.xlu0 %v1729, 96
    %v1732 = vpop.permute.xlu0 %1731
    %1733 = vrot.lane.b32.xlu0 %v1730, 96
    %v1734 = vpop.permute.xlu0 %1733
    %v1737 = vmul.f32 %v1711, %v1732
    %v1738 = vmul.f32 %v1726, %v1734
    %1741 = vrot.lane.b32.xlu0 %v1737, 32
    %v1742 = vpop.permute.xlu0 %1741
    %1743 = vrot.lane.b32.xlu0 %v1738, 32
    %v1744 = vpop.permute.xlu0 %1743
    %v1747 = vadd.f32 %v94, %v1742
    %v1748 = vadd.f32 %v96, %v1744
    %v1749 = vtanh.pop %v1747
    %v1750 = vtanh.pop %v1748
    %v1751 = vsub.f32 1.0, %v1711
    %v1752 = vsub.f32 1.0, %v1726
    %1755 = vrot.lane.b32.xlu0 %v1749, 112
    %v1756 = vpop.permute.xlu0 %1755
    %1757 = vrot.lane.b32.xlu0 %v1750, 112
    %v1758 = vpop.permute.xlu0 %1757
    %v1761 = vmul.f32 %v1751, %v1756
    %v1762 = vmul.f32 %v1752, %v1758
    %v1763 = vrot.slane %v1517, 7
    %v1764 = vrot.slane %v1518, 7
    %v1767 = vmul.f32 %v1711, %v1763
    %v1768 = vmul.f32 %v1726, %v1764
    %v1769 = vadd.f32 %v1761, %v1767
    %v1770 = vadd.f32 %v1762, %v1768
    %v1771 = vrot.slane %v1633, 2
    %v1772 = vrot.slane %v1634, 1
    %v1773 = vsel %vm394, %v1772, %v1771
    %1774 = vrot.lane.b32.xlu0 %v1773, 112
    %v1775 = vpop.permute.xlu0 %1774
    %v1776 = vsel %vm131, %v1775, 0
    %1778 = vmatpush.msra.mxu0 0.0
    %1779 = vmatpush.msra.mxu0 0.0
    %1780 = vmatpush.msra.mxu0 0.0
    %1781 = vmatpush.msra.mxu0 0.0
    %1782 = vmatpush.msra.mxu0 0.0
    %1783 = vmatpush.msra.mxu0 0.0
    %1784 = vmatpush.msra.mxu0 0.0
    %1785 = vmatpush.msra.mxu0 0.0
    %1786 = vmatpush.msra.mxu0 0.0
    %1787 = vmatpush.msra.mxu0 0.0
    %1788 = vmatpush.msra.mxu0 0.0
    %1789 = vmatpush.msra.mxu0 0.0
    %1790 = vmatpush.msra.mxu0 0.0
    %1791 = vmatpush.msra.mxu0 0.0
    %1792 = vmatpush.msra.mxu0 %v126
    %1793 = vmatpush.msra.mxu0 %v125
    %1794 = vmatmul.f32.gmra.mxu0 %v1776
    %v1795 = vpop.f32.mrf.mxu0
    %v1796 = vadd.f32 0.0, %v1795
    %1797 = vdwg.mxu0
    %v1799 = vrot.slane %v1796, 7
    %v1802 = vadd.f32 %v119, %v1799
    %v1803 = vadd.f32 %v121, %v1796
    %v1804 = vxor.u32 %v1802, 2147483648
    %v1805 = vxor.u32 %v1803, 2147483648
    %v1806 = vmul.f32 %v1804, 1.442695
    %v1807 = vpow.pop %v1806
    %v1808 = vmul.f32 %v1805, 1.442695
    %v1809 = vpow.pop %v1808
    %v1810 = vadd.f32 %v1807, 1.0
    %v1811 = vadd.f32 %v1809, 1.0
    %v1812 = vrcp.pop %v1810
    %v1813 = vmul.f32 %v1810, %v1812
    %v1814 = vsub.f32 1.0, %v1813
    %v1815 = vmul.f32 %v1812, %v1814
    %v1816 = vadd.f32 %v1812, %v1815
    %vm1817 = vweird.f32 %v1810
    %vm1818 = vweird.f32 %v1812
    %vm1819 = vmor %vm1817, %vm1818
    %v1820 = vsel %vm1819, %v1812, %v1816
    %v1821 = vand.u32 2147483647, %v1810
    %vm1822 = vcmp.eq.f32.partialorder %v1821, 8.507059e+37
    %v1823 = vand.u32 %v1810, 2147483648
    %v1824 = vor.u32 1.1754944e-38, %v1823
    %v1825 = vsel %vm1822, %v1824, %v1820
    %v1826 = vmul.f32 1.0, %v1825
    %v1827 = vrcp.pop %v1811
    %v1828 = vmul.f32 %v1811, %v1827
    %v1829 = vsub.f32 1.0, %v1828
    %v1830 = vmul.f32 %v1827, %v1829
    %v1831 = vadd.f32 %v1827, %v1830
    %vm1832 = vweird.f32 %v1811
    %vm1833 = vweird.f32 %v1827
    %vm1834 = vmor %vm1832, %vm1833
    %v1835 = vsel %vm1834, %v1827, %v1831
    %v1836 = vand.u32 2147483647, %v1811
    %vm1837 = vcmp.eq.f32.partialorder %v1836, 8.507059e+37
    %v1838 = vand.u32 %v1811, 2147483648
    %v1839 = vor.u32 1.1754944e-38, %v1838
    %v1840 = vsel %vm1837, %v1839, %v1835
    %v1841 = vmul.f32 1.0, %v1840
    %v1842 = vadd.f32 %v1796, %v321
    %v1844 = vrot.slane %v1842, 7
    %1845 = vrot.lane.b32.xlu0 %v1844, 96
    %v1846 = vpop.permute.xlu0 %1845
    %1847 = vrot.lane.b32.xlu0 %v1842, 96
    %v1848 = vpop.permute.xlu0 %1847
    %v1851 = vmul.f32 %v1826, %v1846
    %v1852 = vmul.f32 %v1841, %v1848
    %1855 = vrot.lane.b32.xlu0 %v1851, 32
    %v1856 = vpop.permute.xlu0 %1855
    %1857 = vrot.lane.b32.xlu0 %v1852, 32
    %v1858 = vpop.permute.xlu0 %1857
    %v1861 = vadd.f32 %v119, %v1856
    %v1862 = vadd.f32 %v121, %v1858
    %v1863 = vtanh.pop %v1861
    %v1864 = vtanh.pop %v1862
    %v1865 = vsub.f32 1.0, %v1826
    %v1866 = vsub.f32 1.0, %v1841
    %1869 = vrot.lane.b32.xlu0 %v1863, 112
    %v1870 = vpop.permute.xlu0 %1869
    %1871 = vrot.lane.b32.xlu0 %v1864, 112
    %v1872 = vpop.permute.xlu0 %1871
    %v1875 = vmul.f32 %v1865, %v1870
    %v1876 = vmul.f32 %v1866, %v1872
    %v1877 = vrot.slane %v1633, 1
    %v1880 = vmul.f32 %v1826, %v1877
    %v1881 = vmul.f32 %v1841, %v1772
    %v1882 = vadd.f32 %v1875, %v1880
    %v1883 = vadd.f32 %v1876, %v1881
    %1886 = vrot.lane.b32.xlu0 %v1769, 112
    %v1887 = vpop.permute.xlu0 %1886
    %1888 = vrot.lane.b32.xlu0 %v1770, 112
    %v1889 = vpop.permute.xlu0 %1888
    %1892 = vst.msk [vmem:[#allocation4] sm:$0x40] %vm641, %v1887
    %1893 = vst.msk [vmem:[#allocation4 + $0x8] sm:$0x40] %vm641, %v1889
    %1896 = vrot.lane.b32.xlu0 %v1882, 112
    %v1897 = vpop.permute.xlu0 %1896
    %1898 = vrot.lane.b32.xlu0 %v1883, 112
    %v1899 = vpop.permute.xlu0 %1898
    %1902 = vst.msk [vmem:[#allocation6] sm:$0x2] %vm630, %v1897
    %1903 = vst.msk [vmem:[#allocation6 + $0x8] sm:$0x2] %vm630, %v1899
    %v1904 = vrot.slane %v1769, 6
    %v1905 = vrot.slane %v1770, 5
    %v1906 = vsel %vm394, %v1905, %v1904
    %1907 = vrot.lane.b32.xlu0 %v1906, 112
    %v1908 = vpop.permute.xlu0 %1907
    %v1909 = vsel %vm131, %v1908, 0
    %1911 = vmatpush.msra.mxu0 0.0
    %1912 = vmatpush.msra.mxu0 0.0
    %1913 = vmatpush.msra.mxu0 0.0
    %1914 = vmatpush.msra.mxu0 0.0
    %1915 = vmatpush.msra.mxu0 0.0
    %1916 = vmatpush.msra.mxu0 0.0
    %1917 = vmatpush.msra.mxu0 0.0
    %1918 = vmatpush.msra.mxu0 0.0
    %1919 = vmatpush.msra.mxu0 0.0
    %1920 = vmatpush.msra.mxu0 0.0
    %1921 = vmatpush.msra.mxu0 0.0
    %1922 = vmatpush.msra.mxu0 0.0
    %1923 = vmatpush.msra.mxu0 0.0
    %1924 = vmatpush.msra.mxu0 0.0
    %1925 = vmatpush.msra.mxu0 %v124
    %1926 = vmatpush.msra.mxu0 %v123
    %1927 = vmatmul.f32.gmra.mxu0 %v1909
    %v1928 = vpop.f32.mrf.mxu0
    %v1929 = vadd.f32 0.0, %v1928
    %1930 = vdwg.mxu0
    %v1932 = vrot.slane %v1929, 1
    %v1933 = vrot.slane %v1929, 2
    %v1936 = vadd.f32 %v94, %v1932
    %v1937 = vadd.f32 %v96, %v1933
    %v1938 = vxor.u32 %v1936, 2147483648
    %v1939 = vxor.u32 %v1937, 2147483648
    %v1940 = vmul.f32 %v1938, 1.442695
    %v1941 = vpow.pop %v1940
    %v1942 = vmul.f32 %v1939, 1.442695
    %v1943 = vpow.pop %v1942
    %v1944 = vadd.f32 %v1941, 1.0
    %v1945 = vadd.f32 %v1943, 1.0
    %v1946 = vrcp.pop %v1944
    %v1947 = vmul.f32 %v1944, %v1946
    %v1948 = vsub.f32 1.0, %v1947
    %v1949 = vmul.f32 %v1946, %v1948
    %v1950 = vadd.f32 %v1946, %v1949
    %vm1951 = vweird.f32 %v1944
    %vm1952 = vweird.f32 %v1946
    %vm1953 = vmor %vm1951, %vm1952
    %v1954 = vsel %vm1953, %v1946, %v1950
    %v1955 = vand.u32 2147483647, %v1944
    %vm1956 = vcmp.eq.f32.partialorder %v1955, 8.507059e+37
    %v1957 = vand.u32 %v1944, 2147483648
    %v1958 = vor.u32 1.1754944e-38, %v1957
    %v1959 = vsel %vm1956, %v1958, %v1954
    %v1960 = vmul.f32 1.0, %v1959
    %v1961 = vrcp.pop %v1945
    %v1962 = vmul.f32 %v1945, %v1961
    %v1963 = vsub.f32 1.0, %v1962
    %v1964 = vmul.f32 %v1961, %v1963
    %v1965 = vadd.f32 %v1961, %v1964
    %vm1966 = vweird.f32 %v1945
    %vm1967 = vweird.f32 %v1961
    %vm1968 = vmor %vm1966, %vm1967
    %v1969 = vsel %vm1968, %v1961, %v1965
    %v1970 = vand.u32 2147483647, %v1945
    %vm1971 = vcmp.eq.f32.partialorder %v1970, 8.507059e+37
    %v1972 = vand.u32 %v1945, 2147483648
    %v1973 = vor.u32 1.1754944e-38, %v1972
    %v1974 = vsel %vm1971, %v1973, %v1969
    %v1975 = vmul.f32 1.0, %v1974
    %v1976 = vadd.f32 %v1929, %v202
    %v1978 = vrot.slane %v1976, 1
    %v1979 = vrot.slane %v1976, 2
    %1980 = vrot.lane.b32.xlu0 %v1978, 96
    %v1981 = vpop.permute.xlu0 %1980
    %1982 = vrot.lane.b32.xlu0 %v1979, 96
    %v1983 = vpop.permute.xlu0 %1982
    %v1986 = vmul.f32 %v1960, %v1981
    %v1987 = vmul.f32 %v1975, %v1983
    %1990 = vrot.lane.b32.xlu0 %v1986, 32
    %v1991 = vpop.permute.xlu0 %1990
    %1992 = vrot.lane.b32.xlu0 %v1987, 32
    %v1993 = vpop.permute.xlu0 %1992
    %v1996 = vadd.f32 %v94, %v1991
    %v1997 = vadd.f32 %v96, %v1993
    %v1998 = vtanh.pop %v1996
    %v1999 = vtanh.pop %v1997
    %v2000 = vsub.f32 1.0, %v1960
    %v2001 = vsub.f32 1.0, %v1975
    %2004 = vrot.lane.b32.xlu0 %v1998, 112
    %v2005 = vpop.permute.xlu0 %2004
    %2006 = vrot.lane.b32.xlu0 %v1999, 112
    %v2007 = vpop.permute.xlu0 %2006
    %v2010 = vmul.f32 %v2000, %v2005
    %v2011 = vmul.f32 %v2001, %v2007
    %v2012 = vrot.slane %v1769, 7
    %v2013 = vrot.slane %v1770, 7
    %v2016 = vmul.f32 %v1960, %v2012
    %v2017 = vmul.f32 %v1975, %v2013
    %v2018 = vadd.f32 %v2010, %v2016
    %v2019 = vadd.f32 %v2011, %v2017
    %v2020 = vrot.slane %v1882, 1
    %v2021 = vsel %vm394, %v1883, %v2020
    %2022 = vrot.lane.b32.xlu0 %v2021, 112
    %v2023 = vpop.permute.xlu0 %2022
    %v2024 = vsel %vm131, %v2023, 0
    %2026 = vmatpush.msra.mxu0 0.0
    %2027 = vmatpush.msra.mxu0 0.0
    %2028 = vmatpush.msra.mxu0 0.0
    %2029 = vmatpush.msra.mxu0 0.0
    %2030 = vmatpush.msra.mxu0 0.0
    %2031 = vmatpush.msra.mxu0 0.0
    %2032 = vmatpush.msra.mxu0 0.0
    %2033 = vmatpush.msra.mxu0 0.0
    %2034 = vmatpush.msra.mxu0 0.0
    %2035 = vmatpush.msra.mxu0 0.0
    %2036 = vmatpush.msra.mxu0 0.0
    %2037 = vmatpush.msra.mxu0 0.0
    %2038 = vmatpush.msra.mxu0 0.0
    %2039 = vmatpush.msra.mxu0 0.0
    %2040 = vmatpush.msra.mxu0 %v126
    %2041 = vmatpush.msra.mxu0 %v125
    %2042 = vmatmul.f32.gmra.mxu0 %v2024
    %v2043 = vpop.f32.mrf.mxu0
    %v2044 = vadd.f32 0.0, %v2043
    %2045 = vdwg.mxu0
    %v2047 = vrot.slane %v2044, 1
    %v2050 = vadd.f32 %v119, %v2044
    %v2051 = vadd.f32 %v121, %v2047
    %v2052 = vxor.u32 %v2050, 2147483648
    %v2053 = vxor.u32 %v2051, 2147483648
    %v2054 = vmul.f32 %v2052, 1.442695
    %v2055 = vpow.pop %v2054
    %v2056 = vmul.f32 %v2053, 1.442695
    %v2057 = vpow.pop %v2056
    %v2058 = vadd.f32 %v2055, 1.0
    %v2059 = vadd.f32 %v2057, 1.0
    %v2060 = vrcp.pop %v2058
    %v2061 = vmul.f32 %v2058, %v2060
    %v2062 = vsub.f32 1.0, %v2061
    %v2063 = vmul.f32 %v2060, %v2062
    %v2064 = vadd.f32 %v2060, %v2063
    %vm2065 = vweird.f32 %v2058
    %vm2066 = vweird.f32 %v2060
    %vm2067 = vmor %vm2065, %vm2066
    %v2068 = vsel %vm2067, %v2060, %v2064
    %v2069 = vand.u32 2147483647, %v2058
    %vm2070 = vcmp.eq.f32.partialorder %v2069, 8.507059e+37
    %v2071 = vand.u32 %v2058, 2147483648
    %v2072 = vor.u32 1.1754944e-38, %v2071
    %v2073 = vsel %vm2070, %v2072, %v2068
    %v2074 = vmul.f32 1.0, %v2073
    %v2075 = vrcp.pop %v2059
    %v2076 = vmul.f32 %v2059, %v2075
    %v2077 = vsub.f32 1.0, %v2076
    %v2078 = vmul.f32 %v2075, %v2077
    %v2079 = vadd.f32 %v2075, %v2078
    %vm2080 = vweird.f32 %v2059
    %vm2081 = vweird.f32 %v2075
    %vm2082 = vmor %vm2080, %vm2081
    %v2083 = vsel %vm2082, %v2075, %v2079
    %v2084 = vand.u32 2147483647, %v2059
    %vm2085 = vcmp.eq.f32.partialorder %v2084, 8.507059e+37
    %v2086 = vand.u32 %v2059, 2147483648
    %v2087 = vor.u32 1.1754944e-38, %v2086
    %v2088 = vsel %vm2085, %v2087, %v2083
    %v2089 = vmul.f32 1.0, %v2088
    %v2090 = vadd.f32 %v2044, %v321
    %v2092 = vrot.slane %v2090, 1
    %2093 = vrot.lane.b32.xlu0 %v2090, 96
    %v2094 = vpop.permute.xlu0 %2093
    %2095 = vrot.lane.b32.xlu0 %v2092, 96
    %v2096 = vpop.permute.xlu0 %2095
    %v2099 = vmul.f32 %v2074, %v2094
    %v2100 = vmul.f32 %v2089, %v2096
    %2103 = vrot.lane.b32.xlu0 %v2099, 32
    %v2104 = vpop.permute.xlu0 %2103
    %2105 = vrot.lane.b32.xlu0 %v2100, 32
    %v2106 = vpop.permute.xlu0 %2105
    %v2109 = vadd.f32 %v119, %v2104
    %v2110 = vadd.f32 %v121, %v2106
    %v2111 = vtanh.pop %v2109
    %v2112 = vtanh.pop %v2110
    %v2113 = vsub.f32 1.0, %v2074
    %v2114 = vsub.f32 1.0, %v2089
    %2117 = vrot.lane.b32.xlu0 %v2111, 112
    %v2118 = vpop.permute.xlu0 %2117
    %2119 = vrot.lane.b32.xlu0 %v2112, 112
    %v2120 = vpop.permute.xlu0 %2119
    %v2123 = vmul.f32 %v2113, %v2118
    %v2124 = vmul.f32 %v2114, %v2120
    %v2125 = vrot.slane %v1883, 1
    %v2128 = vmul.f32 %v2074, %v2020
    %v2129 = vmul.f32 %v2089, %v2125
    %v2130 = vadd.f32 %v2123, %v2128
    %v2131 = vadd.f32 %v2124, %v2129
    %2134 = vrot.lane.b32.xlu0 %v2018, 112
    %v2135 = vpop.permute.xlu0 %2134
    %2136 = vrot.lane.b32.xlu0 %v2019, 112
    %v2137 = vpop.permute.xlu0 %2136
    %2140 = vst.msk [vmem:[#allocation4] sm:$0x80] %vm390, %v2135
    %2141 = vst.msk [vmem:[#allocation4 + $0x8] sm:$0x80] %vm390, %v2137
    %2144 = vrot.lane.b32.xlu0 %v2130, 112
    %v2145 = vpop.permute.xlu0 %2144
    %2146 = vrot.lane.b32.xlu0 %v2131, 112
    %v2147 = vpop.permute.xlu0 %2146
    %2150 = vst.msk [vmem:[#allocation6] sm:$0x1] %vm379, %v2145
    %2151 = vst.msk [vmem:[#allocation6 + $0x8] sm:$0x1] %vm379, %v2147
    %v2152 = vrot.slane %v2019, 7
    %2153 = vrot.lane.b32.xlu0 %v2152, 112
    %v2154 = vpop.permute.xlu0 %2153
    %2156 = vst.msk [vmem:[#allocation2 - $0x7] sm:$0x80] %vm390, %v2135
    %2157 = vst.msk [vmem:[#allocation2 + $0x1] sm:$0x1] %vm379, %v2154
    %v2158 = vrot.slane %v2131, 7
    %v2159 = vsel %vm394, %v2158, %v2130
    %2160 = vrot.lane.b32.xlu0 %v2159, 112
    %v2161 = vpop.permute.xlu0 %2160
    %vm2163 = vcmask 123904
    %2164 = vst.msk [vmem:[#allocation3] sm:$0x3] %vm2163, %v2161
    // Predicated region
    $region46: #{tpu_custom_call.1} parent=1 // pred_check
      _
    $region47: #{tpu_custom_call.1} parent=1 // pred_check_branch
      %2166 = sbr.rel (0) target = $region49
    $region48: #{tpu_custom_call.1} parent=1 // pred_region
      %2168 = vsyncadd [#allocation5], 0
      %s2169 = sshll.u32 [#allocation4], 4
      %s2170 = int_to_ptr.vmem [resolvable:$true] %s2169
      %s2171 = sshll.u32 %s10, 4
      %s2172 = int_to_ptr.hbm [resolvable:$true] %s2171
      %2177 = dma.vmem_to_hbm [thread:$0]  %s2170, 256, %s2172, [#allocation5], 128, 128, 8
    $region49: #{tpu_custom_call.1} parent=1 // pred_fallthru
      _
    // Predicated region
    $region50: #{tpu_custom_call.1} parent=1 // pred_check
      _
    $region51: #{tpu_custom_call.1} parent=1 // pred_check_branch
      %2179 = sbr.rel (0) target = $region53
    $region52: #{tpu_custom_call.1} parent=1 // pred_region
      %s2180 = ssub.s32 0, 0
      %2182 = vsyncadd [#allocation7], 0
      %s2183 = smul.addr %s2180, 8
      %s2184 = scalar_lea.hbm %s11, %s2183
      %s2185 = sshll.u32 [#allocation6], 4
      %s2186 = int_to_ptr.vmem [resolvable:$true] %s2185
      %s2187 = sshll.u32 %s2184, 4
      %s2188 = int_to_ptr.hbm [resolvable:$true] %s2187
      %2193 = dma.vmem_to_hbm [thread:$0]  %s2186, 256, %s2188, [#allocation7], 128, 128, 8
    $region53: #{tpu_custom_call.1} parent=1 // pred_fallthru
      _
    // Predicated region
    $region54: #{tpu_custom_call.1} parent=1 // pred_check
      _
    $region55: #{tpu_custom_call.1} parent=1 // pred_check_branch
      %2195 = sbr.rel (0) target = $region57
    $region56: #{tpu_custom_call.1} parent=1 // pred_region
      %2197 = dma.done [#allocation5], 256
    $region57: #{tpu_custom_call.1} parent=1 // pred_fallthru
      _
    // Predicated region
    $region58: #{tpu_custom_call.1} parent=1 // pred_check
      _
    $region59: #{tpu_custom_call.1} parent=1 // pred_check_branch
      %2199 = sbr.rel (0) target = $region61
    $region60: #{tpu_custom_call.1} parent=1 // pred_region
      %2201 = dma.done [#allocation7], 256
    $region61: #{tpu_custom_call.1} parent=1 // pred_fallthru
      _
    %2202 = vsyncpa [#allocation5], 1
    %2203 = vsyncpa [#allocation7], 1

</llo_original>
